<compile_context>
chip_gen: v7x
topology: tpu7x:2x2x1
jax: 0.10.0
libtpu: 0.0.40
codegen_flags: <defaults>
</compile_context>

<pallas_src>
import functools

import jax
import jax.numpy as jnp
from jax.experimental import pallas as pl
from jax.experimental.pallas import tpu as pltpu

EPS = 1e-5


# --------------------------------------------------------------------------
# Fused kernel: 5 x [1x1 conv -> BN -> ReLU] + global max pool + MLP head.
# --------------------------------------------------------------------------
def pointnet_kernel(x_ref,
                    w1t, o1, w2t, o2, w3t, o3, w4t, o4, w5t, o5,
                    w6t, o6, w7t, b7,
                    out_ref,
                    acc_ref):
    """One (batch b, point-tile t) grid step.

    x_ref:   (1, 3, TN) f32 channels-first point tile
    w*t:     transposed, BN-scale-folded weights (bf16 for the MXU layers)
    o*:      per-channel shift columns (C, 1) f32
    out_ref: (1, num_classes, 1) f32 logits (written on the last tile only)
    acc_ref: (emb_dims, 1) f32 running max over point tiles
    """
    t = pl.program_id(1)

    @pl.when(t == 0)
    def _init():
        acc_ref[...] = jnp.full(acc_ref.shape, -jnp.inf, acc_ref.dtype)

    x = x_ref[0].astype(jnp.float32)                     # (3, TN)

    # conv1 + bn1 + ReLU: K=3 -> three broadcast FMAs on the VPU (keep the
    # MXU push slot free for the wide-K layers).
    w1 = w1t[...]                                        # (64, 3) f32
    h = (w1[:, 0:1] * x[0:1, :]
         + w1[:, 1:2] * x[1:2, :]
         + w1[:, 2:3] * x[2:3, :]) + o1[...]
    h = jnp.maximum(h, 0.0)                              # (64, TN) f32

    def conv_bn_relu(w_t_ref, o_ref, h):
        y = jnp.dot(w_t_ref[...], h.astype(jnp.bfloat16),
                    preferred_element_type=jnp.float32)  # bf16 MXU, f32 acc
        return jnp.maximum(y + o_ref[...], 0.0)

    h = conv_bn_relu(w2t, o2, h)                         # (64,  TN)
    h = conv_bn_relu(w3t, o3, h)                         # (64,  TN)
    h = conv_bn_relu(w4t, o4, h)                         # (128, TN)
    h = conv_bn_relu(w5t, o5, h)                         # (E,   TN)

    # Global max pool: lane-axis reduce (XLU) + running max across tiles.
    acc_ref[...] = jnp.maximum(acc_ref[...],
                               jnp.max(h, axis=1, keepdims=True))

    # Classification head fused into the epilogue of the last point tile.
    @pl.when(t == pl.num_programs(1) - 1)
    def _head():
        pooled = acc_ref[...]                                          # (E, 1)
        h6 = jnp.dot(w6t[...], pooled.astype(jnp.bfloat16),
                     preferred_element_type=jnp.float32) + o6[...]     # (512, 1)
        h6 = jnp.maximum(h6, 0.0)
        # TODO(synk): Dropout (self.dp1) implemented as eval-mode identity.
        logits = jnp.dot(w7t[...], h6.astype(jnp.bfloat16),
                         preferred_element_type=jnp.float32) + b7[...]  # (C, 1)
        out_ref[...] = logits[None]


# --------------------------------------------------------------------------
# Parameter setup (deterministic, synthetic; PyTorch-faithful f32 math params).
# --------------------------------------------------------------------------
def fold_bn(gamma, beta, mean, var):
    scale = gamma / jnp.sqrt(var + EPS)
    shift = beta - mean * scale
    return (scale.reshape(1, -1).astype(jnp.float32),
            shift.reshape(1, -1).astype(jnp.float32))


def make_params(key, emb_dims=64, num_classes=2):
    dims = [(3, 64), (64, 64), (64, 64), (64, 128), (128, emb_dims)]
    params = {}
    keys = jax.random.split(key, 32)
    ki = 0
    for li, (cin, cout) in enumerate(dims, start=1):
        params[f"w{li}"] = 0.1 * jax.random.normal(keys[ki], (cin, cout),
                                                   dtype=jnp.float32); ki += 1
        gamma = jax.random.uniform(keys[ki], (cout,), minval=0.5, maxval=1.5); ki += 1
        beta = 0.1 * jax.random.normal(keys[ki], (cout,)); ki += 1
        mean = 0.1 * jax.random.normal(keys[ki], (cout,)); ki += 1
        var = jax.random.uniform(keys[ki], (cout,), minval=0.5, maxval=1.5); ki += 1
        params[f"s{li}"], params[f"o{li}"] = fold_bn(gamma, beta, mean, var)

    # linear1: emb_dims -> 512 (no bias) + bn6
    params["w6"] = 0.05 * jax.random.normal(keys[ki], (emb_dims, 512),
                                            dtype=jnp.float32); ki += 1
    gamma = jax.random.uniform(keys[ki], (512,), minval=0.5, maxval=1.5); ki += 1
    beta = 0.1 * jax.random.normal(keys[ki], (512,)); ki += 1
    mean = 0.1 * jax.random.normal(keys[ki], (512,)); ki += 1
    var = jax.random.uniform(keys[ki], (512,), minval=0.5, maxval=1.5); ki += 1
    params["s6"], params["o6"] = fold_bn(gamma, beta, mean, var)

    # linear2: 512 -> num_classes (with bias)
    params["w7"] = 0.05 * jax.random.normal(keys[ki], (512, num_classes),
                                            dtype=jnp.float32); ki += 1
    params["b7"] = 0.1 * jax.random.normal(keys[ki], (1, num_classes),
                                           dtype=jnp.float32); ki += 1
    return params


def prep_kernel_params(p):
    """Fold BN scales into weights, transpose for channels-first compute,
    cast MXU weights to bf16 (done once on constants, outside the kernel)."""
    kp = {}
    # layer 1 stays f32 (VPU FMA path)
    kp["w1t"] = (p["w1"] * p["s1"]).T.astype(jnp.float32)        # (64, 3)
    kp["o1"] = p["o1"].reshape(-1, 1).astype(jnp.float32)        # (64, 1)
    for li in range(2, 6):
        kp[f"w{li}t"] = (p[f"w{li}"] * p[f"s{li}"]).T.astype(jnp.bfloat16)
        kp[f"o{li}"] = p[f"o{li}"].reshape(-1, 1).astype(jnp.float32)
    kp["w6t"] = (p["w6"] * p["s6"]).T.astype(jnp.bfloat16)       # (512, E)
    kp["o6"] = p["o6"].reshape(-1, 1).astype(jnp.float32)        # (512, 1)
    kp["w7t"] = p["w7"].T.astype(jnp.bfloat16)                   # (C, 512)
    kp["b7"] = p["b7"].reshape(-1, 1).astype(jnp.float32)        # (C, 1)
    return kp


# --------------------------------------------------------------------------
# Wrapper.
# --------------------------------------------------------------------------
@functools.partial(jax.jit, static_argnames=("tile_n",))
def pointnet_forward(x_ncw, params, *, tile_n=512):
    B, cin, N = x_ncw.shape
    assert cin == 3
    assert tile_n % 128 == 0, "tile_n must be a multiple of 128 (lane width)"

    x = x_ncw.astype(jnp.float32)
    n_pad = (-N) % tile_n
    if n_pad:
        # Duplicate existing points -> global max-pool is unchanged.
        x = jnp.pad(x, ((0, 0), (0, 0), (0, n_pad)), mode="edge")
    n_tiles = (N + n_pad) // tile_n

    kp = prep_kernel_params(params)
    emb_dims = params["w5"].shape[1]
    num_classes = params["w7"].shape[1]

    weight_args = [kp[k] for k in
                   ("w1t", "o1", "w2t", "o2", "w3t", "o3", "w4t", "o4",
                    "w5t", "o5", "w6t", "o6", "w7t", "b7")]

    def resident(a):  # full-array block, constant index -> stays in VMEM
        return pl.BlockSpec(a.shape, lambda b, t: (0, 0))

    out3 = pl.pallas_call(
        pointnet_kernel,
        out_shape=jax.ShapeDtypeStruct((B, num_classes, 1), jnp.float32),
        grid_spec=pltpu.PrefetchScalarGridSpec(
            num_scalar_prefetch=0,
            grid=(B, n_tiles),
            in_specs=[pl.BlockSpec((1, 3, tile_n), lambda b, t: (b, 0, t))]
                     + [resident(a) for a in weight_args],
            out_specs=pl.BlockSpec((1, num_classes, 1), lambda b, t: (b, 0, 0)),
            scratch_shapes=[pltpu.VMEM((emb_dims, 1), jnp.float32)],
        ),
        compiler_params=pltpu.CompilerParams(
            # batch axis parallel (keeps both v7x TCs busy for B >= 2);
            # point-tile reduction axis must be arbitrary.
            dimension_semantics=("parallel", "arbitrary")),
    )(x, *weight_args)

    return out3[:, :, 0]


# --------------------------------------------------------------------------
# Pure-JAX f32 reference for sanity checking.
# --------------------------------------------------------------------------
def reference_forward(x_ncw, p):
    h = jnp.transpose(x_ncw, (0, 2, 1)).astype(jnp.float32)
    for li in range(1, 6):
        h = jnp.maximum(h @ p[f"w{li}"] * p[f"s{li}"] + p[f"o{li}"], 0.0)
    h = jnp.max(h, axis=1)
    h = jnp.maximum(h @ p["w6"] * p["s6"] + p["o6"], 0.0)
    return h @ p["w7"] + p["b7"]


if __name__ == "__main__":
    key = jax.random.PRNGKey(0)
    k_x, k_p = jax.random.split(key)

    B, N, emb_dims, num_classes = 2, 1000, 64, 2
    x = jax.random.normal(k_x, (B, 3, N), dtype=jnp.float32)   # PyTorch NCW layout
    params = make_params(k_p, emb_dims=emb_dims, num_classes=num_classes)

    out = pointnet_forward(x, params, tile_n=512)
    out = jax.block_until_ready(out)

    ref = reference_forward(x, params)
    assert out.shape == (B, num_classes)
    # bf16 MXU operands (f32 accumulation) -> relaxed tolerance vs f32 reference.
    err = float(jnp.max(jnp.abs(out - ref)) / (jnp.max(jnp.abs(ref)) + 1e-6))
    assert err < 5e-2, f"mismatch vs reference (rel err {err:.4g})"
    print("KERNEL_OK")
</pallas_src>

<mosaic_0001>
module attributes {stable_mosaic.version = 11 : i64} {
  func.func @pointnet_kernel(%arg0: i32, %arg1: i32, %arg2: memref<1x3x512xf32, #tpu.memory_space<vmem>>, %arg3: memref<64x3xf32, #tpu.memory_space<vmem>>, %arg4: memref<64x1xf32, #tpu.memory_space<vmem>>, %arg5: memref<64x64xbf16, #tpu.memory_space<vmem>>, %arg6: memref<64x1xf32, #tpu.memory_space<vmem>>, %arg7: memref<64x64xbf16, #tpu.memory_space<vmem>>, %arg8: memref<64x1xf32, #tpu.memory_space<vmem>>, %arg9: memref<128x64xbf16, #tpu.memory_space<vmem>>, %arg10: memref<128x1xf32, #tpu.memory_space<vmem>>, %arg11: memref<64x128xbf16, #tpu.memory_space<vmem>>, %arg12: memref<64x1xf32, #tpu.memory_space<vmem>>, %arg13: memref<512x64xbf16, #tpu.memory_space<vmem>>, %arg14: memref<512x1xf32, #tpu.memory_space<vmem>>, %arg15: memref<2x512xbf16, #tpu.memory_space<vmem>>, %arg16: memref<2x1xf32, #tpu.memory_space<vmem>>, %arg17: memref<1x2x1xf32, #tpu.memory_space<vmem>>, %arg18: memref<64x1xf32, #tpu.memory_space<vmem>>) attributes {dimension_semantics = [#tpu.dimension_semantics<parallel>, #tpu.dimension_semantics<arbitrary>], iteration_bounds = array<i64: 2, 2>, scalar_prefetch = 0 : i64, scratch_operands = 1 : i64, tpu.core_type = #tpu.core_type<tc>, window_params = [{transform_indices = @transform_0, window_bounds = array<i64: 1, 3, 512>}, {pipeline_mode = #tpu.pipeline_mode<synchronous>, transform_indices = @transform_1, window_bounds = array<i64: 64, 3>}, {pipeline_mode = #tpu.pipeline_mode<synchronous>, transform_indices = @transform_2, window_bounds = array<i64: 64, 1>}, {pipeline_mode = #tpu.pipeline_mode<synchronous>, transform_indices = @transform_3, window_bounds = array<i64: 64, 64>}, {pipeline_mode = #tpu.pipeline_mode<synchronous>, transform_indices = @transform_4, window_bounds = array<i64: 64, 1>}, {pipeline_mode = #tpu.pipeline_mode<synchronous>, transform_indices = @transform_5, window_bounds = array<i64: 64, 64>}, {pipeline_mode = #tpu.pipeline_mode<synchronous>, transform_indices = @transform_6, window_bounds = array<i64: 64, 1>}, {pipeline_mode = #tpu.pipeline_mode<synchronous>, transform_indices = @transform_7, window_bounds = array<i64: 128, 64>}, {pipeline_mode = #tpu.pipeline_mode<synchronous>, transform_indices = @transform_8, window_bounds = array<i64: 128, 1>}, {pipeline_mode = #tpu.pipeline_mode<synchronous>, transform_indices = @transform_9, window_bounds = array<i64: 64, 128>}, {pipeline_mode = #tpu.pipeline_mode<synchronous>, transform_indices = @transform_10, window_bounds = array<i64: 64, 1>}, {pipeline_mode = #tpu.pipeline_mode<synchronous>, transform_indices = @transform_11, window_bounds = array<i64: 512, 64>}, {pipeline_mode = #tpu.pipeline_mode<synchronous>, transform_indices = @transform_12, window_bounds = array<i64: 512, 1>}, {pipeline_mode = #tpu.pipeline_mode<synchronous>, transform_indices = @transform_13, window_bounds = array<i64: 2, 512>}, {pipeline_mode = #tpu.pipeline_mode<synchronous>, transform_indices = @transform_14, window_bounds = array<i64: 2, 1>}, {transform_indices = @transform_15, window_bounds = array<i64: 1, 2, 1>}]} {
    %c0_i32 = arith.constant 0 : i32
    %0 = arith.cmpi eq, %arg1, %c0_i32 : i32
    %1 = arith.extui %0 : i1 to i32
    %c0_i32_0 = arith.constant 0 : i32
    %2 = arith.cmpi ne, %1, %c0_i32_0 : i32
    scf.if %2 {
      %cst_37 = arith.constant 0xFF800000 : f32
      %68 = vector.broadcast %cst_37 : f32 to vector<64x1xf32>
      %c0_38 = arith.constant 0 : index
      %c0_39 = arith.constant 0 : index
      %69 = vector.load %arg18[%c0_38, %c0_39] : memref<64x1xf32, #tpu.memory_space<vmem>>, vector<64x1xf32>
      tpu.vector_store %arg18[%c0_38, %c0_39], %68 {strides = array<i32>} : memref<64x1xf32, #tpu.memory_space<vmem>>, vector<64x1xf32>,
    } else {
    }
    %c0 = arith.constant 0 : index
    %c0_1 = arith.constant 0 : index
    %c0_2 = arith.constant 0 : index
    %3 = vector.load %arg2[%c0, %c0_1, %c0_2] : memref<1x3x512xf32, #tpu.memory_space<vmem>>, vector<1x3x512xf32>
    %4 = vector.shape_cast %3 : vector<1x3x512xf32> to vector<3x512xf32>
    %c0_3 = arith.constant 0 : index
    %c0_4 = arith.constant 0 : index
    %5 = vector.load %arg3[%c0_3, %c0_4] : memref<64x3xf32, #tpu.memory_space<vmem>>, vector<64x3xf32>
    %6 = vector.extract_strided_slice %5 {offsets = [0, 0], sizes = [64, 1], strides = [1, 1]} : vector<64x3xf32> to vector<64x1xf32>
    %7 = vector.extract_strided_slice %4 {offsets = [0, 0], sizes = [1, 512], strides = [1, 1]} : vector<3x512xf32> to vector<1x512xf32>
    %8 = vector.broadcast %6 : vector<64x1xf32> to vector<64x512xf32>
    %9 = vector.broadcast %7 : vector<1x512xf32> to vector<64x512xf32>
    %10 = arith.mulf %8, %9 : vector<64x512xf32>
    %11 = vector.extract_strided_slice %5 {offsets = [0, 1], sizes = [64, 1], strides = [1, 1]} : vector<64x3xf32> to vector<64x1xf32>
    %12 = vector.extract_strided_slice %4 {offsets = [1, 0], sizes = [1, 512], strides = [1, 1]} : vector<3x512xf32> to vector<1x512xf32>
    %13 = vector.broadcast %11 : vector<64x1xf32> to vector<64x512xf32>
    %14 = vector.broadcast %12 : vector<1x512xf32> to vector<64x512xf32>
    %15 = arith.mulf %13, %14 : vector<64x512xf32>
    %16 = arith.addf %10, %15 : vector<64x512xf32>
    %17 = vector.extract_strided_slice %5 {offsets = [0, 2], sizes = [64, 1], strides = [1, 1]} : vector<64x3xf32> to vector<64x1xf32>
    %18 = vector.extract_strided_slice %4 {offsets = [2, 0], sizes = [1, 512], strides = [1, 1]} : vector<3x512xf32> to vector<1x512xf32>
    %19 = vector.broadcast %17 : vector<64x1xf32> to vector<64x512xf32>
    %20 = vector.broadcast %18 : vector<1x512xf32> to vector<64x512xf32>
    %21 = arith.mulf %19, %20 : vector<64x512xf32>
    %22 = arith.addf %16, %21 : vector<64x512xf32>
    %c0_5 = arith.constant 0 : index
    %c0_6 = arith.constant 0 : index
    %23 = vector.load %arg4[%c0_5, %c0_6] : memref<64x1xf32, #tpu.memory_space<vmem>>, vector<64x1xf32>
    %24 = vector.broadcast %23 : vector<64x1xf32> to vector<64x512xf32>
    %25 = arith.addf %22, %24 : vector<64x512xf32>
    %cst = arith.constant 0.000000e+00 : f32
    %26 = vector.broadcast %cst : f32 to vector<64x512xf32>
    %27 = arith.maximumf %25, %26 : vector<64x512xf32>
    %c0_7 = arith.constant 0 : index
    %c0_8 = arith.constant 0 : index
    %28 = vector.load %arg5[%c0_7, %c0_8] : memref<64x64xbf16, #tpu.memory_space<vmem>>, vector<64x64xbf16>
    %29 = arith.truncf %27 : vector<64x512xf32> to vector<64x512xbf16>
    %cst_9 = arith.constant dense<0.000000e+00> : vector<64x512xf32>
    %30 = tpu.matmul %28, %29, %cst_9 {dimension_numbers = #tpu.dot_dimension_numbers<[1], [0], [0], [1], [0, 0, 1, 1], [], []>} : vector<64x64xbf16>, vector<64x512xbf16>, vector<64x512xf32> -> vector<64x512xf32>
    %c0_10 = arith.constant 0 : index
    %c0_11 = arith.constant 0 : index
    %31 = vector.load %arg6[%c0_10, %c0_11] : memref<64x1xf32, #tpu.memory_space<vmem>>, vector<64x1xf32>
    %32 = vector.broadcast %31 : vector<64x1xf32> to vector<64x512xf32>
    %33 = arith.addf %30, %32 : vector<64x512xf32>
    %cst_12 = arith.constant 0.000000e+00 : f32
    %34 = vector.broadcast %cst_12 : f32 to vector<64x512xf32>
    %35 = arith.maximumf %33, %34 : vector<64x512xf32>
    %c0_13 = arith.constant 0 : index
    %c0_14 = arith.constant 0 : index
    %36 = vector.load %arg7[%c0_13, %c0_14] : memref<64x64xbf16, #tpu.memory_space<vmem>>, vector<64x64xbf16>
    %37 = arith.truncf %35 : vector<64x512xf32> to vector<64x512xbf16>
    %cst_15 = arith.constant dense<0.000000e+00> : vector<64x512xf32>
    %38 = tpu.matmul %36, %37, %cst_15 {dimension_numbers = #tpu.dot_dimension_numbers<[1], [0], [0], [1], [0, 0, 1, 1], [], []>} : vector<64x64xbf16>, vector<64x512xbf16>, vector<64x512xf32> -> vector<64x512xf32>
    %c0_16 = arith.constant 0 : index
    %c0_17 = arith.constant 0 : index
    %39 = vector.load %arg8[%c0_16, %c0_17] : memref<64x1xf32, #tpu.memory_space<vmem>>, vector<64x1xf32>
    %40 = vector.broadcast %39 : vector<64x1xf32> to vector<64x512xf32>
    %41 = arith.addf %38, %40 : vector<64x512xf32>
    %cst_18 = arith.constant 0.000000e+00 : f32
    %42 = vector.broadcast %cst_18 : f32 to vector<64x512xf32>
    %43 = arith.maximumf %41, %42 : vector<64x512xf32>
    %c0_19 = arith.constant 0 : index
    %c0_20 = arith.constant 0 : index
    %44 = vector.load %arg9[%c0_19, %c0_20] : memref<128x64xbf16, #tpu.memory_space<vmem>>, vector<128x64xbf16>
    %45 = arith.truncf %43 : vector<64x512xf32> to vector<64x512xbf16>
    %cst_21 = arith.constant dense<0.000000e+00> : vector<128x512xf32>
    %46 = tpu.matmul %44, %45, %cst_21 {dimension_numbers = #tpu.dot_dimension_numbers<[1], [0], [0], [1], [0, 0, 1, 1], [], []>} : vector<128x64xbf16>, vector<64x512xbf16>, vector<128x512xf32> -> vector<128x512xf32>
    %c0_22 = arith.constant 0 : index
    %c0_23 = arith.constant 0 : index
    %47 = vector.load %arg10[%c0_22, %c0_23] : memref<128x1xf32, #tpu.memory_space<vmem>>, vector<128x1xf32>
    %48 = vector.broadcast %47 : vector<128x1xf32> to vector<128x512xf32>
    %49 = arith.addf %46, %48 : vector<128x512xf32>
    %cst_24 = arith.constant 0.000000e+00 : f32
    %50 = vector.broadcast %cst_24 : f32 to vector<128x512xf32>
    %51 = arith.maximumf %49, %50 : vector<128x512xf32>
    %c0_25 = arith.constant 0 : index
    %c0_26 = arith.constant 0 : index
    %52 = vector.load %arg11[%c0_25, %c0_26] : memref<64x128xbf16, #tpu.memory_space<vmem>>, vector<64x128xbf16>
    %53 = arith.truncf %51 : vector<128x512xf32> to vector<128x512xbf16>
    %cst_27 = arith.constant dense<0.000000e+00> : vector<64x512xf32>
    %54 = tpu.matmul %52, %53, %cst_27 {dimension_numbers = #tpu.dot_dimension_numbers<[1], [0], [0], [1], [0, 0, 1, 1], [], []>} : vector<64x128xbf16>, vector<128x512xbf16>, vector<64x512xf32> -> vector<64x512xf32>
    %c0_28 = arith.constant 0 : index
    %c0_29 = arith.constant 0 : index
    %55 = vector.load %arg12[%c0_28, %c0_29] : memref<64x1xf32, #tpu.memory_space<vmem>>, vector<64x1xf32>
    %56 = vector.broadcast %55 : vector<64x1xf32> to vector<64x512xf32>
    %57 = arith.addf %54, %56 : vector<64x512xf32>
    %cst_30 = arith.constant 0.000000e+00 : f32
    %58 = vector.broadcast %cst_30 : f32 to vector<64x512xf32>
    %59 = arith.maximumf %57, %58 : vector<64x512xf32>
    %c0_31 = arith.constant 0 : index
    %c0_32 = arith.constant 0 : index
    %60 = vector.load %arg18[%c0_31, %c0_32] : memref<64x1xf32, #tpu.memory_space<vmem>>, vector<64x1xf32>
    %cst_33 = arith.constant dense<0xFF800000> : vector<64xf32>
    %61 = vector.multi_reduction <maximumf>, %59, %cst_33 [1] : vector<64x512xf32> to vector<64xf32>
    %62 = vector.shape_cast %61 : vector<64xf32> to vector<64x1xf32>
    %63 = arith.maximumf %60, %62 : vector<64x1xf32>
    %c0_34 = arith.constant 0 : index
    %c0_35 = arith.constant 0 : index
    %64 = vector.load %arg18[%c0_34, %c0_35] : memref<64x1xf32, #tpu.memory_space<vmem>>, vector<64x1xf32>
    tpu.vector_store %arg18[%c0_34, %c0_35], %63 {strides = array<i32>} : memref<64x1xf32, #tpu.memory_space<vmem>>, vector<64x1xf32>,
    %c1_i32 = arith.constant 1 : i32
    %65 = arith.cmpi eq, %arg1, %c1_i32 : i32
    %66 = arith.extui %65 : i1 to i32
    %c0_i32_36 = arith.constant 0 : i32
    %67 = arith.cmpi ne, %66, %c0_i32_36 : i32
    scf.if %67 {
      %c0_37 = arith.constant 0 : index
      %c0_38 = arith.constant 0 : index
      %68 = vector.load %arg18[%c0_37, %c0_38] : memref<64x1xf32, #tpu.memory_space<vmem>>, vector<64x1xf32>
      %c0_39 = arith.constant 0 : index
      %c0_40 = arith.constant 0 : index
      %69 = vector.load %arg13[%c0_39, %c0_40] : memref<512x64xbf16, #tpu.memory_space<vmem>>, vector<512x64xbf16>
      %70 = arith.truncf %68 : vector<64x1xf32> to vector<64x1xbf16>
      %cst_41 = arith.constant dense<0.000000e+00> : vector<512x1xf32>
      %71 = tpu.matmul %69, %70, %cst_41 {dimension_numbers = #tpu.dot_dimension_numbers<[1], [0], [0], [1], [0, 0, 1, 1], [], []>} : vector<512x64xbf16>, vector<64x1xbf16>, vector<512x1xf32> -> vector<512x1xf32>
      %c0_42 = arith.constant 0 : index
      %c0_43 = arith.constant 0 : index
      %72 = vector.load %arg14[%c0_42, %c0_43] : memref<512x1xf32, #tpu.memory_space<vmem>>, vector<512x1xf32>
      %73 = arith.addf %71, %72 : vector<512x1xf32>
      %cst_44 = arith.constant 0.000000e+00 : f32
      %74 = vector.broadcast %cst_44 : f32 to vector<512x1xf32>
      %75 = arith.maximumf %73, %74 : vector<512x1xf32>
      %c0_45 = arith.constant 0 : index
      %c0_46 = arith.constant 0 : index
      %76 = vector.load %arg15[%c0_45, %c0_46] : memref<2x512xbf16, #tpu.memory_space<vmem>>, vector<2x512xbf16>
      %77 = arith.truncf %75 : vector<512x1xf32> to vector<512x1xbf16>
      %cst_47 = arith.constant dense<0.000000e+00> : vector<2x1xf32>
      %78 = tpu.matmul %76, %77, %cst_47 {dimension_numbers = #tpu.dot_dimension_numbers<[1], [0], [0], [1], [0, 0, 1, 1], [], []>} : vector<2x512xbf16>, vector<512x1xbf16>, vector<2x1xf32> -> vector<2x1xf32>
      %c0_48 = arith.constant 0 : index
      %c0_49 = arith.constant 0 : index
      %79 = vector.load %arg16[%c0_48, %c0_49] : memref<2x1xf32, #tpu.memory_space<vmem>>, vector<2x1xf32>
      %80 = arith.addf %78, %79 : vector<2x1xf32>
      %81 = vector.shape_cast %80 : vector<2x1xf32> to vector<1x2x1xf32>
      %c0_50 = arith.constant 0 : index
      %c0_51 = arith.constant 0 : index
      %c0_52 = arith.constant 0 : index
      %82 = vector.load %arg17[%c0_50, %c0_51, %c0_52] : memref<1x2x1xf32, #tpu.memory_space<vmem>>, vector<1x2x1xf32>
      tpu.vector_store %arg17[%c0_50, %c0_51, %c0_52], %81 {strides = array<i32>} : memref<1x2x1xf32, #tpu.memory_space<vmem>>, vector<1x2x1xf32>,
    } else {
    }
    return
  }
  func.func @transform_0(%arg0: i32, %arg1: i32) -> (i32, i32, i32) {
    %c0_i32 = arith.constant 0 : i32
    %c0_i32_0 = arith.constant 0 : i32
    return %arg0, %c0_i32, %arg1 : i32, i32, i32
  }
  func.func @transform_1(%arg0: i32, %arg1: i32) -> (i32, i32) {
    %c0_i32 = arith.constant 0 : i32
    %c0_i32_0 = arith.constant 0 : i32
    %c0_i32_1 = arith.constant 0 : i32
    return %c0_i32, %c0_i32_0 : i32, i32
  }
  func.func @transform_2(%arg0: i32, %arg1: i32) -> (i32, i32) {
    %c0_i32 = arith.constant 0 : i32
    %c0_i32_0 = arith.constant 0 : i32
    %c0_i32_1 = arith.constant 0 : i32
    return %c0_i32, %c0_i32_0 : i32, i32
  }
  func.func @transform_3(%arg0: i32, %arg1: i32) -> (i32, i32) {
    %c0_i32 = arith.constant 0 : i32
    %c0_i32_0 = arith.constant 0 : i32
    %c0_i32_1 = arith.constant 0 : i32
    return %c0_i32, %c0_i32_0 : i32, i32
  }
  func.func @transform_4(%arg0: i32, %arg1: i32) -> (i32, i32) {
    %c0_i32 = arith.constant 0 : i32
    %c0_i32_0 = arith.constant 0 : i32
    %c0_i32_1 = arith.constant 0 : i32
    return %c0_i32, %c0_i32_0 : i32, i32
  }
  func.func @transform_5(%arg0: i32, %arg1: i32) -> (i32, i32) {
    %c0_i32 = arith.constant 0 : i32
    %c0_i32_0 = arith.constant 0 : i32
    %c0_i32_1 = arith.constant 0 : i32
    return %c0_i32, %c0_i32_0 : i32, i32
  }
  func.func @transform_6(%arg0: i32, %arg1: i32) -> (i32, i32) {
    %c0_i32 = arith.constant 0 : i32
    %c0_i32_0 = arith.constant 0 : i32
    %c0_i32_1 = arith.constant 0 : i32
    return %c0_i32, %c0_i32_0 : i32, i32
  }
  func.func @transform_7(%arg0: i32, %arg1: i32) -> (i32, i32) {
    %c0_i32 = arith.constant 0 : i32
    %c0_i32_0 = arith.constant 0 : i32
    %c0_i32_1 = arith.constant 0 : i32
    return %c0_i32, %c0_i32_0 : i32, i32
  }
  func.func @transform_8(%arg0: i32, %arg1: i32) -> (i32, i32) {
    %c0_i32 = arith.constant 0 : i32
    %c0_i32_0 = arith.constant 0 : i32
    %c0_i32_1 = arith.constant 0 : i32
    return %c0_i32, %c0_i32_0 : i32, i32
  }
  func.func @transform_9(%arg0: i32, %arg1: i32) -> (i32, i32) {
    %c0_i32 = arith.constant 0 : i32
    %c0_i32_0 = arith.constant 0 : i32
    %c0_i32_1 = arith.constant 0 : i32
    return %c0_i32, %c0_i32_0 : i32, i32
  }
  func.func @transform_10(%arg0: i32, %arg1: i32) -> (i32, i32) {
    %c0_i32 = arith.constant 0 : i32
    %c0_i32_0 = arith.constant 0 : i32
    %c0_i32_1 = arith.constant 0 : i32
    return %c0_i32, %c0_i32_0 : i32, i32
  }
  func.func @transform_11(%arg0: i32, %arg1: i32) -> (i32, i32) {
    %c0_i32 = arith.constant 0 : i32
    %c0_i32_0 = arith.constant 0 : i32
    %c0_i32_1 = arith.constant 0 : i32
    return %c0_i32, %c0_i32_0 : i32, i32
  }
  func.func @transform_12(%arg0: i32, %arg1: i32) -> (i32, i32) {
    %c0_i32 = arith.constant 0 : i32
    %c0_i32_0 = arith.constant 0 : i32
    %c0_i32_1 = arith.constant 0 : i32
    return %c0_i32, %c0_i32_0 : i32, i32
  }
  func.func @transform_13(%arg0: i32, %arg1: i32) -> (i32, i32) {
    %c0_i32 = arith.constant 0 : i32
    %c0_i32_0 = arith.constant 0 : i32
    %c0_i32_1 = arith.constant 0 : i32
    return %c0_i32, %c0_i32_0 : i32, i32
  }
  func.func @transform_14(%arg0: i32, %arg1: i32) -> (i32, i32) {
    %c0_i32 = arith.constant 0 : i32
    %c0_i32_0 = arith.constant 0 : i32
    %c0_i32_1 = arith.constant 0 : i32
    return %c0_i32, %c0_i32_0 : i32, i32
  }
  func.func @transform_15(%arg0: i32, %arg1: i32) -> (i32, i32, i32) {
    %c0_i32 = arith.constant 0 : i32
    %c0_i32_0 = arith.constant 0 : i32
    %c0_i32_1 = arith.constant 0 : i32
    return %arg0, %c0_i32, %c0_i32_0 : i32, i32, i32
  }
}

</mosaic_0001>

<llo_original>
// kernel: pointnet_forward.1
$region0: #{pointnet_forward.1}
  #allocation0 [shape = 'u32[]', space=smem, size = 0x4, offset = 0x4, fixed_abs, tag = 'smem constant byte address 0x4 - core index']
  #allocation1 [shape = 'u32[144,128]{1,0:T(1,128)}', space=vmem, size = 0x12000, scoped, tag = 'internal scratch']
  #allocation2 [shape = 'f32[64,1]{1,0:T(8,128)}', space=vmem, size = 0x8000, scoped, tag = 'scratch operand']
  %s0 = inlined_call_operand.vmem [shape: f32[2,3,1024], index: 0, kind: input, shape index: {}]
  %s1 = inlined_call_operand.vmem [shape: f32[64,3], index: 1, kind: input, shape index: {}]
  %s2 = inlined_call_operand.vmem [shape: f32[64,1], index: 2, kind: input, shape index: {}]
  %s3 = inlined_call_operand.vmem [shape: bf16[64,64], index: 3, kind: input, shape index: {}]
  %s4 = inlined_call_operand.vmem [shape: f32[64,1], index: 4, kind: input, shape index: {}]
  %s5 = inlined_call_operand.vmem [shape: bf16[64,64], index: 5, kind: input, shape index: {}]
  %s6 = inlined_call_operand.vmem [shape: f32[64,1], index: 6, kind: input, shape index: {}]
  %s7 = inlined_call_operand.vmem [shape: bf16[128,64], index: 7, kind: input, shape index: {}]
  %s8 = inlined_call_operand.vmem [shape: f32[128,1], index: 8, kind: input, shape index: {}]
  %s9 = inlined_call_operand.vmem [shape: bf16[64,128], index: 9, kind: input, shape index: {}]
  %s10 = inlined_call_operand.vmem [shape: f32[64,1], index: 10, kind: input, shape index: {}]
  %s11 = inlined_call_operand.vmem [shape: bf16[512,64], index: 11, kind: input, shape index: {}]
  %s12 = inlined_call_operand.vmem [shape: f32[512,1], index: 12, kind: input, shape index: {}]
  %s13 = inlined_call_operand.vmem [shape: bf16[2,512], index: 13, kind: input, shape index: {}]
  %s14 = inlined_call_operand.vmem [shape: f32[2,1], index: 14, kind: input, shape index: {}]
  %s15 = inlined_call_operand.vmem [shape: f32[2,2,1], index: 15, kind: output, shape index: {}]
  %s16 = sld [smem:[#allocation0]]
  $region101: #{pointnet_forward.1} parent=0
    _
  %s18 = ssub.s32 1, %s16
  %s19 = scalar_select 0, %s18, %s16
  loop: start=0, step=1, limit=6
  $region2: #{pointnet_forward.1} parent=0 // loop_pre_header
    _
  $region3: #{pointnet_forward.1} parent=0 // loop_header
    %s21 = sphi 0, %s25
    %p22 = scmp.ge.s32.totalorder %s21, 6
    %s28 = sphi 0, %s40
    %s29 = sphi 0, %s36
    %s30 = sphi 0, %s28
    %s31 = sphi 0, %s29
    %s32 = sphi 0, %s30
    %s33 = sphi 0, %s31
    %s45 = sphi 0, %s47
    %s48 = sphi 0, %s45
    %s49 = sphi 0, %s48
    %s65 = sphi 0, %s49
    %s69 = sphi 0, %s69
    %s71 = sphi 0, %s69
    %s72 = sphi 0, %s71
    %s86 = sphi 0, %s72
    %s90 = sphi 0, %s90
    %s92 = sphi 0, %s90
    %s93 = sphi 0, %s92
    %s107 = sphi 0, %s93
    %s111 = sphi 0, %s111
    %s113 = sphi 0, %s111
    %s114 = sphi 0, %s113
    %s128 = sphi 0, %s114
    %s132 = sphi 0, %s132
    %s134 = sphi 0, %s132
    %s135 = sphi 0, %s134
    %s149 = sphi 0, %s135
    %s153 = sphi 0, %s153
    %s155 = sphi 0, %s153
    %s156 = sphi 0, %s155
    %s170 = sphi 0, %s156
    %s174 = sphi 0, %s174
    %s176 = sphi 0, %s174
    %s177 = sphi 0, %s176
    %s191 = sphi 0, %s177
    %s195 = sphi 0, %s195
    %s197 = sphi 0, %s195
    %s198 = sphi 0, %s197
    %s212 = sphi 0, %s198
    %s216 = sphi 0, %s216
    %s218 = sphi 0, %s216
    %s219 = sphi 0, %s218
    %s233 = sphi 0, %s219
    %s237 = sphi 0, %s237
    %s239 = sphi 0, %s237
    %s240 = sphi 0, %s239
    %s254 = sphi 0, %s240
    %s258 = sphi 0, %s258
    %s260 = sphi 0, %s258
    %s261 = sphi 0, %s260
    %s275 = sphi 0, %s261
    %s279 = sphi 0, %s279
    %s281 = sphi 0, %s279
    %s282 = sphi 0, %s281
    %s296 = sphi 0, %s282
    %s300 = sphi 0, %s300
    %s302 = sphi 0, %s300
    %s303 = sphi 0, %s302
    %s317 = sphi 0, %s303
    %s321 = sphi 0, %s321
    %s323 = sphi 0, %s321
    %s324 = sphi 0, %s323
    %s338 = sphi 0, %s324
    %s342 = sphi 0, %s342
    %s344 = sphi 0, %s342
    %s345 = sphi 0, %s344
    %s359 = sphi 0, %s345
    %s365 = sphi 0, %s367
    %s368 = sphi 0, %s365
    %s369 = sphi 0, %s368
    %s385 = sphi 0, %s369
  $region4: #{pointnet_forward.1} parent=0 // loop_header_branch
    %24 = sbr.rel (%p22) target = $region8
  $region5: #{pointnet_forward.1} parent=0 // loop_body
    %s26 = ssub.s32 %s21, 1
    %s27 = ssub.s32 %s21, 2
    %s34 = sadd.s32 1, %s29
    %p35 = scmp.ge.s32.totalorder %s34, 2
    %s36 = scalar_select %p35, 0, %s34
    %s37 = sadd.s32 1, %s28
    %s38 = scalar_select %p35, %s37, %s28
    %p39 = scmp.ge.s32.totalorder %s38, 2
    %s40 = scalar_select %p39, 0, %s38
    %s41 = ssub.s32 %s28, %s40
    %s42 = ssub.s32 %s29, %s36
    %s43 = sor.u32 %s41, %s42
    %p44 = scmp.eq.s32.totalorder %s43, 0
    %s46 = sadd.s32 %s45, 1
    %s47 = scalar_select %p44, %s45, %s46
    %p50 = pneg %p44
    %p51 = scmp.eq.s32.totalorder %s21, 3
    %p52 = por %p50, %p51
    %p53 = scmp.ne.s32.totalorder %s45, %s48
    %p54 = scmp.eq.s32.totalorder %s21, 0
    %p55 = por %p53, %p54
    %p56 = scmp.ne.s32.totalorder %s45, %s48
    %p57 = scmp.eq.s32.totalorder %s26, 3
    %p58 = por %p56, %p57
    %p59 = scmp.ne.s32.totalorder %s48, %s49
    %p60 = scmp.eq.s32.totalorder %s26, 0
    %p61 = por %p59, %p60
    %p62 = scmp.ne.s32.totalorder %s48, %s49
    %p63 = scmp.eq.s32.totalorder %s27, 3
    %p64 = por %p62, %p63
    %p66 = scmp.ne.s32.totalorder %s49, %s65
    %p67 = scmp.eq.s32.totalorder %s27, 0
    %p68 = por %p66, %p67
    %s70 = sadd.s32 %s69, 1
    %p73 = scmp.eq.s32.totalorder %s21, 3
    %p74 = scmp.ne.s32.totalorder %s69, %s71
    %p75 = scmp.eq.s32.totalorder %s21, 0
    %p76 = por %p74, %p75
    %p77 = scmp.ne.s32.totalorder %s69, %s71
    %p78 = scmp.eq.s32.totalorder %s26, 3
    %p79 = por %p77, %p78
    %p80 = scmp.ne.s32.totalorder %s71, %s72
    %p81 = scmp.eq.s32.totalorder %s26, 0
    %p82 = por %p80, %p81
    %p83 = scmp.ne.s32.totalorder %s71, %s72
    %p84 = scmp.eq.s32.totalorder %s27, 3
    %p85 = por %p83, %p84
    %p87 = scmp.ne.s32.totalorder %s72, %s86
    %p88 = scmp.eq.s32.totalorder %s27, 0
    %p89 = por %p87, %p88
    %s91 = sadd.s32 %s90, 1
    %p94 = scmp.eq.s32.totalorder %s21, 3
    %p95 = scmp.ne.s32.totalorder %s90, %s92
    %p96 = scmp.eq.s32.totalorder %s21, 0
    %p97 = por %p95, %p96
    %p98 = scmp.ne.s32.totalorder %s90, %s92
    %p99 = scmp.eq.s32.totalorder %s26, 3
    %p100 = por %p98, %p99
    %p101 = scmp.ne.s32.totalorder %s92, %s93
    %p102 = scmp.eq.s32.totalorder %s26, 0
    %p103 = por %p101, %p102
    %p104 = scmp.ne.s32.totalorder %s92, %s93
    %p105 = scmp.eq.s32.totalorder %s27, 3
    %p106 = por %p104, %p105
    %p108 = scmp.ne.s32.totalorder %s93, %s107
    %p109 = scmp.eq.s32.totalorder %s27, 0
    %p110 = por %p108, %p109
    %s112 = sadd.s32 %s111, 1
    %p115 = scmp.eq.s32.totalorder %s21, 3
    %p116 = scmp.ne.s32.totalorder %s111, %s113
    %p117 = scmp.eq.s32.totalorder %s21, 0
    %p118 = por %p116, %p117
    %p119 = scmp.ne.s32.totalorder %s111, %s113
    %p120 = scmp.eq.s32.totalorder %s26, 3
    %p121 = por %p119, %p120
    %p122 = scmp.ne.s32.totalorder %s113, %s114
    %p123 = scmp.eq.s32.totalorder %s26, 0
    %p124 = por %p122, %p123
    %p125 = scmp.ne.s32.totalorder %s113, %s114
    %p126 = scmp.eq.s32.totalorder %s27, 3
    %p127 = por %p125, %p126
    %p129 = scmp.ne.s32.totalorder %s114, %s128
    %p130 = scmp.eq.s32.totalorder %s27, 0
    %p131 = por %p129, %p130
    %s133 = sadd.s32 %s132, 1
    %p136 = scmp.eq.s32.totalorder %s21, 3
    %p137 = scmp.ne.s32.totalorder %s132, %s134
    %p138 = scmp.eq.s32.totalorder %s21, 0
    %p139 = por %p137, %p138
    %p140 = scmp.ne.s32.totalorder %s132, %s134
    %p141 = scmp.eq.s32.totalorder %s26, 3
    %p142 = por %p140, %p141
    %p143 = scmp.ne.s32.totalorder %s134, %s135
    %p144 = scmp.eq.s32.totalorder %s26, 0
    %p145 = por %p143, %p144
    %p146 = scmp.ne.s32.totalorder %s134, %s135
    %p147 = scmp.eq.s32.totalorder %s27, 3
    %p148 = por %p146, %p147
    %p150 = scmp.ne.s32.totalorder %s135, %s149
    %p151 = scmp.eq.s32.totalorder %s27, 0
    %p152 = por %p150, %p151
    %s154 = sadd.s32 %s153, 1
    %p157 = scmp.eq.s32.totalorder %s21, 3
    %p158 = scmp.ne.s32.totalorder %s153, %s155
    %p159 = scmp.eq.s32.totalorder %s21, 0
    %p160 = por %p158, %p159
    %p161 = scmp.ne.s32.totalorder %s153, %s155
    %p162 = scmp.eq.s32.totalorder %s26, 3
    %p163 = por %p161, %p162
    %p164 = scmp.ne.s32.totalorder %s155, %s156
    %p165 = scmp.eq.s32.totalorder %s26, 0
    %p166 = por %p164, %p165
    %p167 = scmp.ne.s32.totalorder %s155, %s156
    %p168 = scmp.eq.s32.totalorder %s27, 3
    %p169 = por %p167, %p168
    %p171 = scmp.ne.s32.totalorder %s156, %s170
    %p172 = scmp.eq.s32.totalorder %s27, 0
    %p173 = por %p171, %p172
    %s175 = sadd.s32 %s174, 1
    %p178 = scmp.eq.s32.totalorder %s21, 3
    %p179 = scmp.ne.s32.totalorder %s174, %s176
    %p180 = scmp.eq.s32.totalorder %s21, 0
    %p181 = por %p179, %p180
    %p182 = scmp.ne.s32.totalorder %s174, %s176
    %p183 = scmp.eq.s32.totalorder %s26, 3
    %p184 = por %p182, %p183
    %p185 = scmp.ne.s32.totalorder %s176, %s177
    %p186 = scmp.eq.s32.totalorder %s26, 0
    %p187 = por %p185, %p186
    %p188 = scmp.ne.s32.totalorder %s176, %s177
    %p189 = scmp.eq.s32.totalorder %s27, 3
    %p190 = por %p188, %p189
    %p192 = scmp.ne.s32.totalorder %s177, %s191
    %p193 = scmp.eq.s32.totalorder %s27, 0
    %p194 = por %p192, %p193
    %s196 = sadd.s32 %s195, 1
    %p199 = scmp.eq.s32.totalorder %s21, 3
    %p200 = scmp.ne.s32.totalorder %s195, %s197
    %p201 = scmp.eq.s32.totalorder %s21, 0
    %p202 = por %p200, %p201
    %p203 = scmp.ne.s32.totalorder %s195, %s197
    %p204 = scmp.eq.s32.totalorder %s26, 3
    %p205 = por %p203, %p204
    %p206 = scmp.ne.s32.totalorder %s197, %s198
    %p207 = scmp.eq.s32.totalorder %s26, 0
    %p208 = por %p206, %p207
    %p209 = scmp.ne.s32.totalorder %s197, %s198
    %p210 = scmp.eq.s32.totalorder %s27, 3
    %p211 = por %p209, %p210
    %p213 = scmp.ne.s32.totalorder %s198, %s212
    %p214 = scmp.eq.s32.totalorder %s27, 0
    %p215 = por %p213, %p214
    %s217 = sadd.s32 %s216, 1
    %p220 = scmp.eq.s32.totalorder %s21, 3
    %p221 = scmp.ne.s32.totalorder %s216, %s218
    %p222 = scmp.eq.s32.totalorder %s21, 0
    %p223 = por %p221, %p222
    %p224 = scmp.ne.s32.totalorder %s216, %s218
    %p225 = scmp.eq.s32.totalorder %s26, 3
    %p226 = por %p224, %p225
    %p227 = scmp.ne.s32.totalorder %s218, %s219
    %p228 = scmp.eq.s32.totalorder %s26, 0
    %p229 = por %p227, %p228
    %p230 = scmp.ne.s32.totalorder %s218, %s219
    %p231 = scmp.eq.s32.totalorder %s27, 3
    %p232 = por %p230, %p231
    %p234 = scmp.ne.s32.totalorder %s219, %s233
    %p235 = scmp.eq.s32.totalorder %s27, 0
    %p236 = por %p234, %p235
    %s238 = sadd.s32 %s237, 1
    %p241 = scmp.eq.s32.totalorder %s21, 3
    %p242 = scmp.ne.s32.totalorder %s237, %s239
    %p243 = scmp.eq.s32.totalorder %s21, 0
    %p244 = por %p242, %p243
    %p245 = scmp.ne.s32.totalorder %s237, %s239
    %p246 = scmp.eq.s32.totalorder %s26, 3
    %p247 = por %p245, %p246
    %p248 = scmp.ne.s32.totalorder %s239, %s240
    %p249 = scmp.eq.s32.totalorder %s26, 0
    %p250 = por %p248, %p249
    %p251 = scmp.ne.s32.totalorder %s239, %s240
    %p252 = scmp.eq.s32.totalorder %s27, 3
    %p253 = por %p251, %p252
    %p255 = scmp.ne.s32.totalorder %s240, %s254
    %p256 = scmp.eq.s32.totalorder %s27, 0
    %p257 = por %p255, %p256
    %s259 = sadd.s32 %s258, 1
    %p262 = scmp.eq.s32.totalorder %s21, 3
    %p263 = scmp.ne.s32.totalorder %s258, %s260
    %p264 = scmp.eq.s32.totalorder %s21, 0
    %p265 = por %p263, %p264
    %p266 = scmp.ne.s32.totalorder %s258, %s260
    %p267 = scmp.eq.s32.totalorder %s26, 3
    %p268 = por %p266, %p267
    %p269 = scmp.ne.s32.totalorder %s260, %s261
    %p270 = scmp.eq.s32.totalorder %s26, 0
    %p271 = por %p269, %p270
    %p272 = scmp.ne.s32.totalorder %s260, %s261
    %p273 = scmp.eq.s32.totalorder %s27, 3
    %p274 = por %p272, %p273
    %p276 = scmp.ne.s32.totalorder %s261, %s275
    %p277 = scmp.eq.s32.totalorder %s27, 0
    %p278 = por %p276, %p277
    %s280 = sadd.s32 %s279, 1
    %p283 = scmp.eq.s32.totalorder %s21, 3
    %p284 = scmp.ne.s32.totalorder %s279, %s281
    %p285 = scmp.eq.s32.totalorder %s21, 0
    %p286 = por %p284, %p285
    %p287 = scmp.ne.s32.totalorder %s279, %s281
    %p288 = scmp.eq.s32.totalorder %s26, 3
    %p289 = por %p287, %p288
    %p290 = scmp.ne.s32.totalorder %s281, %s282
    %p291 = scmp.eq.s32.totalorder %s26, 0
    %p292 = por %p290, %p291
    %p293 = scmp.ne.s32.totalorder %s281, %s282
    %p294 = scmp.eq.s32.totalorder %s27, 3
    %p295 = por %p293, %p294
    %p297 = scmp.ne.s32.totalorder %s282, %s296
    %p298 = scmp.eq.s32.totalorder %s27, 0
    %p299 = por %p297, %p298
    %s301 = sadd.s32 %s300, 1
    %p304 = scmp.eq.s32.totalorder %s21, 3
    %p305 = scmp.ne.s32.totalorder %s300, %s302
    %p306 = scmp.eq.s32.totalorder %s21, 0
    %p307 = por %p305, %p306
    %p308 = scmp.ne.s32.totalorder %s300, %s302
    %p309 = scmp.eq.s32.totalorder %s26, 3
    %p310 = por %p308, %p309
    %p311 = scmp.ne.s32.totalorder %s302, %s303
    %p312 = scmp.eq.s32.totalorder %s26, 0
    %p313 = por %p311, %p312
    %p314 = scmp.ne.s32.totalorder %s302, %s303
    %p315 = scmp.eq.s32.totalorder %s27, 3
    %p316 = por %p314, %p315
    %p318 = scmp.ne.s32.totalorder %s303, %s317
    %p319 = scmp.eq.s32.totalorder %s27, 0
    %p320 = por %p318, %p319
    %s322 = sadd.s32 %s321, 1
    %p325 = scmp.eq.s32.totalorder %s21, 3
    %p326 = scmp.ne.s32.totalorder %s321, %s323
    %p327 = scmp.eq.s32.totalorder %s21, 0
    %p328 = por %p326, %p327
    %p329 = scmp.ne.s32.totalorder %s321, %s323
    %p330 = scmp.eq.s32.totalorder %s26, 3
    %p331 = por %p329, %p330
    %p332 = scmp.ne.s32.totalorder %s323, %s324
    %p333 = scmp.eq.s32.totalorder %s26, 0
    %p334 = por %p332, %p333
    %p335 = scmp.ne.s32.totalorder %s323, %s324
    %p336 = scmp.eq.s32.totalorder %s27, 3
    %p337 = por %p335, %p336
    %p339 = scmp.ne.s32.totalorder %s324, %s338
    %p340 = scmp.eq.s32.totalorder %s27, 0
    %p341 = por %p339, %p340
    %s343 = sadd.s32 %s342, 1
    %p346 = scmp.eq.s32.totalorder %s21, 3
    %p347 = scmp.ne.s32.totalorder %s342, %s344
    %p348 = scmp.eq.s32.totalorder %s21, 0
    %p349 = por %p347, %p348
    %p350 = scmp.ne.s32.totalorder %s342, %s344
    %p351 = scmp.eq.s32.totalorder %s26, 3
    %p352 = por %p350, %p351
    %p353 = scmp.ne.s32.totalorder %s344, %s345
    %p354 = scmp.eq.s32.totalorder %s26, 0
    %p355 = por %p353, %p354
    %p356 = scmp.ne.s32.totalorder %s344, %s345
    %p357 = scmp.eq.s32.totalorder %s27, 3
    %p358 = por %p356, %p357
    %p360 = scmp.ne.s32.totalorder %s345, %s359
    %p361 = scmp.eq.s32.totalorder %s27, 0
    %p362 = por %p360, %p361
    %s363 = ssub.s32 %s28, %s40
    %p364 = scmp.eq.s32.totalorder %s363, 0
    %s366 = sadd.s32 %s365, 1
    %s367 = scalar_select %p364, %s365, %s366
    %p370 = pneg %p364
    %p371 = scmp.eq.s32.totalorder %s21, 3
    %p372 = por %p370, %p371
    %p373 = scmp.ne.s32.totalorder %s365, %s368
    %p374 = scmp.eq.s32.totalorder %s21, 0
    %p375 = por %p373, %p374
    %p376 = scmp.ne.s32.totalorder %s365, %s368
    %p377 = scmp.eq.s32.totalorder %s26, 3
    %p378 = por %p376, %p377
    %p379 = scmp.ne.s32.totalorder %s368, %s369
    %p380 = scmp.eq.s32.totalorder %s26, 0
    %p381 = por %p379, %p380
    %p382 = scmp.ne.s32.totalorder %s368, %s369
    %p383 = scmp.eq.s32.totalorder %s27, 3
    %p384 = por %p382, %p383
    %p386 = scmp.ne.s32.totalorder %s369, %s385
    %p387 = scmp.eq.s32.totalorder %s27, 0
    %p388 = por %p386, %p387
    %p389 = scmp.le.s32.totalorder 1, %s21
    %p390 = scmp.lt.s32.totalorder %s21, 5
    %p391 = pnand %p389, %p390
    %p392 = pneg %p391
    // Predicated region
    $region9: #{pointnet_forward.1} parent=5 // pred_check
      _
    $region10: #{pointnet_forward.1} parent=5 // pred_check_branch
      %394 = sbr.rel (%p391) target = $region12
    $region11: #{pointnet_forward.1} parent=5 // pred_region
      %s395 = ssub.s32 %s21, 1
      // Predicated region
      $region13: #{pointnet_forward.1} parent=11 // pred_check
        %p396 = pneg %p82
      $region14: #{pointnet_forward.1} parent=11 // pred_check_branch
        %398 = sbr.rel (%p396) target = $region16
      $region15: #{pointnet_forward.1} parent=11 // pred_region
        _
      $region16: #{pointnet_forward.1} parent=11 // pred_fallthru
        _
      // Predicated region
      $region17: #{pointnet_forward.1} parent=11 // pred_check
        %p399 = pneg %p103
      $region18: #{pointnet_forward.1} parent=11 // pred_check_branch
        %401 = sbr.rel (%p399) target = $region20
      $region19: #{pointnet_forward.1} parent=11 // pred_region
        _
      $region20: #{pointnet_forward.1} parent=11 // pred_fallthru
        _
      // Predicated region
      $region21: #{pointnet_forward.1} parent=11 // pred_check
        %p402 = pneg %p124
      $region22: #{pointnet_forward.1} parent=11 // pred_check_branch
        %404 = sbr.rel (%p402) target = $region24
      $region23: #{pointnet_forward.1} parent=11 // pred_region
        _
      $region24: #{pointnet_forward.1} parent=11 // pred_fallthru
        _
      // Predicated region
      $region25: #{pointnet_forward.1} parent=11 // pred_check
        %p405 = pneg %p145
      $region26: #{pointnet_forward.1} parent=11 // pred_check_branch
        %407 = sbr.rel (%p405) target = $region28
      $region27: #{pointnet_forward.1} parent=11 // pred_region
        _
      $region28: #{pointnet_forward.1} parent=11 // pred_fallthru
        _
      // Predicated region
      $region29: #{pointnet_forward.1} parent=11 // pred_check
        %p408 = pneg %p166
      $region30: #{pointnet_forward.1} parent=11 // pred_check_branch
        %410 = sbr.rel (%p408) target = $region32
      $region31: #{pointnet_forward.1} parent=11 // pred_region
        _
      $region32: #{pointnet_forward.1} parent=11 // pred_fallthru
        _
      // Predicated region
      $region33: #{pointnet_forward.1} parent=11 // pred_check
        %p411 = pneg %p187
      $region34: #{pointnet_forward.1} parent=11 // pred_check_branch
        %413 = sbr.rel (%p411) target = $region36
      $region35: #{pointnet_forward.1} parent=11 // pred_region
        _
      $region36: #{pointnet_forward.1} parent=11 // pred_fallthru
        _
      // Predicated region
      $region37: #{pointnet_forward.1} parent=11 // pred_check
        %p414 = pneg %p208
      $region38: #{pointnet_forward.1} parent=11 // pred_check_branch
        %416 = sbr.rel (%p414) target = $region40
      $region39: #{pointnet_forward.1} parent=11 // pred_region
        _
      $region40: #{pointnet_forward.1} parent=11 // pred_fallthru
        _
      // Predicated region
      $region41: #{pointnet_forward.1} parent=11 // pred_check
        %p417 = pneg %p229
      $region42: #{pointnet_forward.1} parent=11 // pred_check_branch
        %419 = sbr.rel (%p417) target = $region44
      $region43: #{pointnet_forward.1} parent=11 // pred_region
        _
      $region44: #{pointnet_forward.1} parent=11 // pred_fallthru
        _
      // Predicated region
      $region45: #{pointnet_forward.1} parent=11 // pred_check
        %p420 = pneg %p250
      $region46: #{pointnet_forward.1} parent=11 // pred_check_branch
        %422 = sbr.rel (%p420) target = $region48
      $region47: #{pointnet_forward.1} parent=11 // pred_region
        _
      $region48: #{pointnet_forward.1} parent=11 // pred_fallthru
        _
      // Predicated region
      $region49: #{pointnet_forward.1} parent=11 // pred_check
        %p423 = pneg %p271
      $region50: #{pointnet_forward.1} parent=11 // pred_check_branch
        %425 = sbr.rel (%p423) target = $region52
      $region51: #{pointnet_forward.1} parent=11 // pred_region
        _
      $region52: #{pointnet_forward.1} parent=11 // pred_fallthru
        _
      // Predicated region
      $region53: #{pointnet_forward.1} parent=11 // pred_check
        %p426 = pneg %p292
      $region54: #{pointnet_forward.1} parent=11 // pred_check_branch
        %428 = sbr.rel (%p426) target = $region56
      $region55: #{pointnet_forward.1} parent=11 // pred_region
        _
      $region56: #{pointnet_forward.1} parent=11 // pred_fallthru
        _
      // Predicated region
      $region57: #{pointnet_forward.1} parent=11 // pred_check
        %p429 = pneg %p313
      $region58: #{pointnet_forward.1} parent=11 // pred_check_branch
        %431 = sbr.rel (%p429) target = $region60
      $region59: #{pointnet_forward.1} parent=11 // pred_region
        _
      $region60: #{pointnet_forward.1} parent=11 // pred_fallthru
        _
      // Predicated region
      $region61: #{pointnet_forward.1} parent=11 // pred_check
        %p432 = pneg %p334
      $region62: #{pointnet_forward.1} parent=11 // pred_check_branch
        %434 = sbr.rel (%p432) target = $region64
      $region63: #{pointnet_forward.1} parent=11 // pred_region
        _
      $region64: #{pointnet_forward.1} parent=11 // pred_fallthru
        _
      // Predicated region
      $region65: #{pointnet_forward.1} parent=11 // pred_check
        %p435 = pneg %p355
      $region66: #{pointnet_forward.1} parent=11 // pred_check_branch
        %437 = sbr.rel (%p435) target = $region68
      $region67: #{pointnet_forward.1} parent=11 // pred_region
        _
      $region68: #{pointnet_forward.1} parent=11 // pred_fallthru
        _
    $region12: #{pointnet_forward.1} parent=5 // pred_fallthru
      _
    %p438 = scmp.lt.s32.totalorder %s21, 4
    // Predicated region
    $region69: #{pointnet_forward.1} parent=5 // pred_check
      %p439 = pneg %p438
    $region70: #{pointnet_forward.1} parent=5 // pred_check_branch
      %441 = sbr.rel (%p439) target = $region72
    $region71: #{pointnet_forward.1} parent=5 // pred_region
      // Predicated region
      $region73: #{pointnet_forward.1} parent=71 // pred_check
        %p442 = pneg %p55
      $region74: #{pointnet_forward.1} parent=71 // pred_check_branch
        %444 = sbr.rel (%p442) target = $region76
      $region75: #{pointnet_forward.1} parent=71 // pred_region
        %s445 = smul.u32 4, %s29
        %p446 = scmp.lt.s32.totalorder %s28, 1
        %s447 = scalar_select %p446, %s28, 1
        %p448 = scmp.lt.s32.totalorder %s445, 7
        %s449 = scalar_select %p448, %s445, 7
        %s450 = smul.addr %s447, 8
        %s451 = sadd.s32 %s449, %s450
        %s452 = smul.addr %s451, 4
        %s453 = scalar_lea.vmem %s0, %s452
        %s454 = smul.u32 4, %s29
      $region76: #{pointnet_forward.1} parent=71 // pred_fallthru
        _
    $region72: #{pointnet_forward.1} parent=5 // pred_fallthru
      _
    %p455 = scmp.le.s32.totalorder 1, %s21
    %p456 = scmp.lt.s32.totalorder %s21, 5
    %p457 = pnand %p455, %p456
    %p458 = pneg %p457
    // Predicated region
    $region77: #{pointnet_forward.1} parent=5 // pred_check
      _
    $region78: #{pointnet_forward.1} parent=5 // pred_check_branch
      %460 = sbr.rel (%p457) target = $region80
    $region79: #{pointnet_forward.1} parent=5 // pred_region
      %s461 = ssub.s32 %s21, 1
      %s462 = smul.u32 4, %s31
      %p463 = scmp.lt.s32.totalorder %s30, 1
      %s464 = scalar_select %p463, %s30, 1
      %p465 = scmp.lt.s32.totalorder %s462, 7
      %s466 = scalar_select %p465, %s462, 7
      %s467 = smul.addr %s464, 8
      %s468 = sadd.s32 %s466, %s467
      %s469 = smul.addr %s468, 4
      %s470 = scalar_lea.vmem %s0, %s469
      %p471 = pneg %p61
      %p472 = pneg %p58
      %p473 = pneg %p82
      %p474 = pneg %p79
      %p475 = pneg %p103
      %p476 = pneg %p100
      %p477 = pneg %p124
      %p478 = pneg %p121
      %p479 = pneg %p145
      %p480 = pneg %p142
      %p481 = pneg %p166
      %p482 = pneg %p163
      %p483 = pneg %p187
      %p484 = pneg %p184
      %p485 = pneg %p208
      %p486 = pneg %p205
      %p487 = pneg %p229
      %p488 = pneg %p226
      %p489 = pneg %p250
      %p490 = pneg %p247
      %p491 = pneg %p271
      %p492 = pneg %p268
      %p493 = pneg %p292
      %p494 = pneg %p289
      %p495 = pneg %p313
      %p496 = pneg %p310
      %p497 = pneg %p334
      %p498 = pneg %p331
      %p499 = pneg %p355
      %p500 = pneg %p352
      %p501 = pneg %p381
      %p502 = pneg %p378
      %p503 = scmp.lt.s32.totalorder %s30, 1
      %s504 = scalar_select %p503, %s30, 1
      %s505 = smul.addr %s504, 2
      %s506 = scalar_lea.vmem %s15, %s505
      %s507 = smul.u32 4, %s31
      %p508 = scmp.lt.s32.totalorder %s30, 1
      %s509 = scalar_select %p508, %s30, 1
      %p510 = scmp.lt.s32.totalorder %s507, 7
      %s511 = scalar_select %p510, %s507, 7
      %s512 = smul.addr %s509, 8
      %s513 = sadd.s32 %s511, %s512
      %s514 = smul.addr %s513, 4
      %s515 = scalar_lea.vmem %s0, %s514
      %s516 = smul.u32 4, %s31
      %p517 = scmp.lt.s32.totalorder %s30, 1
      %s518 = scalar_select %p517, %s30, 1
      %s519 = smul.addr %s518, 2
      %s520 = scalar_lea.vmem %s15, %s519
      %p522 = scmp.eq.s32.totalorder %s31, 0
      // Predicated region
      $region81: #{pointnet_forward.1} parent=79 // pred_check
        %p523 = pneg %p522
      $region82: #{pointnet_forward.1} parent=79 // pred_check_branch
        %525 = sbr.rel (%p523) target = $region84
      $region83: #{pointnet_forward.1} parent=79 // pred_region
        %vm526 = vcmask 7168
        %527 = vst.msk [vmem:[#allocation2] sm:$0xff] %vm526, -inf
        %528 = vst.msk [vmem:[#allocation2 + $0x8] sm:$0xff] %vm526, -inf
        %529 = vst.msk [vmem:[#allocation2 + $0x10] sm:$0xff] %vm526, -inf
        %530 = vst.msk [vmem:[#allocation2 + $0x18] sm:$0xff] %vm526, -inf
        %531 = vst.msk [vmem:[#allocation2 + $0x20] sm:$0xff] %vm526, -inf
        %532 = vst.msk [vmem:[#allocation2 + $0x28] sm:$0xff] %vm526, -inf
        %533 = vst.msk [vmem:[#allocation2 + $0x30] sm:$0xff] %vm526, -inf
        %534 = vst.msk [vmem:[#allocation2 + $0x38] sm:$0xff] %vm526, -inf
      $region84: #{pointnet_forward.1} parent=79 // pred_fallthru
        _
      %v535 = vld [vmem:[%s515] sm:$0x77]
      %v536 = vld [vmem:[%s515 + $0x8] sm:$0x77]
      %v537 = vld [vmem:[%s1] sm:$0xff]
      %v538 = vld [vmem:[%s1 + $0x8] sm:$0xff]
      %v539 = vld [vmem:[%s1 + $0x10] sm:$0xff]
      %v540 = vld [vmem:[%s1 + $0x18] sm:$0xff]
      %v541 = vld [vmem:[%s1 + $0x20] sm:$0xff]
      %v542 = vld [vmem:[%s1 + $0x28] sm:$0xff]
      %v543 = vld [vmem:[%s1 + $0x30] sm:$0xff]
      %v544 = vld [vmem:[%s1 + $0x38] sm:$0xff]
      %546 = vset.pattern.permute.xlu0 0
      %547 = vperm.xlu0 %546, %v537
      %v548 = vpop.permute.xlu0 %547
      %551 = vset.pattern.permute.xlu0 0
      %552 = vperm.xlu0 %551, %v538
      %v553 = vpop.permute.xlu0 %552
      %556 = vset.pattern.permute.xlu0 0
      %557 = vperm.xlu0 %556, %v539
      %v558 = vpop.permute.xlu0 %557
      %561 = vset.pattern.permute.xlu0 0
      %562 = vperm.xlu0 %561, %v540
      %v563 = vpop.permute.xlu0 %562
      %566 = vset.pattern.permute.xlu0 0
      %567 = vperm.xlu0 %566, %v541
      %v568 = vpop.permute.xlu0 %567
      %571 = vset.pattern.permute.xlu0 0
      %572 = vperm.xlu0 %571, %v542
      %v573 = vpop.permute.xlu0 %572
      %576 = vset.pattern.permute.xlu0 0
      %577 = vperm.xlu0 %576, %v543
      %v578 = vpop.permute.xlu0 %577
      %581 = vset.pattern.permute.xlu0 0
      %582 = vperm.xlu0 %581, %v544
      %v583 = vpop.permute.xlu0 %582
      %v587 = vlaneseq
      %v588 = vshrl.u32 %v587, 7
      %v589 = vsub.s32 0, %v588
      %v590 = vrot.slane %v535, %v589
      %v591 = vlaneseq
      %v592 = vshrl.u32 %v591, 7
      %v593 = vsub.s32 4, %v592
      %v594 = vrot.slane %v535, %v593
      %v595 = vlaneseq
      %v596 = vshrl.u32 %v595, 7
      %v597 = vsub.s32 0, %v596
      %v598 = vrot.slane %v536, %v597
      %v599 = vlaneseq
      %v600 = vshrl.u32 %v599, 7
      %v601 = vsub.s32 4, %v600
      %v602 = vrot.slane %v536, %v601
      %v607 = vlaneseq
      %v608 = vshrl.u32 %v607, 7
      %v609 = vsub.s32 0, %v608
      %v610 = vrot.slane %v590, %v609
      %v611 = vlaneseq
      %v612 = vshrl.u32 %v611, 7
      %v613 = vsub.s32 0, %v612
      %v614 = vrot.slane %v594, %v613
      %v615 = vlaneseq
      %v616 = vshrl.u32 %v615, 7
      %v617 = vsub.s32 0, %v616
      %v618 = vrot.slane %v598, %v617
      %v619 = vlaneseq
      %v620 = vshrl.u32 %v619, 7
      %v621 = vsub.s32 0, %v620
      %v622 = vrot.slane %v602, %v621
      %v623 = vmul.f32 %v548, %v610
      %v624 = vmul.f32 %v548, %v614
      %v625 = vmul.f32 %v548, %v618
      %v626 = vmul.f32 %v548, %v622
      %v627 = vmul.f32 %v553, %v610
      %v628 = vmul.f32 %v553, %v614
      %v629 = vmul.f32 %v553, %v618
      %v630 = vmul.f32 %v553, %v622
      %v631 = vmul.f32 %v558, %v610
      %v632 = vmul.f32 %v558, %v614
      %v633 = vmul.f32 %v558, %v618
      %v634 = vmul.f32 %v558, %v622
      %v635 = vmul.f32 %v563, %v610
      %v636 = vmul.f32 %v563, %v614
      %v637 = vmul.f32 %v563, %v618
      %v638 = vmul.f32 %v563, %v622
      %v639 = vmul.f32 %v568, %v610
      %v640 = vmul.f32 %v568, %v614
      %v641 = vmul.f32 %v568, %v618
      %v642 = vmul.f32 %v568, %v622
      %v643 = vmul.f32 %v573, %v610
      %v644 = vmul.f32 %v573, %v614
      %v645 = vmul.f32 %v573, %v618
      %v646 = vmul.f32 %v573, %v622
      %v647 = vmul.f32 %v578, %v610
      %v648 = vmul.f32 %v578, %v614
      %v649 = vmul.f32 %v578, %v618
      %v650 = vmul.f32 %v578, %v622
      %v651 = vmul.f32 %v583, %v610
      %v652 = vmul.f32 %v583, %v614
      %v653 = vmul.f32 %v583, %v618
      %v654 = vmul.f32 %v583, %v622
      %655 = vset.pattern.permute.xlu0 1
      %656 = vperm.xlu0 %655, %v537
      %v657 = vpop.permute.xlu0 %656
      %659 = vset.pattern.permute.xlu0 1
      %660 = vperm.xlu0 %659, %v538
      %v661 = vpop.permute.xlu0 %660
      %663 = vset.pattern.permute.xlu0 1
      %664 = vperm.xlu0 %663, %v539
      %v665 = vpop.permute.xlu0 %664
      %667 = vset.pattern.permute.xlu0 1
      %668 = vperm.xlu0 %667, %v540
      %v669 = vpop.permute.xlu0 %668
      %671 = vset.pattern.permute.xlu0 1
      %672 = vperm.xlu0 %671, %v541
      %v673 = vpop.permute.xlu0 %672
      %675 = vset.pattern.permute.xlu0 1
      %676 = vperm.xlu0 %675, %v542
      %v677 = vpop.permute.xlu0 %676
      %679 = vset.pattern.permute.xlu0 1
      %680 = vperm.xlu0 %679, %v543
      %v681 = vpop.permute.xlu0 %680
      %683 = vset.pattern.permute.xlu0 1
      %684 = vperm.xlu0 %683, %v544
      %v685 = vpop.permute.xlu0 %684
      %v687 = vlaneseq
      %v688 = vshrl.u32 %v687, 7
      %v689 = vsub.s32 1, %v688
      %v690 = vrot.slane %v535, %v689
      %v691 = vlaneseq
      %v692 = vshrl.u32 %v691, 7
      %v693 = vsub.s32 5, %v692
      %v694 = vrot.slane %v535, %v693
      %v695 = vlaneseq
      %v696 = vshrl.u32 %v695, 7
      %v697 = vsub.s32 1, %v696
      %v698 = vrot.slane %v536, %v697
      %v699 = vlaneseq
      %v700 = vshrl.u32 %v699, 7
      %v701 = vsub.s32 5, %v700
      %v702 = vrot.slane %v536, %v701
      %v707 = vlaneseq
      %v708 = vshrl.u32 %v707, 7
      %v709 = vsub.s32 1, %v708
      %v710 = vrot.slane %v690, %v709
      %v711 = vlaneseq
      %v712 = vshrl.u32 %v711, 7
      %v713 = vsub.s32 1, %v712
      %v714 = vrot.slane %v694, %v713
      %v715 = vlaneseq
      %v716 = vshrl.u32 %v715, 7
      %v717 = vsub.s32 1, %v716
      %v718 = vrot.slane %v698, %v717
      %v719 = vlaneseq
      %v720 = vshrl.u32 %v719, 7
      %v721 = vsub.s32 1, %v720
      %v722 = vrot.slane %v702, %v721
      %v723 = vmul.f32 %v657, %v710
      %v724 = vmul.f32 %v657, %v714
      %v725 = vmul.f32 %v657, %v718
      %v726 = vmul.f32 %v657, %v722
      %v727 = vmul.f32 %v661, %v710
      %v728 = vmul.f32 %v661, %v714
      %v729 = vmul.f32 %v661, %v718
      %v730 = vmul.f32 %v661, %v722
      %v731 = vmul.f32 %v665, %v710
      %v732 = vmul.f32 %v665, %v714
      %v733 = vmul.f32 %v665, %v718
      %v734 = vmul.f32 %v665, %v722
      %v735 = vmul.f32 %v669, %v710
      %v736 = vmul.f32 %v669, %v714
      %v737 = vmul.f32 %v669, %v718
      %v738 = vmul.f32 %v669, %v722
      %v739 = vmul.f32 %v673, %v710
      %v740 = vmul.f32 %v673, %v714
      %v741 = vmul.f32 %v673, %v718
      %v742 = vmul.f32 %v673, %v722
      %v743 = vmul.f32 %v677, %v710
      %v744 = vmul.f32 %v677, %v714
      %v745 = vmul.f32 %v677, %v718
      %v746 = vmul.f32 %v677, %v722
      %v747 = vmul.f32 %v681, %v710
      %v748 = vmul.f32 %v681, %v714
      %v749 = vmul.f32 %v681, %v718
      %v750 = vmul.f32 %v681, %v722
      %v751 = vmul.f32 %v685, %v710
      %v752 = vmul.f32 %v685, %v714
      %v753 = vmul.f32 %v685, %v718
      %v754 = vmul.f32 %v685, %v722
      %v755 = vadd.f32 %v623, %v723
      %v756 = vadd.f32 %v624, %v724
      %v757 = vadd.f32 %v625, %v725
      %v758 = vadd.f32 %v626, %v726
      %v759 = vadd.f32 %v627, %v727
      %v760 = vadd.f32 %v628, %v728
      %v761 = vadd.f32 %v629, %v729
      %v762 = vadd.f32 %v630, %v730
      %v763 = vadd.f32 %v631, %v731
      %v764 = vadd.f32 %v632, %v732
      %v765 = vadd.f32 %v633, %v733
      %v766 = vadd.f32 %v634, %v734
      %v767 = vadd.f32 %v635, %v735
      %v768 = vadd.f32 %v636, %v736
      %v769 = vadd.f32 %v637, %v737
      %v770 = vadd.f32 %v638, %v738
      %v771 = vadd.f32 %v639, %v739
      %v772 = vadd.f32 %v640, %v740
      %v773 = vadd.f32 %v641, %v741
      %v774 = vadd.f32 %v642, %v742
      %v775 = vadd.f32 %v643, %v743
      %v776 = vadd.f32 %v644, %v744
      %v777 = vadd.f32 %v645, %v745
      %v778 = vadd.f32 %v646, %v746
      %v779 = vadd.f32 %v647, %v747
      %v780 = vadd.f32 %v648, %v748
      %v781 = vadd.f32 %v649, %v749
      %v782 = vadd.f32 %v650, %v750
      %v783 = vadd.f32 %v651, %v751
      %v784 = vadd.f32 %v652, %v752
      %v785 = vadd.f32 %v653, %v753
      %v786 = vadd.f32 %v654, %v754
      %787 = vset.pattern.permute.xlu0 2
      %788 = vperm.xlu0 %787, %v537
      %v789 = vpop.permute.xlu0 %788
      %791 = vset.pattern.permute.xlu0 2
      %792 = vperm.xlu0 %791, %v538
      %v793 = vpop.permute.xlu0 %792
      %795 = vset.pattern.permute.xlu0 2
      %796 = vperm.xlu0 %795, %v539
      %v797 = vpop.permute.xlu0 %796
      %799 = vset.pattern.permute.xlu0 2
      %800 = vperm.xlu0 %799, %v540
      %v801 = vpop.permute.xlu0 %800
      %803 = vset.pattern.permute.xlu0 2
      %804 = vperm.xlu0 %803, %v541
      %v805 = vpop.permute.xlu0 %804
      %807 = vset.pattern.permute.xlu0 2
      %808 = vperm.xlu0 %807, %v542
      %v809 = vpop.permute.xlu0 %808
      %811 = vset.pattern.permute.xlu0 2
      %812 = vperm.xlu0 %811, %v543
      %v813 = vpop.permute.xlu0 %812
      %815 = vset.pattern.permute.xlu0 2
      %816 = vperm.xlu0 %815, %v544
      %v817 = vpop.permute.xlu0 %816
      %v819 = vlaneseq
      %v820 = vshrl.u32 %v819, 7
      %v821 = vsub.s32 2, %v820
      %v822 = vrot.slane %v535, %v821
      %v823 = vlaneseq
      %v824 = vshrl.u32 %v823, 7
      %v825 = vsub.s32 6, %v824
      %v826 = vrot.slane %v535, %v825
      %v827 = vlaneseq
      %v828 = vshrl.u32 %v827, 7
      %v829 = vsub.s32 2, %v828
      %v830 = vrot.slane %v536, %v829
      %v831 = vlaneseq
      %v832 = vshrl.u32 %v831, 7
      %v833 = vsub.s32 6, %v832
      %v834 = vrot.slane %v536, %v833
      %v839 = vlaneseq
      %v840 = vshrl.u32 %v839, 7
      %v841 = vsub.s32 2, %v840
      %v842 = vrot.slane %v822, %v841
      %v843 = vlaneseq
      %v844 = vshrl.u32 %v843, 7
      %v845 = vsub.s32 2, %v844
      %v846 = vrot.slane %v826, %v845
      %v847 = vlaneseq
      %v848 = vshrl.u32 %v847, 7
      %v849 = vsub.s32 2, %v848
      %v850 = vrot.slane %v830, %v849
      %v851 = vlaneseq
      %v852 = vshrl.u32 %v851, 7
      %v853 = vsub.s32 2, %v852
      %v854 = vrot.slane %v834, %v853
      %v855 = vmul.f32 %v789, %v842
      %v856 = vmul.f32 %v789, %v846
      %v857 = vmul.f32 %v789, %v850
      %v858 = vmul.f32 %v789, %v854
      %v859 = vmul.f32 %v793, %v842
      %v860 = vmul.f32 %v793, %v846
      %v861 = vmul.f32 %v793, %v850
      %v862 = vmul.f32 %v793, %v854
      %v863 = vmul.f32 %v797, %v842
      %v864 = vmul.f32 %v797, %v846
      %v865 = vmul.f32 %v797, %v850
      %v866 = vmul.f32 %v797, %v854
      %v867 = vmul.f32 %v801, %v842
      %v868 = vmul.f32 %v801, %v846
      %v869 = vmul.f32 %v801, %v850
      %v870 = vmul.f32 %v801, %v854
      %v871 = vmul.f32 %v805, %v842
      %v872 = vmul.f32 %v805, %v846
      %v873 = vmul.f32 %v805, %v850
      %v874 = vmul.f32 %v805, %v854
      %v875 = vmul.f32 %v809, %v842
      %v876 = vmul.f32 %v809, %v846
      %v877 = vmul.f32 %v809, %v850
      %v878 = vmul.f32 %v809, %v854
      %v879 = vmul.f32 %v813, %v842
      %v880 = vmul.f32 %v813, %v846
      %v881 = vmul.f32 %v813, %v850
      %v882 = vmul.f32 %v813, %v854
      %v883 = vmul.f32 %v817, %v842
      %v884 = vmul.f32 %v817, %v846
      %v885 = vmul.f32 %v817, %v850
      %v886 = vmul.f32 %v817, %v854
      %v887 = vadd.f32 %v755, %v855
      %v888 = vadd.f32 %v756, %v856
      %v889 = vadd.f32 %v757, %v857
      %v890 = vadd.f32 %v758, %v858
      %v891 = vadd.f32 %v759, %v859
      %v892 = vadd.f32 %v760, %v860
      %v893 = vadd.f32 %v761, %v861
      %v894 = vadd.f32 %v762, %v862
      %v895 = vadd.f32 %v763, %v863
      %v896 = vadd.f32 %v764, %v864
      %v897 = vadd.f32 %v765, %v865
      %v898 = vadd.f32 %v766, %v866
      %v899 = vadd.f32 %v767, %v867
      %v900 = vadd.f32 %v768, %v868
      %v901 = vadd.f32 %v769, %v869
      %v902 = vadd.f32 %v770, %v870
      %v903 = vadd.f32 %v771, %v871
      %v904 = vadd.f32 %v772, %v872
      %v905 = vadd.f32 %v773, %v873
      %v906 = vadd.f32 %v774, %v874
      %v907 = vadd.f32 %v775, %v875
      %v908 = vadd.f32 %v776, %v876
      %v909 = vadd.f32 %v777, %v877
      %v910 = vadd.f32 %v778, %v878
      %v911 = vadd.f32 %v779, %v879
      %v912 = vadd.f32 %v780, %v880
      %v913 = vadd.f32 %v781, %v881
      %v914 = vadd.f32 %v782, %v882
      %v915 = vadd.f32 %v783, %v883
      %v916 = vadd.f32 %v784, %v884
      %v917 = vadd.f32 %v785, %v885
      %v918 = vadd.f32 %v786, %v886
      %v919 = vld [vmem:[%s2] sm:$0xff]
      %v920 = vld [vmem:[%s2 + $0x8] sm:$0xff]
      %v921 = vld [vmem:[%s2 + $0x10] sm:$0xff]
      %v922 = vld [vmem:[%s2 + $0x18] sm:$0xff]
      %v923 = vld [vmem:[%s2 + $0x20] sm:$0xff]
      %v924 = vld [vmem:[%s2 + $0x28] sm:$0xff]
      %v925 = vld [vmem:[%s2 + $0x30] sm:$0xff]
      %v926 = vld [vmem:[%s2 + $0x38] sm:$0xff]
      %928 = vset.pattern.permute.xlu0 0
      %929 = vperm.xlu0 %928, %v919
      %v930 = vpop.permute.xlu0 %929
      %933 = vset.pattern.permute.xlu0 0
      %934 = vperm.xlu0 %933, %v920
      %v935 = vpop.permute.xlu0 %934
      %938 = vset.pattern.permute.xlu0 0
      %939 = vperm.xlu0 %938, %v921
      %v940 = vpop.permute.xlu0 %939
      %943 = vset.pattern.permute.xlu0 0
      %944 = vperm.xlu0 %943, %v922
      %v945 = vpop.permute.xlu0 %944
      %948 = vset.pattern.permute.xlu0 0
      %949 = vperm.xlu0 %948, %v923
      %v950 = vpop.permute.xlu0 %949
      %953 = vset.pattern.permute.xlu0 0
      %954 = vperm.xlu0 %953, %v924
      %v955 = vpop.permute.xlu0 %954
      %958 = vset.pattern.permute.xlu0 0
      %959 = vperm.xlu0 %958, %v925
      %v960 = vpop.permute.xlu0 %959
      %963 = vset.pattern.permute.xlu0 0
      %964 = vperm.xlu0 %963, %v926
      %v965 = vpop.permute.xlu0 %964
      %v967 = vadd.f32 %v887, %v930
      %v968 = vadd.f32 %v888, %v930
      %v969 = vadd.f32 %v889, %v930
      %v970 = vadd.f32 %v890, %v930
      %v971 = vadd.f32 %v891, %v935
      %v972 = vadd.f32 %v892, %v935
      %v973 = vadd.f32 %v893, %v935
      %v974 = vadd.f32 %v894, %v935
      %v975 = vadd.f32 %v895, %v940
      %v976 = vadd.f32 %v896, %v940
      %v977 = vadd.f32 %v897, %v940
      %v978 = vadd.f32 %v898, %v940
      %v979 = vadd.f32 %v899, %v945
      %v980 = vadd.f32 %v900, %v945
      %v981 = vadd.f32 %v901, %v945
      %v982 = vadd.f32 %v902, %v945
      %v983 = vadd.f32 %v903, %v950
      %v984 = vadd.f32 %v904, %v950
      %v985 = vadd.f32 %v905, %v950
      %v986 = vadd.f32 %v906, %v950
      %v987 = vadd.f32 %v907, %v955
      %v988 = vadd.f32 %v908, %v955
      %v989 = vadd.f32 %v909, %v955
      %v990 = vadd.f32 %v910, %v955
      %v991 = vadd.f32 %v911, %v960
      %v992 = vadd.f32 %v912, %v960
      %v993 = vadd.f32 %v913, %v960
      %v994 = vadd.f32 %v914, %v960
      %v995 = vadd.f32 %v915, %v965
      %v996 = vadd.f32 %v916, %v965
      %v997 = vadd.f32 %v917, %v965
      %v998 = vadd.f32 %v918, %v965
      %v999 = vmax.f32 %v967, 0.0
      %v1000 = vmax.f32 %v968, 0.0
      %v1001 = vmax.f32 %v969, 0.0
      %v1002 = vmax.f32 %v970, 0.0
      %v1003 = vmax.f32 %v971, 0.0
      %v1004 = vmax.f32 %v972, 0.0
      %v1005 = vmax.f32 %v973, 0.0
      %v1006 = vmax.f32 %v974, 0.0
      %v1007 = vmax.f32 %v975, 0.0
      %v1008 = vmax.f32 %v976, 0.0
      %v1009 = vmax.f32 %v977, 0.0
      %v1010 = vmax.f32 %v978, 0.0
      %v1011 = vmax.f32 %v979, 0.0
      %v1012 = vmax.f32 %v980, 0.0
      %v1013 = vmax.f32 %v981, 0.0
      %v1014 = vmax.f32 %v982, 0.0
      %v1015 = vmax.f32 %v983, 0.0
      %v1016 = vmax.f32 %v984, 0.0
      %v1017 = vmax.f32 %v985, 0.0
      %v1018 = vmax.f32 %v986, 0.0
      %v1019 = vmax.f32 %v987, 0.0
      %v1020 = vmax.f32 %v988, 0.0
      %v1021 = vmax.f32 %v989, 0.0
      %v1022 = vmax.f32 %v990, 0.0
      %v1023 = vmax.f32 %v991, 0.0
      %v1024 = vmax.f32 %v992, 0.0
      %v1025 = vmax.f32 %v993, 0.0
      %v1026 = vmax.f32 %v994, 0.0
      %v1027 = vmax.f32 %v995, 0.0
      %v1028 = vmax.f32 %v996, 0.0
      %v1029 = vmax.f32 %v997, 0.0
      %v1030 = vmax.f32 %v998, 0.0
      %v1031 = vld [vmem:[%s3] sm:$0xf]
      %v1032 = vld [vmem:[%s3 + $0x4] sm:$0xf]
      %v1033 = vld [vmem:[%s3 + $0x8] sm:$0xf]
      %v1034 = vld [vmem:[%s3 + $0xc] sm:$0xf]
      %v1035 = vld [vmem:[%s3 + $0x10] sm:$0xf]
      %v1036 = vld [vmem:[%s3 + $0x14] sm:$0xf]
      %v1037 = vld [vmem:[%s3 + $0x18] sm:$0xf]
      %v1038 = vld [vmem:[%s3 + $0x1c] sm:$0xf]
      %v1039 = vpack.c.bf16 %v1003, %v999
      %v1040 = vpack.c.bf16 %v1004, %v1000
      %v1041 = vpack.c.bf16 %v1005, %v1001
      %v1042 = vpack.c.bf16 %v1006, %v1002
      %v1043 = vpack.c.bf16 %v1011, %v1007
      %v1044 = vpack.c.bf16 %v1012, %v1008
      %v1045 = vpack.c.bf16 %v1013, %v1009
      %v1046 = vpack.c.bf16 %v1014, %v1010
      %v1047 = vpack.c.bf16 %v1019, %v1015
      %v1048 = vpack.c.bf16 %v1020, %v1016
      %v1049 = vpack.c.bf16 %v1021, %v1017
      %v1050 = vpack.c.bf16 %v1022, %v1018
      %v1051 = vpack.c.bf16 %v1027, %v1023
      %v1052 = vpack.c.bf16 %v1028, %v1024
      %v1053 = vpack.c.bf16 %v1029, %v1025
      %v1054 = vpack.c.bf16 %v1030, %v1026
      %v1055 = vld [vmem:[%s4] sm:$0xff]
      %v1056 = vld [vmem:[%s4 + $0x8] sm:$0xff]
      %v1057 = vld [vmem:[%s4 + $0x10] sm:$0xff]
      %v1058 = vld [vmem:[%s4 + $0x18] sm:$0xff]
      %v1059 = vld [vmem:[%s4 + $0x20] sm:$0xff]
      %v1060 = vld [vmem:[%s4 + $0x28] sm:$0xff]
      %v1061 = vld [vmem:[%s4 + $0x30] sm:$0xff]
      %v1062 = vld [vmem:[%s4 + $0x38] sm:$0xff]
      %1064 = vset.pattern.permute.xlu0 0
      %1065 = vperm.xlu0 %1064, %v1055
      %v1066 = vpop.permute.xlu0 %1065
      %1069 = vset.pattern.permute.xlu0 0
      %1070 = vperm.xlu0 %1069, %v1056
      %v1071 = vpop.permute.xlu0 %1070
      %1074 = vset.pattern.permute.xlu0 0
      %1075 = vperm.xlu0 %1074, %v1057
      %v1076 = vpop.permute.xlu0 %1075
      %1079 = vset.pattern.permute.xlu0 0
      %1080 = vperm.xlu0 %1079, %v1058
      %v1081 = vpop.permute.xlu0 %1080
      %1084 = vset.pattern.permute.xlu0 0
      %1085 = vperm.xlu0 %1084, %v1059
      %v1086 = vpop.permute.xlu0 %1085
      %1089 = vset.pattern.permute.xlu0 0
      %1090 = vperm.xlu0 %1089, %v1060
      %v1091 = vpop.permute.xlu0 %1090
      %1094 = vset.pattern.permute.xlu0 0
      %1095 = vperm.xlu0 %1094, %v1061
      %v1096 = vpop.permute.xlu0 %1095
      %1099 = vset.pattern.permute.xlu0 0
      %1100 = vperm.xlu0 %1099, %v1062
      %v1101 = vpop.permute.xlu0 %1100
      %v1111 = vunpack.c.l.b16 %v1031
      %v1112 = vunpack.c.l.b16 %v1032
      %v1113 = vunpack.c.l.b16 %v1033
      %v1114 = vunpack.c.l.b16 %v1034
      %v1115 = vunpack.c.l.b16 %v1035
      %v1116 = vunpack.c.l.b16 %v1036
      %v1117 = vunpack.c.l.b16 %v1037
      %v1118 = vunpack.c.l.b16 %v1038
      %v1119 = vpack.c.b16 %v1112, %v1111
      %v1120 = vpack.c.b16 %v1114, %v1113
      %v1121 = vpack.c.b16 %v1116, %v1115
      %v1122 = vpack.c.b16 %v1118, %v1117
      %vm1123 = vcmask 523264
      %v1125 = vsel %vm1123, %v1119, 0
      %v1128 = vsel %vm1123, %v1120, 0
      %v1131 = vsel %vm1123, %v1121, 0
      %v1134 = vsel %vm1123, %v1122, 0
      %1136 = vmatprep.subr.bf16.mxu0 %v1040
      %1137 = vmatpush1.bf16.msra.mxu0 %v1039
      %1138 = vmatprep.subr.bf16.mxu0 %v1044
      %1139 = vmatpush1.bf16.msra.mxu0 %v1043
      %1140 = vmatprep.subr.bf16.mxu0 %v1048
      %1141 = vmatpush1.bf16.msra.mxu0 %v1047
      %1142 = vmatprep.subr.bf16.mxu0 %v1052
      %1143 = vmatpush1.bf16.msra.mxu0 %v1051
      %1144 = vmatprep.subr.bf16.mxu0 0
      %1145 = vmatpush1.bf16.msra.mxu0 0
      %1146 = vmatprep.subr.bf16.mxu0 0
      %1147 = vmatpush1.bf16.msra.mxu0 0
      %1148 = vmatprep.subr.bf16.mxu0 0
      %1149 = vmatpush1.bf16.msra.mxu0 0
      %1150 = vmatprep.subr.bf16.mxu0 0
      %1151 = vmatpush1.bf16.msra.mxu0 0
      %1152 = vmatprep.subr.bf16.mxu0 0
      %1153 = vmatpush1.bf16.msra.mxu0 0
      %1154 = vmatprep.subr.bf16.mxu0 0
      %1155 = vmatpush1.bf16.msra.mxu0 0
      %1156 = vmatprep.subr.bf16.mxu0 0
      %1157 = vmatpush1.bf16.msra.mxu0 0
      %1158 = vmatprep.subr.bf16.mxu0 0
      %1159 = vmatpush1.bf16.msra.mxu0 0
      %1160 = vmatprep.subr.bf16.mxu0 0
      %1161 = vmatpush1.bf16.msra.mxu0 0
      %1162 = vmatprep.subr.bf16.mxu0 0
      %1163 = vmatpush1.bf16.msra.mxu0 0
      %1164 = vmatprep.subr.bf16.mxu0 0
      %1165 = vmatpush1.bf16.msra.mxu0 0
      %1166 = vmatprep.subr.bf16.mxu0 0
      %1167 = vmatpush1.bf16.msra.mxu0 0
      %1168 = vmatprep.mubr.bf16.mxu0 0
      %1169 = vmatmul.mubr.bf16.gmra.mrb[0].mxu0 %v1125
      %v1170 = vpop.f32.mrb[0].mxu0
      %v1171 = vadd.f32 %v1066, %v1170
      %v1172 = vpop.f32.mrb[0].mxu0
      %v1173 = vadd.f32 %v1066, %v1172
      %v1174 = vpop.f32.mrb[0].mxu0
      %v1175 = vadd.f32 %v1071, %v1174
      %v1176 = vpop.f32.mrb[0].mxu0
      %v1177 = vadd.f32 %v1071, %v1176
      %1178 = vmatprep.mubr.bf16.mxu0 0
      %1179 = vmatmul.mubr.bf16.gmra.mrb[0].mxu0 %v1128
      %v1180 = vpop.f32.mrb[0].mxu0
      %v1181 = vadd.f32 %v1076, %v1180
      %v1182 = vpop.f32.mrb[0].mxu0
      %v1183 = vadd.f32 %v1076, %v1182
      %v1184 = vpop.f32.mrb[0].mxu0
      %v1185 = vadd.f32 %v1081, %v1184
      %v1186 = vpop.f32.mrb[0].mxu0
      %v1187 = vadd.f32 %v1081, %v1186
      %1188 = vmatprep.mubr.bf16.mxu0 0
      %1189 = vmatmul.mubr.bf16.gmra.mrb[0].mxu0 %v1131
      %v1190 = vpop.f32.mrb[0].mxu0
      %v1191 = vadd.f32 %v1086, %v1190
      %v1192 = vpop.f32.mrb[0].mxu0
      %v1193 = vadd.f32 %v1086, %v1192
      %v1194 = vpop.f32.mrb[0].mxu0
      %v1195 = vadd.f32 %v1091, %v1194
      %v1196 = vpop.f32.mrb[0].mxu0
      %v1197 = vadd.f32 %v1091, %v1196
      %1198 = vmatprep.mubr.bf16.mxu0 0
      %1199 = vmatmul.mubr.bf16.gmra.mrb[0].mxu0 %v1134
      %v1200 = vpop.f32.mrb[0].mxu0
      %v1201 = vadd.f32 %v1096, %v1200
      %v1202 = vpop.f32.mrb[0].mxu0
      %v1203 = vadd.f32 %v1096, %v1202
      %v1204 = vpop.f32.mrb[0].mxu0
      %v1205 = vadd.f32 %v1101, %v1204
      %v1206 = vpop.f32.mrb[0].mxu0
      %v1207 = vadd.f32 %v1101, %v1206
      %1208 = vdwg.mxu0
      %1209 = vmatprep.subr.bf16.mxu0 %v1042
      %1210 = vmatpush1.bf16.msra.mxu0 %v1041
      %1211 = vmatprep.subr.bf16.mxu0 %v1046
      %1212 = vmatpush1.bf16.msra.mxu0 %v1045
      %1213 = vmatprep.subr.bf16.mxu0 %v1050
      %1214 = vmatpush1.bf16.msra.mxu0 %v1049
      %1215 = vmatprep.subr.bf16.mxu0 %v1054
      %1216 = vmatpush1.bf16.msra.mxu0 %v1053
      %1217 = vmatprep.subr.bf16.mxu0 0
      %1218 = vmatpush1.bf16.msra.mxu0 0
      %1219 = vmatprep.subr.bf16.mxu0 0
      %1220 = vmatpush1.bf16.msra.mxu0 0
      %1221 = vmatprep.subr.bf16.mxu0 0
      %1222 = vmatpush1.bf16.msra.mxu0 0
      %1223 = vmatprep.subr.bf16.mxu0 0
      %1224 = vmatpush1.bf16.msra.mxu0 0
      %1225 = vmatprep.subr.bf16.mxu0 0
      %1226 = vmatpush1.bf16.msra.mxu0 0
      %1227 = vmatprep.subr.bf16.mxu0 0
      %1228 = vmatpush1.bf16.msra.mxu0 0
      %1229 = vmatprep.subr.bf16.mxu0 0
      %1230 = vmatpush1.bf16.msra.mxu0 0
      %1231 = vmatprep.subr.bf16.mxu0 0
      %1232 = vmatpush1.bf16.msra.mxu0 0
      %1233 = vmatprep.subr.bf16.mxu0 0
      %1234 = vmatpush1.bf16.msra.mxu0 0
      %1235 = vmatprep.subr.bf16.mxu0 0
      %1236 = vmatpush1.bf16.msra.mxu0 0
      %1237 = vmatprep.subr.bf16.mxu0 0
      %1238 = vmatpush1.bf16.msra.mxu0 0
      %1239 = vmatprep.subr.bf16.mxu0 0
      %1240 = vmatpush1.bf16.msra.mxu0 0
      %1241 = vmatprep.mubr.bf16.mxu0 0
      %1242 = vmatmul.mubr.bf16.gmra.mrb[0].mxu0 %v1125
      %v1243 = vpop.f32.mrb[0].mxu0
      %v1244 = vadd.f32 %v1066, %v1243
      %v1245 = vpop.f32.mrb[0].mxu0
      %v1246 = vadd.f32 %v1066, %v1245
      %v1247 = vpop.f32.mrb[0].mxu0
      %v1248 = vadd.f32 %v1071, %v1247
      %v1249 = vpop.f32.mrb[0].mxu0
      %v1250 = vadd.f32 %v1071, %v1249
      %1251 = vmatprep.mubr.bf16.mxu0 0
      %1252 = vmatmul.mubr.bf16.gmra.mrb[0].mxu0 %v1128
      %v1253 = vpop.f32.mrb[0].mxu0
      %v1254 = vadd.f32 %v1076, %v1253
      %v1255 = vpop.f32.mrb[0].mxu0
      %v1256 = vadd.f32 %v1076, %v1255
      %v1257 = vpop.f32.mrb[0].mxu0
      %v1258 = vadd.f32 %v1081, %v1257
      %v1259 = vpop.f32.mrb[0].mxu0
      %v1260 = vadd.f32 %v1081, %v1259
      %1261 = vmatprep.mubr.bf16.mxu0 0
      %1262 = vmatmul.mubr.bf16.gmra.mrb[0].mxu0 %v1131
      %v1263 = vpop.f32.mrb[0].mxu0
      %v1264 = vadd.f32 %v1086, %v1263
      %v1265 = vpop.f32.mrb[0].mxu0
      %v1266 = vadd.f32 %v1086, %v1265
      %v1267 = vpop.f32.mrb[0].mxu0
      %v1268 = vadd.f32 %v1091, %v1267
      %v1269 = vpop.f32.mrb[0].mxu0
      %v1270 = vadd.f32 %v1091, %v1269
      %1271 = vmatprep.mubr.bf16.mxu0 0
      %1272 = vmatmul.mubr.bf16.gmra.mrb[0].mxu0 %v1134
      %v1273 = vpop.f32.mrb[0].mxu0
      %v1274 = vadd.f32 %v1096, %v1273
      %v1275 = vpop.f32.mrb[0].mxu0
      %v1276 = vadd.f32 %v1096, %v1275
      %v1277 = vpop.f32.mrb[0].mxu0
      %v1278 = vadd.f32 %v1101, %v1277
      %v1279 = vpop.f32.mrb[0].mxu0
      %v1280 = vadd.f32 %v1101, %v1279
      %1281 = vdwg.mxu0
      %v1282 = vmax.f32 %v1171, 0.0
      %v1283 = vmax.f32 %v1173, 0.0
      %v1284 = vmax.f32 %v1244, 0.0
      %v1285 = vmax.f32 %v1246, 0.0
      %v1286 = vmax.f32 %v1175, 0.0
      %v1287 = vmax.f32 %v1177, 0.0
      %v1288 = vmax.f32 %v1248, 0.0
      %v1289 = vmax.f32 %v1250, 0.0
      %v1290 = vmax.f32 %v1181, 0.0
      %v1291 = vmax.f32 %v1183, 0.0
      %v1292 = vmax.f32 %v1254, 0.0
      %v1293 = vmax.f32 %v1256, 0.0
      %v1294 = vmax.f32 %v1185, 0.0
      %v1295 = vmax.f32 %v1187, 0.0
      %v1296 = vmax.f32 %v1258, 0.0
      %v1297 = vmax.f32 %v1260, 0.0
      %v1298 = vmax.f32 %v1191, 0.0
      %v1299 = vmax.f32 %v1193, 0.0
      %v1300 = vmax.f32 %v1264, 0.0
      %v1301 = vmax.f32 %v1266, 0.0
      %v1302 = vmax.f32 %v1195, 0.0
      %v1303 = vmax.f32 %v1197, 0.0
      %v1304 = vmax.f32 %v1268, 0.0
      %v1305 = vmax.f32 %v1270, 0.0
      %v1306 = vmax.f32 %v1201, 0.0
      %v1307 = vmax.f32 %v1203, 0.0
      %v1308 = vmax.f32 %v1274, 0.0
      %v1309 = vmax.f32 %v1276, 0.0
      %v1310 = vmax.f32 %v1205, 0.0
      %v1311 = vmax.f32 %v1207, 0.0
      %v1312 = vmax.f32 %v1278, 0.0
      %v1313 = vmax.f32 %v1280, 0.0
      %v1314 = vld [vmem:[%s5] sm:$0xf]
      %v1315 = vld [vmem:[%s5 + $0x4] sm:$0xf]
      %v1316 = vld [vmem:[%s5 + $0x8] sm:$0xf]
      %v1317 = vld [vmem:[%s5 + $0xc] sm:$0xf]
      %v1318 = vld [vmem:[%s5 + $0x10] sm:$0xf]
      %v1319 = vld [vmem:[%s5 + $0x14] sm:$0xf]
      %v1320 = vld [vmem:[%s5 + $0x18] sm:$0xf]
      %v1321 = vld [vmem:[%s5 + $0x1c] sm:$0xf]
      %v1322 = vpack.c.bf16 %v1286, %v1282
      %v1323 = vpack.c.bf16 %v1287, %v1283
      %v1324 = vpack.c.bf16 %v1288, %v1284
      %v1325 = vpack.c.bf16 %v1289, %v1285
      %v1326 = vpack.c.bf16 %v1294, %v1290
      %v1327 = vpack.c.bf16 %v1295, %v1291
      %v1328 = vpack.c.bf16 %v1296, %v1292
      %v1329 = vpack.c.bf16 %v1297, %v1293
      %v1330 = vpack.c.bf16 %v1302, %v1298
      %v1331 = vpack.c.bf16 %v1303, %v1299
      %v1332 = vpack.c.bf16 %v1304, %v1300
      %v1333 = vpack.c.bf16 %v1305, %v1301
      %v1334 = vpack.c.bf16 %v1310, %v1306
      %v1335 = vpack.c.bf16 %v1311, %v1307
      %v1336 = vpack.c.bf16 %v1312, %v1308
      %v1337 = vpack.c.bf16 %v1313, %v1309
      %v1338 = vld [vmem:[%s6] sm:$0xff]
      %v1339 = vld [vmem:[%s6 + $0x8] sm:$0xff]
      %v1340 = vld [vmem:[%s6 + $0x10] sm:$0xff]
      %v1341 = vld [vmem:[%s6 + $0x18] sm:$0xff]
      %v1342 = vld [vmem:[%s6 + $0x20] sm:$0xff]
      %v1343 = vld [vmem:[%s6 + $0x28] sm:$0xff]
      %v1344 = vld [vmem:[%s6 + $0x30] sm:$0xff]
      %v1345 = vld [vmem:[%s6 + $0x38] sm:$0xff]
      %1347 = vset.pattern.permute.xlu0 0
      %1348 = vperm.xlu0 %1347, %v1338
      %v1349 = vpop.permute.xlu0 %1348
      %1352 = vset.pattern.permute.xlu0 0
      %1353 = vperm.xlu0 %1352, %v1339
      %v1354 = vpop.permute.xlu0 %1353
      %1357 = vset.pattern.permute.xlu0 0
      %1358 = vperm.xlu0 %1357, %v1340
      %v1359 = vpop.permute.xlu0 %1358
      %1362 = vset.pattern.permute.xlu0 0
      %1363 = vperm.xlu0 %1362, %v1341
      %v1364 = vpop.permute.xlu0 %1363
      %1367 = vset.pattern.permute.xlu0 0
      %1368 = vperm.xlu0 %1367, %v1342
      %v1369 = vpop.permute.xlu0 %1368
      %1372 = vset.pattern.permute.xlu0 0
      %1373 = vperm.xlu0 %1372, %v1343
      %v1374 = vpop.permute.xlu0 %1373
      %1377 = vset.pattern.permute.xlu0 0
      %1378 = vperm.xlu0 %1377, %v1344
      %v1379 = vpop.permute.xlu0 %1378
      %1382 = vset.pattern.permute.xlu0 0
      %1383 = vperm.xlu0 %1382, %v1345
      %v1384 = vpop.permute.xlu0 %1383
      %v1394 = vunpack.c.l.b16 %v1314
      %v1395 = vunpack.c.l.b16 %v1315
      %v1396 = vunpack.c.l.b16 %v1316
      %v1397 = vunpack.c.l.b16 %v1317
      %v1398 = vunpack.c.l.b16 %v1318
      %v1399 = vunpack.c.l.b16 %v1319
      %v1400 = vunpack.c.l.b16 %v1320
      %v1401 = vunpack.c.l.b16 %v1321
      %v1402 = vpack.c.b16 %v1395, %v1394
      %v1403 = vpack.c.b16 %v1397, %v1396
      %v1404 = vpack.c.b16 %v1399, %v1398
      %v1405 = vpack.c.b16 %v1401, %v1400
      %v1407 = vsel %vm1123, %v1402, 0
      %v1410 = vsel %vm1123, %v1403, 0
      %v1413 = vsel %vm1123, %v1404, 0
      %v1416 = vsel %vm1123, %v1405, 0
      %1418 = vmatprep.subr.bf16.mxu0 %v1323
      %1419 = vmatpush1.bf16.msra.mxu0 %v1322
      %1420 = vmatprep.subr.bf16.mxu0 %v1327
      %1421 = vmatpush1.bf16.msra.mxu0 %v1326
      %1422 = vmatprep.subr.bf16.mxu0 %v1331
      %1423 = vmatpush1.bf16.msra.mxu0 %v1330
      %1424 = vmatprep.subr.bf16.mxu0 %v1335
      %1425 = vmatpush1.bf16.msra.mxu0 %v1334
      %1426 = vmatprep.subr.bf16.mxu0 0
      %1427 = vmatpush1.bf16.msra.mxu0 0
      %1428 = vmatprep.subr.bf16.mxu0 0
      %1429 = vmatpush1.bf16.msra.mxu0 0
      %1430 = vmatprep.subr.bf16.mxu0 0
      %1431 = vmatpush1.bf16.msra.mxu0 0
      %1432 = vmatprep.subr.bf16.mxu0 0
      %1433 = vmatpush1.bf16.msra.mxu0 0
      %1434 = vmatprep.subr.bf16.mxu0 0
      %1435 = vmatpush1.bf16.msra.mxu0 0
      %1436 = vmatprep.subr.bf16.mxu0 0
      %1437 = vmatpush1.bf16.msra.mxu0 0
      %1438 = vmatprep.subr.bf16.mxu0 0
      %1439 = vmatpush1.bf16.msra.mxu0 0
      %1440 = vmatprep.subr.bf16.mxu0 0
      %1441 = vmatpush1.bf16.msra.mxu0 0
      %1442 = vmatprep.subr.bf16.mxu0 0
      %1443 = vmatpush1.bf16.msra.mxu0 0
      %1444 = vmatprep.subr.bf16.mxu0 0
      %1445 = vmatpush1.bf16.msra.mxu0 0
      %1446 = vmatprep.subr.bf16.mxu0 0
      %1447 = vmatpush1.bf16.msra.mxu0 0
      %1448 = vmatprep.subr.bf16.mxu0 0
      %1449 = vmatpush1.bf16.msra.mxu0 0
      %1450 = vmatprep.mubr.bf16.mxu0 0
      %1451 = vmatmul.mubr.bf16.gmra.mrb[0].mxu0 %v1407
      %v1452 = vpop.f32.mrb[0].mxu0
      %v1453 = vadd.f32 %v1349, %v1452
      %v1454 = vpop.f32.mrb[0].mxu0
      %v1455 = vadd.f32 %v1349, %v1454
      %v1456 = vpop.f32.mrb[0].mxu0
      %v1457 = vadd.f32 %v1354, %v1456
      %v1458 = vpop.f32.mrb[0].mxu0
      %v1459 = vadd.f32 %v1354, %v1458
      %1460 = vmatprep.mubr.bf16.mxu0 0
      %1461 = vmatmul.mubr.bf16.gmra.mrb[0].mxu0 %v1410
      %v1462 = vpop.f32.mrb[0].mxu0
      %v1463 = vadd.f32 %v1359, %v1462
      %v1464 = vpop.f32.mrb[0].mxu0
      %v1465 = vadd.f32 %v1359, %v1464
      %v1466 = vpop.f32.mrb[0].mxu0
      %v1467 = vadd.f32 %v1364, %v1466
      %v1468 = vpop.f32.mrb[0].mxu0
      %v1469 = vadd.f32 %v1364, %v1468
      %1470 = vmatprep.mubr.bf16.mxu0 0
      %1471 = vmatmul.mubr.bf16.gmra.mrb[0].mxu0 %v1413
      %v1472 = vpop.f32.mrb[0].mxu0
      %v1473 = vadd.f32 %v1369, %v1472
      %v1474 = vpop.f32.mrb[0].mxu0
      %v1475 = vadd.f32 %v1369, %v1474
      %v1476 = vpop.f32.mrb[0].mxu0
      %v1477 = vadd.f32 %v1374, %v1476
      %v1478 = vpop.f32.mrb[0].mxu0
      %v1479 = vadd.f32 %v1374, %v1478
      %1480 = vmatprep.mubr.bf16.mxu0 0
      %1481 = vmatmul.mubr.bf16.gmra.mrb[0].mxu0 %v1416
      %v1482 = vpop.f32.mrb[0].mxu0
      %v1483 = vadd.f32 %v1379, %v1482
      %v1484 = vpop.f32.mrb[0].mxu0
      %v1485 = vadd.f32 %v1379, %v1484
      %v1486 = vpop.f32.mrb[0].mxu0
      %v1487 = vadd.f32 %v1384, %v1486
      %v1488 = vpop.f32.mrb[0].mxu0
      %v1489 = vadd.f32 %v1384, %v1488
      %1490 = vdwg.mxu0
      %1491 = vmatprep.subr.bf16.mxu0 %v1325
      %1492 = vmatpush1.bf16.msra.mxu0 %v1324
      %1493 = vmatprep.subr.bf16.mxu0 %v1329
      %1494 = vmatpush1.bf16.msra.mxu0 %v1328
      %1495 = vmatprep.subr.bf16.mxu0 %v1333
      %1496 = vmatpush1.bf16.msra.mxu0 %v1332
      %1497 = vmatprep.subr.bf16.mxu0 %v1337
      %1498 = vmatpush1.bf16.msra.mxu0 %v1336
      %1499 = vmatprep.subr.bf16.mxu0 0
      %1500 = vmatpush1.bf16.msra.mxu0 0
      %1501 = vmatprep.subr.bf16.mxu0 0
      %1502 = vmatpush1.bf16.msra.mxu0 0
      %1503 = vmatprep.subr.bf16.mxu0 0
      %1504 = vmatpush1.bf16.msra.mxu0 0
      %1505 = vmatprep.subr.bf16.mxu0 0
      %1506 = vmatpush1.bf16.msra.mxu0 0
      %1507 = vmatprep.subr.bf16.mxu0 0
      %1508 = vmatpush1.bf16.msra.mxu0 0
      %1509 = vmatprep.subr.bf16.mxu0 0
      %1510 = vmatpush1.bf16.msra.mxu0 0
      %1511 = vmatprep.subr.bf16.mxu0 0
      %1512 = vmatpush1.bf16.msra.mxu0 0
      %1513 = vmatprep.subr.bf16.mxu0 0
      %1514 = vmatpush1.bf16.msra.mxu0 0
      %1515 = vmatprep.subr.bf16.mxu0 0
      %1516 = vmatpush1.bf16.msra.mxu0 0
      %1517 = vmatprep.subr.bf16.mxu0 0
      %1518 = vmatpush1.bf16.msra.mxu0 0
      %1519 = vmatprep.subr.bf16.mxu0 0
      %1520 = vmatpush1.bf16.msra.mxu0 0
      %1521 = vmatprep.subr.bf16.mxu0 0
      %1522 = vmatpush1.bf16.msra.mxu0 0
      %1523 = vmatprep.mubr.bf16.mxu0 0
      %1524 = vmatmul.mubr.bf16.gmra.mrb[0].mxu0 %v1407
      %v1525 = vpop.f32.mrb[0].mxu0
      %v1526 = vadd.f32 %v1349, %v1525
      %v1527 = vpop.f32.mrb[0].mxu0
      %v1528 = vadd.f32 %v1349, %v1527
      %v1529 = vpop.f32.mrb[0].mxu0
      %v1530 = vadd.f32 %v1354, %v1529
      %v1531 = vpop.f32.mrb[0].mxu0
      %v1532 = vadd.f32 %v1354, %v1531
      %1533 = vmatprep.mubr.bf16.mxu0 0
      %1534 = vmatmul.mubr.bf16.gmra.mrb[0].mxu0 %v1410
      %v1535 = vpop.f32.mrb[0].mxu0
      %v1536 = vadd.f32 %v1359, %v1535
      %v1537 = vpop.f32.mrb[0].mxu0
      %v1538 = vadd.f32 %v1359, %v1537
      %v1539 = vpop.f32.mrb[0].mxu0
      %v1540 = vadd.f32 %v1364, %v1539
      %v1541 = vpop.f32.mrb[0].mxu0
      %v1542 = vadd.f32 %v1364, %v1541
      %1543 = vmatprep.mubr.bf16.mxu0 0
      %1544 = vmatmul.mubr.bf16.gmra.mrb[0].mxu0 %v1413
      %v1545 = vpop.f32.mrb[0].mxu0
      %v1546 = vadd.f32 %v1369, %v1545
      %v1547 = vpop.f32.mrb[0].mxu0
      %v1548 = vadd.f32 %v1369, %v1547
      %v1549 = vpop.f32.mrb[0].mxu0
      %v1550 = vadd.f32 %v1374, %v1549
      %v1551 = vpop.f32.mrb[0].mxu0
      %v1552 = vadd.f32 %v1374, %v1551
      %1553 = vmatprep.mubr.bf16.mxu0 0
      %1554 = vmatmul.mubr.bf16.gmra.mrb[0].mxu0 %v1416
      %v1555 = vpop.f32.mrb[0].mxu0
      %v1556 = vadd.f32 %v1379, %v1555
      %v1557 = vpop.f32.mrb[0].mxu0
      %v1558 = vadd.f32 %v1379, %v1557
      %v1559 = vpop.f32.mrb[0].mxu0
      %v1560 = vadd.f32 %v1384, %v1559
      %v1561 = vpop.f32.mrb[0].mxu0
      %v1562 = vadd.f32 %v1384, %v1561
      %1563 = vdwg.mxu0
      %v1564 = vmax.f32 %v1453, 0.0
      %v1565 = vmax.f32 %v1455, 0.0
      %v1566 = vmax.f32 %v1526, 0.0
      %v1567 = vmax.f32 %v1528, 0.0
      %v1568 = vmax.f32 %v1457, 0.0
      %v1569 = vmax.f32 %v1459, 0.0
      %v1570 = vmax.f32 %v1530, 0.0
      %v1571 = vmax.f32 %v1532, 0.0
      %v1572 = vmax.f32 %v1463, 0.0
      %v1573 = vmax.f32 %v1465, 0.0
      %v1574 = vmax.f32 %v1536, 0.0
      %v1575 = vmax.f32 %v1538, 0.0
      %v1576 = vmax.f32 %v1467, 0.0
      %v1577 = vmax.f32 %v1469, 0.0
      %v1578 = vmax.f32 %v1540, 0.0
      %v1579 = vmax.f32 %v1542, 0.0
      %v1580 = vmax.f32 %v1473, 0.0
      %v1581 = vmax.f32 %v1475, 0.0
      %v1582 = vmax.f32 %v1546, 0.0
      %v1583 = vmax.f32 %v1548, 0.0
      %v1584 = vmax.f32 %v1477, 0.0
      %v1585 = vmax.f32 %v1479, 0.0
      %v1586 = vmax.f32 %v1550, 0.0
      %v1587 = vmax.f32 %v1552, 0.0
      %v1588 = vmax.f32 %v1483, 0.0
      %v1589 = vmax.f32 %v1485, 0.0
      %v1590 = vmax.f32 %v1556, 0.0
      %v1591 = vmax.f32 %v1558, 0.0
      %v1592 = vmax.f32 %v1487, 0.0
      %v1593 = vmax.f32 %v1489, 0.0
      %v1594 = vmax.f32 %v1560, 0.0
      %v1595 = vmax.f32 %v1562, 0.0
      %v1596 = vld [vmem:[%s7] sm:$0xf]
      %v1597 = vld [vmem:[%s7 + $0x4] sm:$0xf]
      %v1598 = vld [vmem:[%s7 + $0x8] sm:$0xf]
      %v1599 = vld [vmem:[%s7 + $0xc] sm:$0xf]
      %v1600 = vld [vmem:[%s7 + $0x10] sm:$0xf]
      %v1601 = vld [vmem:[%s7 + $0x14] sm:$0xf]
      %v1602 = vld [vmem:[%s7 + $0x18] sm:$0xf]
      %v1603 = vld [vmem:[%s7 + $0x1c] sm:$0xf]
      %v1604 = vld [vmem:[%s7 + $0x20] sm:$0xf]
      %v1605 = vld [vmem:[%s7 + $0x24] sm:$0xf]
      %v1606 = vld [vmem:[%s7 + $0x28] sm:$0xf]
      %v1607 = vld [vmem:[%s7 + $0x2c] sm:$0xf]
      %v1608 = vld [vmem:[%s7 + $0x30] sm:$0xf]
      %v1609 = vld [vmem:[%s7 + $0x34] sm:$0xf]
      %v1610 = vld [vmem:[%s7 + $0x38] sm:$0xf]
      %v1611 = vld [vmem:[%s7 + $0x3c] sm:$0xf]
      %v1612 = vpack.c.bf16 %v1568, %v1564
      %v1613 = vpack.c.bf16 %v1569, %v1565
      %v1614 = vpack.c.bf16 %v1570, %v1566
      %v1615 = vpack.c.bf16 %v1571, %v1567
      %v1616 = vpack.c.bf16 %v1576, %v1572
      %v1617 = vpack.c.bf16 %v1577, %v1573
      %v1618 = vpack.c.bf16 %v1578, %v1574
      %v1619 = vpack.c.bf16 %v1579, %v1575
      %v1620 = vpack.c.bf16 %v1584, %v1580
      %v1621 = vpack.c.bf16 %v1585, %v1581
      %v1622 = vpack.c.bf16 %v1586, %v1582
      %v1623 = vpack.c.bf16 %v1587, %v1583
      %v1624 = vpack.c.bf16 %v1592, %v1588
      %v1625 = vpack.c.bf16 %v1593, %v1589
      %v1626 = vpack.c.bf16 %v1594, %v1590
      %v1627 = vpack.c.bf16 %v1595, %v1591
      %v1628 = vld [vmem:[%s8] sm:$0xff]
      %v1629 = vld [vmem:[%s8 + $0x8] sm:$0xff]
      %v1630 = vld [vmem:[%s8 + $0x10] sm:$0xff]
      %v1631 = vld [vmem:[%s8 + $0x18] sm:$0xff]
      %v1632 = vld [vmem:[%s8 + $0x20] sm:$0xff]
      %v1633 = vld [vmem:[%s8 + $0x28] sm:$0xff]
      %v1634 = vld [vmem:[%s8 + $0x30] sm:$0xff]
      %v1635 = vld [vmem:[%s8 + $0x38] sm:$0xff]
      %v1636 = vld [vmem:[%s8 + $0x40] sm:$0xff]
      %v1637 = vld [vmem:[%s8 + $0x48] sm:$0xff]
      %v1638 = vld [vmem:[%s8 + $0x50] sm:$0xff]
      %v1639 = vld [vmem:[%s8 + $0x58] sm:$0xff]
      %v1640 = vld [vmem:[%s8 + $0x60] sm:$0xff]
      %v1641 = vld [vmem:[%s8 + $0x68] sm:$0xff]
      %v1642 = vld [vmem:[%s8 + $0x70] sm:$0xff]
      %v1643 = vld [vmem:[%s8 + $0x78] sm:$0xff]
      %1645 = vset.pattern.permute.xlu0 0
      %1646 = vperm.xlu0 %1645, %v1628
      %v1647 = vpop.permute.xlu0 %1646
      %1650 = vset.pattern.permute.xlu0 0
      %1651 = vperm.xlu0 %1650, %v1629
      %v1652 = vpop.permute.xlu0 %1651
      %1655 = vset.pattern.permute.xlu0 0
      %1656 = vperm.xlu0 %1655, %v1630
      %v1657 = vpop.permute.xlu0 %1656
      %1660 = vset.pattern.permute.xlu0 0
      %1661 = vperm.xlu0 %1660, %v1631
      %v1662 = vpop.permute.xlu0 %1661
      %1665 = vset.pattern.permute.xlu0 0
      %1666 = vperm.xlu0 %1665, %v1632
      %v1667 = vpop.permute.xlu0 %1666
      %1670 = vset.pattern.permute.xlu0 0
      %1671 = vperm.xlu0 %1670, %v1633
      %v1672 = vpop.permute.xlu0 %1671
      %1675 = vset.pattern.permute.xlu0 0
      %1676 = vperm.xlu0 %1675, %v1634
      %v1677 = vpop.permute.xlu0 %1676
      %1680 = vset.pattern.permute.xlu0 0
      %1681 = vperm.xlu0 %1680, %v1635
      %v1682 = vpop.permute.xlu0 %1681
      %1685 = vset.pattern.permute.xlu0 0
      %1686 = vperm.xlu0 %1685, %v1636
      %v1687 = vpop.permute.xlu0 %1686
      %1690 = vset.pattern.permute.xlu0 0
      %1691 = vperm.xlu0 %1690, %v1637
      %v1692 = vpop.permute.xlu0 %1691
      %1695 = vset.pattern.permute.xlu0 0
      %1696 = vperm.xlu0 %1695, %v1638
      %v1697 = vpop.permute.xlu0 %1696
      %1700 = vset.pattern.permute.xlu0 0
      %1701 = vperm.xlu0 %1700, %v1639
      %v1702 = vpop.permute.xlu0 %1701
      %1705 = vset.pattern.permute.xlu0 0
      %1706 = vperm.xlu0 %1705, %v1640
      %v1707 = vpop.permute.xlu0 %1706
      %1710 = vset.pattern.permute.xlu0 0
      %1711 = vperm.xlu0 %1710, %v1641
      %v1712 = vpop.permute.xlu0 %1711
      %1715 = vset.pattern.permute.xlu0 0
      %1716 = vperm.xlu0 %1715, %v1642
      %v1717 = vpop.permute.xlu0 %1716
      %1720 = vset.pattern.permute.xlu0 0
      %1721 = vperm.xlu0 %1720, %v1643
      %v1722 = vpop.permute.xlu0 %1721
      %v1740 = vunpack.c.l.b16 %v1596
      %v1741 = vunpack.c.l.b16 %v1597
      %v1742 = vunpack.c.l.b16 %v1598
      %v1743 = vunpack.c.l.b16 %v1599
      %v1744 = vunpack.c.l.b16 %v1600
      %v1745 = vunpack.c.l.b16 %v1601
      %v1746 = vunpack.c.l.b16 %v1602
      %v1747 = vunpack.c.l.b16 %v1603
      %v1748 = vunpack.c.l.b16 %v1604
      %v1749 = vunpack.c.l.b16 %v1605
      %v1750 = vunpack.c.l.b16 %v1606
      %v1751 = vunpack.c.l.b16 %v1607
      %v1752 = vunpack.c.l.b16 %v1608
      %v1753 = vunpack.c.l.b16 %v1609
      %v1754 = vunpack.c.l.b16 %v1610
      %v1755 = vunpack.c.l.b16 %v1611
      %v1756 = vpack.c.b16 %v1741, %v1740
      %v1757 = vpack.c.b16 %v1743, %v1742
      %v1758 = vpack.c.b16 %v1745, %v1744
      %v1759 = vpack.c.b16 %v1747, %v1746
      %v1760 = vpack.c.b16 %v1749, %v1748
      %v1761 = vpack.c.b16 %v1751, %v1750
      %v1762 = vpack.c.b16 %v1753, %v1752
      %v1763 = vpack.c.b16 %v1755, %v1754
      %v1765 = vsel %vm1123, %v1756, 0
      %v1768 = vsel %vm1123, %v1757, 0
      %v1771 = vsel %vm1123, %v1758, 0
      %v1774 = vsel %vm1123, %v1759, 0
      %v1777 = vsel %vm1123, %v1760, 0
      %v1780 = vsel %vm1123, %v1761, 0
      %v1783 = vsel %vm1123, %v1762, 0
      %v1786 = vsel %vm1123, %v1763, 0
      %1788 = vmatprep.subr.bf16.mxu0 %v1613
      %1789 = vmatpush1.bf16.msra.mxu0 %v1612
      %1790 = vmatprep.subr.bf16.mxu0 %v1617
      %1791 = vmatpush1.bf16.msra.mxu0 %v1616
      %1792 = vmatprep.subr.bf16.mxu0 %v1621
      %1793 = vmatpush1.bf16.msra.mxu0 %v1620
      %1794 = vmatprep.subr.bf16.mxu0 %v1625
      %1795 = vmatpush1.bf16.msra.mxu0 %v1624
      %1796 = vmatprep.subr.bf16.mxu0 0
      %1797 = vmatpush1.bf16.msra.mxu0 0
      %1798 = vmatprep.subr.bf16.mxu0 0
      %1799 = vmatpush1.bf16.msra.mxu0 0
      %1800 = vmatprep.subr.bf16.mxu0 0
      %1801 = vmatpush1.bf16.msra.mxu0 0
      %1802 = vmatprep.subr.bf16.mxu0 0
      %1803 = vmatpush1.bf16.msra.mxu0 0
      %1804 = vmatprep.subr.bf16.mxu0 0
      %1805 = vmatpush1.bf16.msra.mxu0 0
      %1806 = vmatprep.subr.bf16.mxu0 0
      %1807 = vmatpush1.bf16.msra.mxu0 0
      %1808 = vmatprep.subr.bf16.mxu0 0
      %1809 = vmatpush1.bf16.msra.mxu0 0
      %1810 = vmatprep.subr.bf16.mxu0 0
      %1811 = vmatpush1.bf16.msra.mxu0 0
      %1812 = vmatprep.subr.bf16.mxu0 0
      %1813 = vmatpush1.bf16.msra.mxu0 0
      %1814 = vmatprep.subr.bf16.mxu0 0
      %1815 = vmatpush1.bf16.msra.mxu0 0
      %1816 = vmatprep.subr.bf16.mxu0 0
      %1817 = vmatpush1.bf16.msra.mxu0 0
      %1818 = vmatprep.subr.bf16.mxu0 0
      %1819 = vmatpush1.bf16.msra.mxu0 0
      %1820 = vmatprep.mubr.bf16.mxu0 0
      %1821 = vmatmul.mubr.bf16.gmra.mrb[0].mxu0 %v1765
      %v1822 = vpop.f32.mrb[0].mxu0
      %v1823 = vadd.f32 %v1647, %v1822
      %v1824 = vpop.f32.mrb[0].mxu0
      %v1825 = vadd.f32 %v1647, %v1824
      %v1826 = vpop.f32.mrb[0].mxu0
      %v1827 = vadd.f32 %v1652, %v1826
      %v1828 = vpop.f32.mrb[0].mxu0
      %v1829 = vadd.f32 %v1652, %v1828
      %1830 = vmatprep.mubr.bf16.mxu0 0
      %1831 = vmatmul.mubr.bf16.gmra.mrb[0].mxu0 %v1768
      %v1832 = vpop.f32.mrb[0].mxu0
      %v1833 = vadd.f32 %v1657, %v1832
      %v1834 = vpop.f32.mrb[0].mxu0
      %v1835 = vadd.f32 %v1657, %v1834
      %v1836 = vpop.f32.mrb[0].mxu0
      %v1837 = vadd.f32 %v1662, %v1836
      %v1838 = vpop.f32.mrb[0].mxu0
      %v1839 = vadd.f32 %v1662, %v1838
      %1840 = vmatprep.mubr.bf16.mxu0 0
      %1841 = vmatmul.mubr.bf16.gmra.mrb[0].mxu0 %v1771
      %v1842 = vpop.f32.mrb[0].mxu0
      %v1843 = vadd.f32 %v1667, %v1842
      %v1844 = vpop.f32.mrb[0].mxu0
      %v1845 = vadd.f32 %v1667, %v1844
      %v1846 = vpop.f32.mrb[0].mxu0
      %v1847 = vadd.f32 %v1672, %v1846
      %v1848 = vpop.f32.mrb[0].mxu0
      %v1849 = vadd.f32 %v1672, %v1848
      %1850 = vmatprep.mubr.bf16.mxu0 0
      %1851 = vmatmul.mubr.bf16.gmra.mrb[0].mxu0 %v1774
      %v1852 = vpop.f32.mrb[0].mxu0
      %v1853 = vadd.f32 %v1677, %v1852
      %v1854 = vpop.f32.mrb[0].mxu0
      %v1855 = vadd.f32 %v1677, %v1854
      %v1856 = vpop.f32.mrb[0].mxu0
      %v1857 = vadd.f32 %v1682, %v1856
      %v1858 = vpop.f32.mrb[0].mxu0
      %v1859 = vadd.f32 %v1682, %v1858
      %1860 = vmatprep.mubr.bf16.mxu0 0
      %1861 = vmatmul.mubr.bf16.gmra.mrb[0].mxu0 %v1777
      %v1862 = vpop.f32.mrb[0].mxu0
      %v1863 = vadd.f32 %v1687, %v1862
      %v1864 = vpop.f32.mrb[0].mxu0
      %v1865 = vadd.f32 %v1687, %v1864
      %v1866 = vpop.f32.mrb[0].mxu0
      %v1867 = vadd.f32 %v1692, %v1866
      %v1868 = vpop.f32.mrb[0].mxu0
      %v1869 = vadd.f32 %v1692, %v1868
      %1870 = vmatprep.mubr.bf16.mxu0 0
      %1871 = vmatmul.mubr.bf16.gmra.mrb[0].mxu0 %v1780
      %v1872 = vpop.f32.mrb[0].mxu0
      %v1873 = vadd.f32 %v1697, %v1872
      %v1874 = vpop.f32.mrb[0].mxu0
      %v1875 = vadd.f32 %v1697, %v1874
      %v1876 = vpop.f32.mrb[0].mxu0
      %v1877 = vadd.f32 %v1702, %v1876
      %v1878 = vpop.f32.mrb[0].mxu0
      %v1879 = vadd.f32 %v1702, %v1878
      %1880 = vmatprep.mubr.bf16.mxu0 0
      %1881 = vmatmul.mubr.bf16.gmra.mrb[0].mxu0 %v1783
      %v1882 = vpop.f32.mrb[0].mxu0
      %v1883 = vadd.f32 %v1707, %v1882
      %v1884 = vpop.f32.mrb[0].mxu0
      %v1885 = vadd.f32 %v1707, %v1884
      %v1886 = vpop.f32.mrb[0].mxu0
      %v1887 = vadd.f32 %v1712, %v1886
      %v1888 = vpop.f32.mrb[0].mxu0
      %v1889 = vadd.f32 %v1712, %v1888
      %1890 = vmatprep.mubr.bf16.mxu0 0
      %1891 = vmatmul.mubr.bf16.gmra.mrb[0].mxu0 %v1786
      %v1892 = vpop.f32.mrb[0].mxu0
      %v1893 = vadd.f32 %v1717, %v1892
      %v1894 = vpop.f32.mrb[0].mxu0
      %v1895 = vadd.f32 %v1717, %v1894
      %v1896 = vpop.f32.mrb[0].mxu0
      %v1897 = vadd.f32 %v1722, %v1896
      %v1898 = vpop.f32.mrb[0].mxu0
      %v1899 = vadd.f32 %v1722, %v1898
      %1900 = vdwg.mxu0
      %1901 = vmatprep.subr.bf16.mxu0 %v1615
      %1902 = vmatpush1.bf16.msra.mxu0 %v1614
      %1903 = vmatprep.subr.bf16.mxu0 %v1619
      %1904 = vmatpush1.bf16.msra.mxu0 %v1618
      %1905 = vmatprep.subr.bf16.mxu0 %v1623
      %1906 = vmatpush1.bf16.msra.mxu0 %v1622
      %1907 = vmatprep.subr.bf16.mxu0 %v1627
      %1908 = vmatpush1.bf16.msra.mxu0 %v1626
      %1909 = vmatprep.subr.bf16.mxu0 0
      %1910 = vmatpush1.bf16.msra.mxu0 0
      %1911 = vmatprep.subr.bf16.mxu0 0
      %1912 = vmatpush1.bf16.msra.mxu0 0
      %1913 = vmatprep.subr.bf16.mxu0 0
      %1914 = vmatpush1.bf16.msra.mxu0 0
      %1915 = vmatprep.subr.bf16.mxu0 0
      %1916 = vmatpush1.bf16.msra.mxu0 0
      %1917 = vmatprep.subr.bf16.mxu0 0
      %1918 = vmatpush1.bf16.msra.mxu0 0
      %1919 = vmatprep.subr.bf16.mxu0 0
      %1920 = vmatpush1.bf16.msra.mxu0 0
      %1921 = vmatprep.subr.bf16.mxu0 0
      %1922 = vmatpush1.bf16.msra.mxu0 0
      %1923 = vmatprep.subr.bf16.mxu0 0
      %1924 = vmatpush1.bf16.msra.mxu0 0
      %1925 = vmatprep.subr.bf16.mxu0 0
      %1926 = vmatpush1.bf16.msra.mxu0 0
      %1927 = vmatprep.subr.bf16.mxu0 0
      %1928 = vmatpush1.bf16.msra.mxu0 0
      %1929 = vmatprep.subr.bf16.mxu0 0
      %1930 = vmatpush1.bf16.msra.mxu0 0
      %1931 = vmatprep.subr.bf16.mxu0 0
      %1932 = vmatpush1.bf16.msra.mxu0 0
      %1933 = vmatprep.mubr.bf16.mxu0 0
      %1934 = vmatmul.mubr.bf16.gmra.mrb[0].mxu0 %v1765
      %v1935 = vpop.f32.mrb[0].mxu0
      %v1936 = vadd.f32 %v1647, %v1935
      %v1937 = vpop.f32.mrb[0].mxu0
      %v1938 = vadd.f32 %v1647, %v1937
      %v1939 = vpop.f32.mrb[0].mxu0
      %v1940 = vadd.f32 %v1652, %v1939
      %v1941 = vpop.f32.mrb[0].mxu0
      %v1942 = vadd.f32 %v1652, %v1941
      %1943 = vmatprep.mubr.bf16.mxu0 0
      %1944 = vmatmul.mubr.bf16.gmra.mrb[0].mxu0 %v1768
      %v1945 = vpop.f32.mrb[0].mxu0
      %v1946 = vadd.f32 %v1657, %v1945
      %v1947 = vpop.f32.mrb[0].mxu0
      %v1948 = vadd.f32 %v1657, %v1947
      %v1949 = vpop.f32.mrb[0].mxu0
      %v1950 = vadd.f32 %v1662, %v1949
      %v1951 = vpop.f32.mrb[0].mxu0
      %v1952 = vadd.f32 %v1662, %v1951
      %1953 = vmatprep.mubr.bf16.mxu0 0
      %1954 = vmatmul.mubr.bf16.gmra.mrb[0].mxu0 %v1771
      %v1955 = vpop.f32.mrb[0].mxu0
      %v1956 = vadd.f32 %v1667, %v1955
      %v1957 = vpop.f32.mrb[0].mxu0
      %v1958 = vadd.f32 %v1667, %v1957
      %v1959 = vpop.f32.mrb[0].mxu0
      %v1960 = vadd.f32 %v1672, %v1959
      %v1961 = vpop.f32.mrb[0].mxu0
      %v1962 = vadd.f32 %v1672, %v1961
      %1963 = vmatprep.mubr.bf16.mxu0 0
      %1964 = vmatmul.mubr.bf16.gmra.mrb[0].mxu0 %v1774
      %v1965 = vpop.f32.mrb[0].mxu0
      %v1966 = vadd.f32 %v1677, %v1965
      %v1967 = vpop.f32.mrb[0].mxu0
      %v1968 = vadd.f32 %v1677, %v1967
      %v1969 = vpop.f32.mrb[0].mxu0
      %v1970 = vadd.f32 %v1682, %v1969
      %v1971 = vpop.f32.mrb[0].mxu0
      %v1972 = vadd.f32 %v1682, %v1971
      %1973 = vmatprep.mubr.bf16.mxu0 0
      %1974 = vmatmul.mubr.bf16.gmra.mrb[0].mxu0 %v1777
      %v1975 = vpop.f32.mrb[0].mxu0
      %v1976 = vadd.f32 %v1687, %v1975
      %v1977 = vpop.f32.mrb[0].mxu0
      %v1978 = vadd.f32 %v1687, %v1977
      %v1979 = vpop.f32.mrb[0].mxu0
      %v1980 = vadd.f32 %v1692, %v1979
      %v1981 = vpop.f32.mrb[0].mxu0
      %v1982 = vadd.f32 %v1692, %v1981
      %1983 = vmatprep.mubr.bf16.mxu0 0
      %1984 = vmatmul.mubr.bf16.gmra.mrb[0].mxu0 %v1780
      %v1985 = vpop.f32.mrb[0].mxu0
      %v1986 = vadd.f32 %v1697, %v1985
      %v1987 = vpop.f32.mrb[0].mxu0
      %v1988 = vadd.f32 %v1697, %v1987
      %v1989 = vpop.f32.mrb[0].mxu0
      %v1990 = vadd.f32 %v1702, %v1989
      %v1991 = vpop.f32.mrb[0].mxu0
      %v1992 = vadd.f32 %v1702, %v1991
      %1993 = vmatprep.mubr.bf16.mxu0 0
      %1994 = vmatmul.mubr.bf16.gmra.mrb[0].mxu0 %v1783
      %v1995 = vpop.f32.mrb[0].mxu0
      %v1996 = vadd.f32 %v1707, %v1995
      %v1997 = vpop.f32.mrb[0].mxu0
      %v1998 = vadd.f32 %v1707, %v1997
      %v1999 = vpop.f32.mrb[0].mxu0
      %v2000 = vadd.f32 %v1712, %v1999
      %v2001 = vpop.f32.mrb[0].mxu0
      %v2002 = vadd.f32 %v1712, %v2001
      %2003 = vmatprep.mubr.bf16.mxu0 0
      %2004 = vmatmul.mubr.bf16.gmra.mrb[0].mxu0 %v1786
      %v2005 = vpop.f32.mrb[0].mxu0
      %v2006 = vadd.f32 %v1717, %v2005
      %v2007 = vpop.f32.mrb[0].mxu0
      %v2008 = vadd.f32 %v1717, %v2007
      %v2009 = vpop.f32.mrb[0].mxu0
      %v2010 = vadd.f32 %v1722, %v2009
      %v2011 = vpop.f32.mrb[0].mxu0
      %v2012 = vadd.f32 %v1722, %v2011
      %2013 = vdwg.mxu0
      %v2014 = vmax.f32 %v1823, 0.0
      %v2015 = vmax.f32 %v1825, 0.0
      %v2016 = vmax.f32 %v1936, 0.0
      %v2017 = vmax.f32 %v1938, 0.0
      %v2018 = vmax.f32 %v1827, 0.0
      %v2019 = vmax.f32 %v1829, 0.0
      %v2020 = vmax.f32 %v1940, 0.0
      %v2021 = vmax.f32 %v1942, 0.0
      %v2022 = vmax.f32 %v1833, 0.0
      %v2023 = vmax.f32 %v1835, 0.0
      %v2024 = vmax.f32 %v1946, 0.0
      %v2025 = vmax.f32 %v1948, 0.0
      %v2026 = vmax.f32 %v1837, 0.0
      %v2027 = vmax.f32 %v1839, 0.0
      %v2028 = vmax.f32 %v1950, 0.0
      %v2029 = vmax.f32 %v1952, 0.0
      %v2030 = vmax.f32 %v1843, 0.0
      %v2031 = vmax.f32 %v1845, 0.0
      %v2032 = vmax.f32 %v1956, 0.0
      %v2033 = vmax.f32 %v1958, 0.0
      %v2034 = vmax.f32 %v1847, 0.0
      %v2035 = vmax.f32 %v1849, 0.0
      %v2036 = vmax.f32 %v1960, 0.0
      %v2037 = vmax.f32 %v1962, 0.0
      %v2038 = vmax.f32 %v1853, 0.0
      %v2039 = vmax.f32 %v1855, 0.0
      %v2040 = vmax.f32 %v1966, 0.0
      %v2041 = vmax.f32 %v1968, 0.0
      %v2042 = vmax.f32 %v1857, 0.0
      %v2043 = vmax.f32 %v1859, 0.0
      %v2044 = vmax.f32 %v1970, 0.0
      %v2045 = vmax.f32 %v1972, 0.0
      %v2046 = vmax.f32 %v1863, 0.0
      %v2047 = vmax.f32 %v1865, 0.0
      %v2048 = vmax.f32 %v1976, 0.0
      %v2049 = vmax.f32 %v1978, 0.0
      %v2050 = vmax.f32 %v1867, 0.0
      %v2051 = vmax.f32 %v1869, 0.0
      %v2052 = vmax.f32 %v1980, 0.0
      %v2053 = vmax.f32 %v1982, 0.0
      %v2054 = vmax.f32 %v1873, 0.0
      %v2055 = vmax.f32 %v1875, 0.0
      %v2056 = vmax.f32 %v1986, 0.0
      %v2057 = vmax.f32 %v1988, 0.0
      %v2058 = vmax.f32 %v1877, 0.0
      %v2059 = vmax.f32 %v1879, 0.0
      %v2060 = vmax.f32 %v1990, 0.0
      %v2061 = vmax.f32 %v1992, 0.0
      %v2062 = vmax.f32 %v1883, 0.0
      %v2063 = vmax.f32 %v1885, 0.0
      %v2064 = vmax.f32 %v1996, 0.0
      %v2065 = vmax.f32 %v1998, 0.0
      %v2066 = vmax.f32 %v1887, 0.0
      %v2067 = vmax.f32 %v1889, 0.0
      %v2068 = vmax.f32 %v2000, 0.0
      %v2069 = vmax.f32 %v2002, 0.0
      %v2070 = vmax.f32 %v1893, 0.0
      %v2071 = vmax.f32 %v1895, 0.0
      %v2072 = vmax.f32 %v2006, 0.0
      %v2073 = vmax.f32 %v2008, 0.0
      %v2074 = vmax.f32 %v1897, 0.0
      %v2075 = vmax.f32 %v1899, 0.0
      %v2076 = vmax.f32 %v2010, 0.0
      %v2077 = vmax.f32 %v2012, 0.0
      %v2078 = vld [vmem:[%s9] sm:$0xf]
      %v2079 = vld [vmem:[%s9 + $0x4] sm:$0xf]
      %v2080 = vld [vmem:[%s9 + $0x8] sm:$0xf]
      %v2081 = vld [vmem:[%s9 + $0xc] sm:$0xf]
      %v2082 = vld [vmem:[%s9 + $0x10] sm:$0xf]
      %v2083 = vld [vmem:[%s9 + $0x14] sm:$0xf]
      %v2084 = vld [vmem:[%s9 + $0x18] sm:$0xf]
      %v2085 = vld [vmem:[%s9 + $0x1c] sm:$0xf]
      %v2086 = vpack.c.bf16 %v2018, %v2014
      %v2087 = vpack.c.bf16 %v2019, %v2015
      %v2088 = vpack.c.bf16 %v2020, %v2016
      %v2089 = vpack.c.bf16 %v2021, %v2017
      %v2090 = vpack.c.bf16 %v2026, %v2022
      %v2091 = vpack.c.bf16 %v2027, %v2023
      %v2092 = vpack.c.bf16 %v2028, %v2024
      %v2093 = vpack.c.bf16 %v2029, %v2025
      %v2094 = vpack.c.bf16 %v2034, %v2030
      %v2095 = vpack.c.bf16 %v2035, %v2031
      %v2096 = vpack.c.bf16 %v2036, %v2032
      %v2097 = vpack.c.bf16 %v2037, %v2033
      %v2098 = vpack.c.bf16 %v2042, %v2038
      %v2099 = vpack.c.bf16 %v2043, %v2039
      %v2100 = vpack.c.bf16 %v2044, %v2040
      %v2101 = vpack.c.bf16 %v2045, %v2041
      %v2102 = vpack.c.bf16 %v2050, %v2046
      %v2103 = vpack.c.bf16 %v2051, %v2047
      %v2104 = vpack.c.bf16 %v2052, %v2048
      %v2105 = vpack.c.bf16 %v2053, %v2049
      %v2106 = vpack.c.bf16 %v2058, %v2054
      %v2107 = vpack.c.bf16 %v2059, %v2055
      %v2108 = vpack.c.bf16 %v2060, %v2056
      %v2109 = vpack.c.bf16 %v2061, %v2057
      %v2110 = vpack.c.bf16 %v2066, %v2062
      %v2111 = vpack.c.bf16 %v2067, %v2063
      %v2112 = vpack.c.bf16 %v2068, %v2064
      %v2113 = vpack.c.bf16 %v2069, %v2065
      %v2114 = vpack.c.bf16 %v2074, %v2070
      %v2115 = vpack.c.bf16 %v2075, %v2071
      %v2116 = vpack.c.bf16 %v2076, %v2072
      %v2117 = vpack.c.bf16 %v2077, %v2073
      %v2118 = vld [vmem:[%s10] sm:$0xff]
      %v2119 = vld [vmem:[%s10 + $0x8] sm:$0xff]
      %v2120 = vld [vmem:[%s10 + $0x10] sm:$0xff]
      %v2121 = vld [vmem:[%s10 + $0x18] sm:$0xff]
      %v2122 = vld [vmem:[%s10 + $0x20] sm:$0xff]
      %v2123 = vld [vmem:[%s10 + $0x28] sm:$0xff]
      %v2124 = vld [vmem:[%s10 + $0x30] sm:$0xff]
      %v2125 = vld [vmem:[%s10 + $0x38] sm:$0xff]
      %2127 = vset.pattern.permute.xlu0 0
      %2128 = vperm.xlu0 %2127, %v2118
      %v2129 = vpop.permute.xlu0 %2128
      %2132 = vset.pattern.permute.xlu0 0
      %2133 = vperm.xlu0 %2132, %v2119
      %v2134 = vpop.permute.xlu0 %2133
      %2137 = vset.pattern.permute.xlu0 0
      %2138 = vperm.xlu0 %2137, %v2120
      %v2139 = vpop.permute.xlu0 %2138
      %2142 = vset.pattern.permute.xlu0 0
      %2143 = vperm.xlu0 %2142, %v2121
      %v2144 = vpop.permute.xlu0 %2143
      %2147 = vset.pattern.permute.xlu0 0
      %2148 = vperm.xlu0 %2147, %v2122
      %v2149 = vpop.permute.xlu0 %2148
      %2152 = vset.pattern.permute.xlu0 0
      %2153 = vperm.xlu0 %2152, %v2123
      %v2154 = vpop.permute.xlu0 %2153
      %2157 = vset.pattern.permute.xlu0 0
      %2158 = vperm.xlu0 %2157, %v2124
      %v2159 = vpop.permute.xlu0 %2158
      %2162 = vset.pattern.permute.xlu0 0
      %2163 = vperm.xlu0 %2162, %v2125
      %v2164 = vpop.permute.xlu0 %2163
      %v2174 = vunpack.c.l.b16 %v2078
      %v2175 = vunpack.c.l.b16 %v2079
      %v2176 = vunpack.c.l.b16 %v2080
      %v2177 = vunpack.c.l.b16 %v2081
      %v2178 = vunpack.c.l.b16 %v2082
      %v2179 = vunpack.c.l.b16 %v2083
      %v2180 = vunpack.c.l.b16 %v2084
      %v2181 = vunpack.c.l.b16 %v2085
      %v2182 = vpack.c.b16 %v2175, %v2174
      %v2183 = vpack.c.b16 %v2177, %v2176
      %v2184 = vpack.c.b16 %v2179, %v2178
      %v2185 = vpack.c.b16 %v2181, %v2180
      %2190 = vmatprep.subr.bf16.mxu0 %v2087
      %2191 = vmatpush1.bf16.msra.mxu0 %v2086
      %2192 = vmatprep.subr.bf16.mxu0 %v2091
      %2193 = vmatpush1.bf16.msra.mxu0 %v2090
      %2194 = vmatprep.subr.bf16.mxu0 %v2095
      %2195 = vmatpush1.bf16.msra.mxu0 %v2094
      %2196 = vmatprep.subr.bf16.mxu0 %v2099
      %2197 = vmatpush1.bf16.msra.mxu0 %v2098
      %2198 = vmatprep.subr.bf16.mxu0 %v2103
      %2199 = vmatpush1.bf16.msra.mxu0 %v2102
      %2200 = vmatprep.subr.bf16.mxu0 %v2107
      %2201 = vmatpush1.bf16.msra.mxu0 %v2106
      %2202 = vmatprep.subr.bf16.mxu0 %v2111
      %2203 = vmatpush1.bf16.msra.mxu0 %v2110
      %2204 = vmatprep.subr.bf16.mxu0 %v2115
      %2205 = vmatpush1.bf16.msra.mxu0 %v2114
      %2206 = vmatprep.subr.bf16.mxu0 0
      %2207 = vmatpush1.bf16.msra.mxu0 0
      %2208 = vmatprep.subr.bf16.mxu0 0
      %2209 = vmatpush1.bf16.msra.mxu0 0
      %2210 = vmatprep.subr.bf16.mxu0 0
      %2211 = vmatpush1.bf16.msra.mxu0 0
      %2212 = vmatprep.subr.bf16.mxu0 0
      %2213 = vmatpush1.bf16.msra.mxu0 0
      %2214 = vmatprep.subr.bf16.mxu0 0
      %2215 = vmatpush1.bf16.msra.mxu0 0
      %2216 = vmatprep.subr.bf16.mxu0 0
      %2217 = vmatpush1.bf16.msra.mxu0 0
      %2218 = vmatprep.subr.bf16.mxu0 0
      %2219 = vmatpush1.bf16.msra.mxu0 0
      %2220 = vmatprep.subr.bf16.mxu0 0
      %2221 = vmatpush1.bf16.msra.mxu0 0
      %2222 = vmatprep.mubr.bf16.mxu0 0
      %2223 = vmatmul.mubr.bf16.gmra.mrb[0].mxu0 %v2182
      %v2224 = vpop.f32.mrb[0].mxu0
      %v2225 = vadd.f32 %v2129, %v2224
      %v2226 = vpop.f32.mrb[0].mxu0
      %v2227 = vadd.f32 %v2129, %v2226
      %v2228 = vpop.f32.mrb[0].mxu0
      %v2229 = vadd.f32 %v2134, %v2228
      %v2230 = vpop.f32.mrb[0].mxu0
      %v2231 = vadd.f32 %v2134, %v2230
      %2232 = vmatprep.mubr.bf16.mxu0 0
      %2233 = vmatmul.mubr.bf16.gmra.mrb[0].mxu0 %v2183
      %v2234 = vpop.f32.mrb[0].mxu0
      %v2235 = vadd.f32 %v2139, %v2234
      %v2236 = vpop.f32.mrb[0].mxu0
      %v2237 = vadd.f32 %v2139, %v2236
      %v2238 = vpop.f32.mrb[0].mxu0
      %v2239 = vadd.f32 %v2144, %v2238
      %v2240 = vpop.f32.mrb[0].mxu0
      %v2241 = vadd.f32 %v2144, %v2240
      %2242 = vmatprep.mubr.bf16.mxu0 0
      %2243 = vmatmul.mubr.bf16.gmra.mrb[0].mxu0 %v2184
      %v2244 = vpop.f32.mrb[0].mxu0
      %v2245 = vadd.f32 %v2149, %v2244
      %v2246 = vpop.f32.mrb[0].mxu0
      %v2247 = vadd.f32 %v2149, %v2246
      %v2248 = vpop.f32.mrb[0].mxu0
      %v2249 = vadd.f32 %v2154, %v2248
      %v2250 = vpop.f32.mrb[0].mxu0
      %v2251 = vadd.f32 %v2154, %v2250
      %2252 = vmatprep.mubr.bf16.mxu0 0
      %2253 = vmatmul.mubr.bf16.gmra.mrb[0].mxu0 %v2185
      %v2254 = vpop.f32.mrb[0].mxu0
      %v2255 = vadd.f32 %v2159, %v2254
      %v2256 = vpop.f32.mrb[0].mxu0
      %v2257 = vadd.f32 %v2159, %v2256
      %v2258 = vpop.f32.mrb[0].mxu0
      %v2259 = vadd.f32 %v2164, %v2258
      %v2260 = vpop.f32.mrb[0].mxu0
      %v2261 = vadd.f32 %v2164, %v2260
      %2262 = vdwg.mxu0
      %2263 = vmatprep.subr.bf16.mxu0 %v2089
      %2264 = vmatpush1.bf16.msra.mxu0 %v2088
      %2265 = vmatprep.subr.bf16.mxu0 %v2093
      %2266 = vmatpush1.bf16.msra.mxu0 %v2092
      %2267 = vmatprep.subr.bf16.mxu0 %v2097
      %2268 = vmatpush1.bf16.msra.mxu0 %v2096
      %2269 = vmatprep.subr.bf16.mxu0 %v2101
      %2270 = vmatpush1.bf16.msra.mxu0 %v2100
      %2271 = vmatprep.subr.bf16.mxu0 %v2105
      %2272 = vmatpush1.bf16.msra.mxu0 %v2104
      %2273 = vmatprep.subr.bf16.mxu0 %v2109
      %2274 = vmatpush1.bf16.msra.mxu0 %v2108
      %2275 = vmatprep.subr.bf16.mxu0 %v2113
      %2276 = vmatpush1.bf16.msra.mxu0 %v2112
      %2277 = vmatprep.subr.bf16.mxu0 %v2117
      %2278 = vmatpush1.bf16.msra.mxu0 %v2116
      %2279 = vmatprep.subr.bf16.mxu0 0
      %2280 = vmatpush1.bf16.msra.mxu0 0
      %2281 = vmatprep.subr.bf16.mxu0 0
      %2282 = vmatpush1.bf16.msra.mxu0 0
      %2283 = vmatprep.subr.bf16.mxu0 0
      %2284 = vmatpush1.bf16.msra.mxu0 0
      %2285 = vmatprep.subr.bf16.mxu0 0
      %2286 = vmatpush1.bf16.msra.mxu0 0
      %2287 = vmatprep.subr.bf16.mxu0 0
      %2288 = vmatpush1.bf16.msra.mxu0 0
      %2289 = vmatprep.subr.bf16.mxu0 0
      %2290 = vmatpush1.bf16.msra.mxu0 0
      %2291 = vmatprep.subr.bf16.mxu0 0
      %2292 = vmatpush1.bf16.msra.mxu0 0
      %2293 = vmatprep.subr.bf16.mxu0 0
      %2294 = vmatpush1.bf16.msra.mxu0 0
      %2295 = vmatprep.mubr.bf16.mxu0 0
      %2296 = vmatmul.mubr.bf16.gmra.mrb[0].mxu0 %v2182
      %v2297 = vpop.f32.mrb[0].mxu0
      %v2298 = vadd.f32 %v2129, %v2297
      %v2299 = vpop.f32.mrb[0].mxu0
      %v2300 = vadd.f32 %v2129, %v2299
      %v2301 = vpop.f32.mrb[0].mxu0
      %v2302 = vadd.f32 %v2134, %v2301
      %v2303 = vpop.f32.mrb[0].mxu0
      %v2304 = vadd.f32 %v2134, %v2303
      %2305 = vmatprep.mubr.bf16.mxu0 0
      %2306 = vmatmul.mubr.bf16.gmra.mrb[0].mxu0 %v2183
      %v2307 = vpop.f32.mrb[0].mxu0
      %v2308 = vadd.f32 %v2139, %v2307
      %v2309 = vpop.f32.mrb[0].mxu0
      %v2310 = vadd.f32 %v2139, %v2309
      %v2311 = vpop.f32.mrb[0].mxu0
      %v2312 = vadd.f32 %v2144, %v2311
      %v2313 = vpop.f32.mrb[0].mxu0
      %v2314 = vadd.f32 %v2144, %v2313
      %2315 = vmatprep.mubr.bf16.mxu0 0
      %2316 = vmatmul.mubr.bf16.gmra.mrb[0].mxu0 %v2184
      %v2317 = vpop.f32.mrb[0].mxu0
      %v2318 = vadd.f32 %v2149, %v2317
      %v2319 = vpop.f32.mrb[0].mxu0
      %v2320 = vadd.f32 %v2149, %v2319
      %v2321 = vpop.f32.mrb[0].mxu0
      %v2322 = vadd.f32 %v2154, %v2321
      %v2323 = vpop.f32.mrb[0].mxu0
      %v2324 = vadd.f32 %v2154, %v2323
      %2325 = vmatprep.mubr.bf16.mxu0 0
      %2326 = vmatmul.mubr.bf16.gmra.mrb[0].mxu0 %v2185
      %v2327 = vpop.f32.mrb[0].mxu0
      %v2328 = vadd.f32 %v2159, %v2327
      %v2329 = vpop.f32.mrb[0].mxu0
      %v2330 = vadd.f32 %v2159, %v2329
      %v2331 = vpop.f32.mrb[0].mxu0
      %v2332 = vadd.f32 %v2164, %v2331
      %v2333 = vpop.f32.mrb[0].mxu0
      %v2334 = vadd.f32 %v2164, %v2333
      %2335 = vdwg.mxu0
      %v2336 = vmax.f32 %v2225, 0.0
      %v2337 = vmax.f32 %v2227, 0.0
      %v2338 = vmax.f32 %v2298, 0.0
      %v2339 = vmax.f32 %v2300, 0.0
      %v2340 = vmax.f32 %v2229, 0.0
      %v2341 = vmax.f32 %v2231, 0.0
      %v2342 = vmax.f32 %v2302, 0.0
      %v2343 = vmax.f32 %v2304, 0.0
      %v2344 = vmax.f32 %v2235, 0.0
      %v2345 = vmax.f32 %v2237, 0.0
      %v2346 = vmax.f32 %v2308, 0.0
      %v2347 = vmax.f32 %v2310, 0.0
      %v2348 = vmax.f32 %v2239, 0.0
      %v2349 = vmax.f32 %v2241, 0.0
      %v2350 = vmax.f32 %v2312, 0.0
      %v2351 = vmax.f32 %v2314, 0.0
      %v2352 = vmax.f32 %v2245, 0.0
      %v2353 = vmax.f32 %v2247, 0.0
      %v2354 = vmax.f32 %v2318, 0.0
      %v2355 = vmax.f32 %v2320, 0.0
      %v2356 = vmax.f32 %v2249, 0.0
      %v2357 = vmax.f32 %v2251, 0.0
      %v2358 = vmax.f32 %v2322, 0.0
      %v2359 = vmax.f32 %v2324, 0.0
      %v2360 = vmax.f32 %v2255, 0.0
      %v2361 = vmax.f32 %v2257, 0.0
      %v2362 = vmax.f32 %v2328, 0.0
      %v2363 = vmax.f32 %v2330, 0.0
      %v2364 = vmax.f32 %v2259, 0.0
      %v2365 = vmax.f32 %v2261, 0.0
      %v2366 = vmax.f32 %v2332, 0.0
      %v2367 = vmax.f32 %v2334, 0.0
      %v2368 = vld [vmem:[#allocation2] sm:$0xff]
      %v2369 = vld [vmem:[#allocation2 + $0x8] sm:$0xff]
      %v2370 = vld [vmem:[#allocation2 + $0x10] sm:$0xff]
      %v2371 = vld [vmem:[#allocation2 + $0x18] sm:$0xff]
      %v2372 = vld [vmem:[#allocation2 + $0x20] sm:$0xff]
      %v2373 = vld [vmem:[#allocation2 + $0x28] sm:$0xff]
      %v2374 = vld [vmem:[#allocation2 + $0x30] sm:$0xff]
      %v2375 = vld [vmem:[#allocation2 + $0x38] sm:$0xff]
      %v2376 = vmax.f32 %v2336, %v2337
      %v2377 = vmax.f32 %v2376, %v2338
      %v2378 = vmax.f32 %v2377, %v2339
      %2379 = vmax.xlane.f32.xlu0 %v2378
      %v2380 = vpop.xlane.xlu0 %2379
      %v2381 = vmax.f32 %v2340, %v2341
      %v2382 = vmax.f32 %v2381, %v2342
      %v2383 = vmax.f32 %v2382, %v2343
      %2384 = vmax.xlane.f32.xlu0 %v2383
      %v2385 = vpop.xlane.xlu0 %2384
      %v2386 = vmax.f32 %v2344, %v2345
      %v2387 = vmax.f32 %v2386, %v2346
      %v2388 = vmax.f32 %v2387, %v2347
      %2389 = vmax.xlane.f32.xlu0 %v2388
      %v2390 = vpop.xlane.xlu0 %2389
      %v2391 = vmax.f32 %v2348, %v2349
      %v2392 = vmax.f32 %v2391, %v2350
      %v2393 = vmax.f32 %v2392, %v2351
      %2394 = vmax.xlane.f32.xlu0 %v2393
      %v2395 = vpop.xlane.xlu0 %2394
      %v2396 = vmax.f32 %v2352, %v2353
      %v2397 = vmax.f32 %v2396, %v2354
      %v2398 = vmax.f32 %v2397, %v2355
      %2399 = vmax.xlane.f32.xlu0 %v2398
      %v2400 = vpop.xlane.xlu0 %2399
      %v2401 = vmax.f32 %v2356, %v2357
      %v2402 = vmax.f32 %v2401, %v2358
      %v2403 = vmax.f32 %v2402, %v2359
      %2404 = vmax.xlane.f32.xlu0 %v2403
      %v2405 = vpop.xlane.xlu0 %2404
      %v2406 = vmax.f32 %v2360, %v2361
      %v2407 = vmax.f32 %v2406, %v2362
      %v2408 = vmax.f32 %v2407, %v2363
      %2409 = vmax.xlane.f32.xlu0 %v2408
      %v2410 = vpop.xlane.xlu0 %2409
      %v2411 = vmax.f32 %v2364, %v2365
      %v2412 = vmax.f32 %v2411, %v2366
      %v2413 = vmax.f32 %v2412, %v2367
      %2414 = vmax.xlane.f32.xlu0 %v2413
      %v2415 = vpop.xlane.xlu0 %2414
      %v2416 = vmax.f32 %v2368, %v2380
      %v2417 = vmax.f32 %v2369, %v2385
      %v2418 = vmax.f32 %v2370, %v2390
      %v2419 = vmax.f32 %v2371, %v2395
      %v2420 = vmax.f32 %v2372, %v2400
      %v2421 = vmax.f32 %v2373, %v2405
      %v2422 = vmax.f32 %v2374, %v2410
      %v2423 = vmax.f32 %v2375, %v2415
      %vm2424 = vcmask 7168
      %2425 = vst.msk [vmem:[#allocation2] sm:$0xff] %vm2424, %v2416
      %2426 = vst.msk [vmem:[#allocation2 + $0x8] sm:$0xff] %vm2424, %v2417
      %2427 = vst.msk [vmem:[#allocation2 + $0x10] sm:$0xff] %vm2424, %v2418
      %2428 = vst.msk [vmem:[#allocation2 + $0x18] sm:$0xff] %vm2424, %v2419
      %2429 = vst.msk [vmem:[#allocation2 + $0x20] sm:$0xff] %vm2424, %v2420
      %2430 = vst.msk [vmem:[#allocation2 + $0x28] sm:$0xff] %vm2424, %v2421
      %2431 = vst.msk [vmem:[#allocation2 + $0x30] sm:$0xff] %vm2424, %v2422
      %2432 = vst.msk [vmem:[#allocation2 + $0x38] sm:$0xff] %vm2424, %v2423
      %p2433 = scmp.eq.s32.totalorder %s31, 1
      // Predicated region
      $region85: #{pointnet_forward.1} parent=79 // pred_check
        %p2434 = pneg %p2433
      $region86: #{pointnet_forward.1} parent=79 // pred_check_branch
        %2436 = sbr.rel (%p2434) target = $region88
      $region87: #{pointnet_forward.1} parent=79 // pred_region
        %v2437 = vld [vmem:[#allocation2] sm:$0xff]
        %v2438 = vld [vmem:[#allocation2 + $0x8] sm:$0xff]
        %v2439 = vld [vmem:[#allocation2 + $0x10] sm:$0xff]
        %v2440 = vld [vmem:[#allocation2 + $0x18] sm:$0xff]
        %v2441 = vld [vmem:[#allocation2 + $0x20] sm:$0xff]
        %v2442 = vld [vmem:[#allocation2 + $0x28] sm:$0xff]
        %v2443 = vld [vmem:[#allocation2 + $0x30] sm:$0xff]
        %v2444 = vld [vmem:[#allocation2 + $0x38] sm:$0xff]
        %v2445 = vld [vmem:[%s11] sm:$0xf]
        %v2446 = vld [vmem:[%s11 + $0x4] sm:$0xf]
        %v2447 = vld [vmem:[%s11 + $0x8] sm:$0xf]
        %v2448 = vld [vmem:[%s11 + $0xc] sm:$0xf]
        %v2449 = vld [vmem:[%s11 + $0x10] sm:$0xf]
        %v2450 = vld [vmem:[%s11 + $0x14] sm:$0xf]
        %v2451 = vld [vmem:[%s11 + $0x18] sm:$0xf]
        %v2452 = vld [vmem:[%s11 + $0x1c] sm:$0xf]
        %v2453 = vld [vmem:[%s11 + $0x20] sm:$0xf]
        %v2454 = vld [vmem:[%s11 + $0x24] sm:$0xf]
        %v2455 = vld [vmem:[%s11 + $0x28] sm:$0xf]
        %v2456 = vld [vmem:[%s11 + $0x2c] sm:$0xf]
        %v2457 = vld [vmem:[%s11 + $0x30] sm:$0xf]
        %v2458 = vld [vmem:[%s11 + $0x34] sm:$0xf]
        %v2459 = vld [vmem:[%s11 + $0x38] sm:$0xf]
        %v2460 = vld [vmem:[%s11 + $0x3c] sm:$0xf]
        %v2461 = vld [vmem:[%s11 + $0x40] sm:$0xf]
        %v2462 = vld [vmem:[%s11 + $0x44] sm:$0xf]
        %v2463 = vld [vmem:[%s11 + $0x48] sm:$0xf]
        %v2464 = vld [vmem:[%s11 + $0x4c] sm:$0xf]
        %v2465 = vld [vmem:[%s11 + $0x50] sm:$0xf]
        %v2466 = vld [vmem:[%s11 + $0x54] sm:$0xf]
        %v2467 = vld [vmem:[%s11 + $0x58] sm:$0xf]
        %v2468 = vld [vmem:[%s11 + $0x5c] sm:$0xf]
        %v2469 = vld [vmem:[%s11 + $0x60] sm:$0xf]
        %v2470 = vld [vmem:[%s11 + $0x64] sm:$0xf]
        %v2471 = vld [vmem:[%s11 + $0x68] sm:$0xf]
        %v2472 = vld [vmem:[%s11 + $0x6c] sm:$0xf]
        %v2473 = vld [vmem:[%s11 + $0x70] sm:$0xf]
        %v2474 = vld [vmem:[%s11 + $0x74] sm:$0xf]
        %v2475 = vld [vmem:[%s11 + $0x78] sm:$0xf]
        %v2476 = vld [vmem:[%s11 + $0x7c] sm:$0xf]
        %v2477 = vld [vmem:[%s11 + $0x80] sm:$0xf]
        %v2478 = vld [vmem:[%s11 + $0x84] sm:$0xf]
        %v2479 = vld [vmem:[%s11 + $0x88] sm:$0xf]
        %v2480 = vld [vmem:[%s11 + $0x8c] sm:$0xf]
        %v2481 = vld [vmem:[%s11 + $0x90] sm:$0xf]
        %v2482 = vld [vmem:[%s11 + $0x94] sm:$0xf]
        %v2483 = vld [vmem:[%s11 + $0x98] sm:$0xf]
        %v2484 = vld [vmem:[%s11 + $0x9c] sm:$0xf]
        %v2485 = vld [vmem:[%s11 + $0xa0] sm:$0xf]
        %v2486 = vld [vmem:[%s11 + $0xa4] sm:$0xf]
        %v2487 = vld [vmem:[%s11 + $0xa8] sm:$0xf]
        %v2488 = vld [vmem:[%s11 + $0xac] sm:$0xf]
        %v2489 = vld [vmem:[%s11 + $0xb0] sm:$0xf]
        %v2490 = vld [vmem:[%s11 + $0xb4] sm:$0xf]
        %v2491 = vld [vmem:[%s11 + $0xb8] sm:$0xf]
        %v2492 = vld [vmem:[%s11 + $0xbc] sm:$0xf]
        %v2493 = vld [vmem:[%s11 + $0xc0] sm:$0xf]
        %v2494 = vld [vmem:[%s11 + $0xc4] sm:$0xf]
        %v2495 = vld [vmem:[%s11 + $0xc8] sm:$0xf]
        %v2496 = vld [vmem:[%s11 + $0xcc] sm:$0xf]
        %v2497 = vld [vmem:[%s11 + $0xd0] sm:$0xf]
        %v2498 = vld [vmem:[%s11 + $0xd4] sm:$0xf]
        %v2499 = vld [vmem:[%s11 + $0xd8] sm:$0xf]
        %v2500 = vld [vmem:[%s11 + $0xdc] sm:$0xf]
        %v2501 = vld [vmem:[%s11 + $0xe0] sm:$0xf]
        %v2502 = vld [vmem:[%s11 + $0xe4] sm:$0xf]
        %v2503 = vld [vmem:[%s11 + $0xe8] sm:$0xf]
        %v2504 = vld [vmem:[%s11 + $0xec] sm:$0xf]
        %v2505 = vld [vmem:[%s11 + $0xf0] sm:$0xf]
        %v2506 = vld [vmem:[%s11 + $0xf4] sm:$0xf]
        %v2507 = vld [vmem:[%s11 + $0xf8] sm:$0xf]
        %v2508 = vld [vmem:[%s11 + $0xfc] sm:$0xf]
        %v2509 = vpack.c.bf16 %v2438, %v2437
        %v2510 = vpack.c.bf16 %v2440, %v2439
        %v2511 = vpack.c.bf16 %v2442, %v2441
        %v2512 = vpack.c.bf16 %v2444, %v2443
        %v2513 = vld [vmem:[%s12] sm:$0xff]
        %v2514 = vld [vmem:[%s12 + $0x8] sm:$0xff]
        %v2515 = vld [vmem:[%s12 + $0x10] sm:$0xff]
        %v2516 = vld [vmem:[%s12 + $0x18] sm:$0xff]
        %v2517 = vld [vmem:[%s12 + $0x20] sm:$0xff]
        %v2518 = vld [vmem:[%s12 + $0x28] sm:$0xff]
        %v2519 = vld [vmem:[%s12 + $0x30] sm:$0xff]
        %v2520 = vld [vmem:[%s12 + $0x38] sm:$0xff]
        %v2521 = vld [vmem:[%s12 + $0x40] sm:$0xff]
        %v2522 = vld [vmem:[%s12 + $0x48] sm:$0xff]
        %v2523 = vld [vmem:[%s12 + $0x50] sm:$0xff]
        %v2524 = vld [vmem:[%s12 + $0x58] sm:$0xff]
        %v2525 = vld [vmem:[%s12 + $0x60] sm:$0xff]
        %v2526 = vld [vmem:[%s12 + $0x68] sm:$0xff]
        %v2527 = vld [vmem:[%s12 + $0x70] sm:$0xff]
        %v2528 = vld [vmem:[%s12 + $0x78] sm:$0xff]
        %v2529 = vld [vmem:[%s12 + $0x80] sm:$0xff]
        %v2530 = vld [vmem:[%s12 + $0x88] sm:$0xff]
        %v2531 = vld [vmem:[%s12 + $0x90] sm:$0xff]
        %v2532 = vld [vmem:[%s12 + $0x98] sm:$0xff]
        %v2533 = vld [vmem:[%s12 + $0xa0] sm:$0xff]
        %v2534 = vld [vmem:[%s12 + $0xa8] sm:$0xff]
        %v2535 = vld [vmem:[%s12 + $0xb0] sm:$0xff]
        %v2536 = vld [vmem:[%s12 + $0xb8] sm:$0xff]
        %v2537 = vld [vmem:[%s12 + $0xc0] sm:$0xff]
        %v2538 = vld [vmem:[%s12 + $0xc8] sm:$0xff]
        %v2539 = vld [vmem:[%s12 + $0xd0] sm:$0xff]
        %v2540 = vld [vmem:[%s12 + $0xd8] sm:$0xff]
        %v2541 = vld [vmem:[%s12 + $0xe0] sm:$0xff]
        %v2542 = vld [vmem:[%s12 + $0xe8] sm:$0xff]
        %v2543 = vld [vmem:[%s12 + $0xf0] sm:$0xff]
        %v2544 = vld [vmem:[%s12 + $0xf8] sm:$0xff]
        %v2545 = vld [vmem:[%s12 + $0x100] sm:$0xff]
        %v2546 = vld [vmem:[%s12 + $0x108] sm:$0xff]
        %v2547 = vld [vmem:[%s12 + $0x110] sm:$0xff]
        %v2548 = vld [vmem:[%s12 + $0x118] sm:$0xff]
        %v2549 = vld [vmem:[%s12 + $0x120] sm:$0xff]
        %v2550 = vld [vmem:[%s12 + $0x128] sm:$0xff]
        %v2551 = vld [vmem:[%s12 + $0x130] sm:$0xff]
        %v2552 = vld [vmem:[%s12 + $0x138] sm:$0xff]
        %v2553 = vld [vmem:[%s12 + $0x140] sm:$0xff]
        %v2554 = vld [vmem:[%s12 + $0x148] sm:$0xff]
        %v2555 = vld [vmem:[%s12 + $0x150] sm:$0xff]
        %v2556 = vld [vmem:[%s12 + $0x158] sm:$0xff]
        %v2557 = vld [vmem:[%s12 + $0x160] sm:$0xff]
        %v2558 = vld [vmem:[%s12 + $0x168] sm:$0xff]
        %v2559 = vld [vmem:[%s12 + $0x170] sm:$0xff]
        %v2560 = vld [vmem:[%s12 + $0x178] sm:$0xff]
        %v2561 = vld [vmem:[%s12 + $0x180] sm:$0xff]
        %v2562 = vld [vmem:[%s12 + $0x188] sm:$0xff]
        %v2563 = vld [vmem:[%s12 + $0x190] sm:$0xff]
        %v2564 = vld [vmem:[%s12 + $0x198] sm:$0xff]
        %v2565 = vld [vmem:[%s12 + $0x1a0] sm:$0xff]
        %v2566 = vld [vmem:[%s12 + $0x1a8] sm:$0xff]
        %v2567 = vld [vmem:[%s12 + $0x1b0] sm:$0xff]
        %v2568 = vld [vmem:[%s12 + $0x1b8] sm:$0xff]
        %v2569 = vld [vmem:[%s12 + $0x1c0] sm:$0xff]
        %v2570 = vld [vmem:[%s12 + $0x1c8] sm:$0xff]
        %v2571 = vld [vmem:[%s12 + $0x1d0] sm:$0xff]
        %v2572 = vld [vmem:[%s12 + $0x1d8] sm:$0xff]
        %v2573 = vld [vmem:[%s12 + $0x1e0] sm:$0xff]
        %v2574 = vld [vmem:[%s12 + $0x1e8] sm:$0xff]
        %v2575 = vld [vmem:[%s12 + $0x1f0] sm:$0xff]
        %v2576 = vld [vmem:[%s12 + $0x1f8] sm:$0xff]
        %v2641 = vunpack.c.l.b16 %v2445
        %v2642 = vunpack.c.l.b16 %v2446
        %v2643 = vunpack.c.l.b16 %v2447
        %v2644 = vunpack.c.l.b16 %v2448
        %v2645 = vunpack.c.l.b16 %v2449
        %v2646 = vunpack.c.l.b16 %v2450
        %v2647 = vunpack.c.l.b16 %v2451
        %v2648 = vunpack.c.l.b16 %v2452
        %v2649 = vunpack.c.l.b16 %v2453
        %v2650 = vunpack.c.l.b16 %v2454
        %v2651 = vunpack.c.l.b16 %v2455
        %v2652 = vunpack.c.l.b16 %v2456
        %v2653 = vunpack.c.l.b16 %v2457
        %v2654 = vunpack.c.l.b16 %v2458
        %v2655 = vunpack.c.l.b16 %v2459
        %v2656 = vunpack.c.l.b16 %v2460
        %v2657 = vunpack.c.l.b16 %v2461
        %v2658 = vunpack.c.l.b16 %v2462
        %v2659 = vunpack.c.l.b16 %v2463
        %v2660 = vunpack.c.l.b16 %v2464
        %v2661 = vunpack.c.l.b16 %v2465
        %v2662 = vunpack.c.l.b16 %v2466
        %v2663 = vunpack.c.l.b16 %v2467
        %v2664 = vunpack.c.l.b16 %v2468
        %v2665 = vunpack.c.l.b16 %v2469
        %v2666 = vunpack.c.l.b16 %v2470
        %v2667 = vunpack.c.l.b16 %v2471
        %v2668 = vunpack.c.l.b16 %v2472
        %v2669 = vunpack.c.l.b16 %v2473
        %v2670 = vunpack.c.l.b16 %v2474
        %v2671 = vunpack.c.l.b16 %v2475
        %v2672 = vunpack.c.l.b16 %v2476
        %v2673 = vunpack.c.l.b16 %v2477
        %v2674 = vunpack.c.l.b16 %v2478
        %v2675 = vunpack.c.l.b16 %v2479
        %v2676 = vunpack.c.l.b16 %v2480
        %v2677 = vunpack.c.l.b16 %v2481
        %v2678 = vunpack.c.l.b16 %v2482
        %v2679 = vunpack.c.l.b16 %v2483
        %v2680 = vunpack.c.l.b16 %v2484
        %v2681 = vunpack.c.l.b16 %v2485
        %v2682 = vunpack.c.l.b16 %v2486
        %v2683 = vunpack.c.l.b16 %v2487
        %v2684 = vunpack.c.l.b16 %v2488
        %v2685 = vunpack.c.l.b16 %v2489
        %v2686 = vunpack.c.l.b16 %v2490
        %v2687 = vunpack.c.l.b16 %v2491
        %v2688 = vunpack.c.l.b16 %v2492
        %v2689 = vunpack.c.l.b16 %v2493
        %v2690 = vunpack.c.l.b16 %v2494
        %v2691 = vunpack.c.l.b16 %v2495
        %v2692 = vunpack.c.l.b16 %v2496
        %v2693 = vunpack.c.l.b16 %v2497
        %v2694 = vunpack.c.l.b16 %v2498
        %v2695 = vunpack.c.l.b16 %v2499
        %v2696 = vunpack.c.l.b16 %v2500
        %v2697 = vunpack.c.l.b16 %v2501
        %v2698 = vunpack.c.l.b16 %v2502
        %v2699 = vunpack.c.l.b16 %v2503
        %v2700 = vunpack.c.l.b16 %v2504
        %v2701 = vunpack.c.l.b16 %v2505
        %v2702 = vunpack.c.l.b16 %v2506
        %v2703 = vunpack.c.l.b16 %v2507
        %v2704 = vunpack.c.l.b16 %v2508
        %v2705 = vpack.c.b16 %v2642, %v2641
        %v2706 = vpack.c.b16 %v2644, %v2643
        %v2707 = vpack.c.b16 %v2646, %v2645
        %v2708 = vpack.c.b16 %v2648, %v2647
        %v2709 = vpack.c.b16 %v2650, %v2649
        %v2710 = vpack.c.b16 %v2652, %v2651
        %v2711 = vpack.c.b16 %v2654, %v2653
        %v2712 = vpack.c.b16 %v2656, %v2655
        %v2713 = vpack.c.b16 %v2658, %v2657
        %v2714 = vpack.c.b16 %v2660, %v2659
        %v2715 = vpack.c.b16 %v2662, %v2661
        %v2716 = vpack.c.b16 %v2664, %v2663
        %v2717 = vpack.c.b16 %v2666, %v2665
        %v2718 = vpack.c.b16 %v2668, %v2667
        %v2719 = vpack.c.b16 %v2670, %v2669
        %v2720 = vpack.c.b16 %v2672, %v2671
        %v2721 = vpack.c.b16 %v2674, %v2673
        %v2722 = vpack.c.b16 %v2676, %v2675
        %v2723 = vpack.c.b16 %v2678, %v2677
        %v2724 = vpack.c.b16 %v2680, %v2679
        %v2725 = vpack.c.b16 %v2682, %v2681
        %v2726 = vpack.c.b16 %v2684, %v2683
        %v2727 = vpack.c.b16 %v2686, %v2685
        %v2728 = vpack.c.b16 %v2688, %v2687
        %v2729 = vpack.c.b16 %v2690, %v2689
        %v2730 = vpack.c.b16 %v2692, %v2691
        %v2731 = vpack.c.b16 %v2694, %v2693
        %v2732 = vpack.c.b16 %v2696, %v2695
        %v2733 = vpack.c.b16 %v2698, %v2697
        %v2734 = vpack.c.b16 %v2700, %v2699
        %v2735 = vpack.c.b16 %v2702, %v2701
        %v2736 = vpack.c.b16 %v2704, %v2703
        %v2738 = vsel %vm1123, %v2705, 0
        %v2741 = vsel %vm1123, %v2706, 0
        %v2744 = vsel %vm1123, %v2707, 0
        %v2747 = vsel %vm1123, %v2708, 0
        %v2750 = vsel %vm1123, %v2709, 0
        %v2753 = vsel %vm1123, %v2710, 0
        %v2756 = vsel %vm1123, %v2711, 0
        %v2759 = vsel %vm1123, %v2712, 0
        %v2762 = vsel %vm1123, %v2713, 0
        %v2765 = vsel %vm1123, %v2714, 0
        %v2768 = vsel %vm1123, %v2715, 0
        %v2771 = vsel %vm1123, %v2716, 0
        %v2774 = vsel %vm1123, %v2717, 0
        %v2777 = vsel %vm1123, %v2718, 0
        %v2780 = vsel %vm1123, %v2719, 0
        %v2783 = vsel %vm1123, %v2720, 0
        %v2786 = vsel %vm1123, %v2721, 0
        %v2789 = vsel %vm1123, %v2722, 0
        %v2792 = vsel %vm1123, %v2723, 0
        %v2795 = vsel %vm1123, %v2724, 0
        %v2798 = vsel %vm1123, %v2725, 0
        %v2801 = vsel %vm1123, %v2726, 0
        %v2804 = vsel %vm1123, %v2727, 0
        %v2807 = vsel %vm1123, %v2728, 0
        %v2810 = vsel %vm1123, %v2729, 0
        %v2813 = vsel %vm1123, %v2730, 0
        %v2816 = vsel %vm1123, %v2731, 0
        %v2819 = vsel %vm1123, %v2732, 0
        %v2822 = vsel %vm1123, %v2733, 0
        %v2825 = vsel %vm1123, %v2734, 0
        %v2828 = vsel %vm1123, %v2735, 0
        %v2831 = vsel %vm1123, %v2736, 0
        %2833 = vmatprep.subr.bf16.mxu0 0
        %2834 = vmatpush1.bf16.msra.mxu0 %v2509
        %2835 = vmatprep.subr.bf16.mxu0 0
        %2836 = vmatpush1.bf16.msra.mxu0 %v2510
        %2837 = vmatprep.subr.bf16.mxu0 0
        %2838 = vmatpush1.bf16.msra.mxu0 %v2511
        %2839 = vmatprep.subr.bf16.mxu0 0
        %2840 = vmatpush1.bf16.msra.mxu0 %v2512
        %2841 = vmatprep.subr.bf16.mxu0 0
        %2842 = vmatpush1.bf16.msra.mxu0 0
        %2843 = vmatprep.subr.bf16.mxu0 0
        %2844 = vmatpush1.bf16.msra.mxu0 0
        %2845 = vmatprep.subr.bf16.mxu0 0
        %2846 = vmatpush1.bf16.msra.mxu0 0
        %2847 = vmatprep.subr.bf16.mxu0 0
        %2848 = vmatpush1.bf16.msra.mxu0 0
        %2849 = vmatprep.subr.bf16.mxu0 0
        %2850 = vmatpush1.bf16.msra.mxu0 0
        %2851 = vmatprep.subr.bf16.mxu0 0
        %2852 = vmatpush1.bf16.msra.mxu0 0
        %2853 = vmatprep.subr.bf16.mxu0 0
        %2854 = vmatpush1.bf16.msra.mxu0 0
        %2855 = vmatprep.subr.bf16.mxu0 0
        %2856 = vmatpush1.bf16.msra.mxu0 0
        %2857 = vmatprep.subr.bf16.mxu0 0
        %2858 = vmatpush1.bf16.msra.mxu0 0
        %2859 = vmatprep.subr.bf16.mxu0 0
        %2860 = vmatpush1.bf16.msra.mxu0 0
        %2861 = vmatprep.subr.bf16.mxu0 0
        %2862 = vmatpush1.bf16.msra.mxu0 0
        %2863 = vmatprep.subr.bf16.mxu0 0
        %2864 = vmatpush1.bf16.msra.mxu0 0
        %2865 = vmatprep.mubr.bf16.mxu0 0
        %2866 = vmatmul.mubr.bf16.gmra.mrb[0].mxu0 %v2738
        %v2867 = vpop.f32.mrb[0].mxu0
        %v2868 = vadd.f32 %v2513, %v2867
        %v2869 = vpop.f32.mrb[0].mxu0
        %v2870 = vpop.f32.mrb[0].mxu0
        %v2871 = vadd.f32 %v2514, %v2870
        %v2872 = vpop.f32.mrb[0].mxu0
        %2873 = vmatprep.mubr.bf16.mxu0 0
        %2874 = vmatmul.mubr.bf16.gmra.mrb[0].mxu0 %v2741
        %v2875 = vpop.f32.mrb[0].mxu0
        %v2876 = vadd.f32 %v2515, %v2875
        %v2877 = vpop.f32.mrb[0].mxu0
        %v2878 = vpop.f32.mrb[0].mxu0
        %v2879 = vadd.f32 %v2516, %v2878
        %v2880 = vpop.f32.mrb[0].mxu0
        %2881 = vmatprep.mubr.bf16.mxu0 0
        %2882 = vmatmul.mubr.bf16.gmra.mrb[0].mxu0 %v2744
        %v2883 = vpop.f32.mrb[0].mxu0
        %v2884 = vadd.f32 %v2517, %v2883
        %v2885 = vpop.f32.mrb[0].mxu0
        %v2886 = vpop.f32.mrb[0].mxu0
        %v2887 = vadd.f32 %v2518, %v2886
        %v2888 = vpop.f32.mrb[0].mxu0
        %2889 = vmatprep.mubr.bf16.mxu0 0
        %2890 = vmatmul.mubr.bf16.gmra.mrb[0].mxu0 %v2747
        %v2891 = vpop.f32.mrb[0].mxu0
        %v2892 = vadd.f32 %v2519, %v2891
        %v2893 = vpop.f32.mrb[0].mxu0
        %v2894 = vpop.f32.mrb[0].mxu0
        %v2895 = vadd.f32 %v2520, %v2894
        %v2896 = vpop.f32.mrb[0].mxu0
        %2897 = vmatprep.mubr.bf16.mxu0 0
        %2898 = vmatmul.mubr.bf16.gmra.mrb[0].mxu0 %v2750
        %v2899 = vpop.f32.mrb[0].mxu0
        %v2900 = vadd.f32 %v2521, %v2899
        %v2901 = vpop.f32.mrb[0].mxu0
        %v2902 = vpop.f32.mrb[0].mxu0
        %v2903 = vadd.f32 %v2522, %v2902
        %v2904 = vpop.f32.mrb[0].mxu0
        %2905 = vmatprep.mubr.bf16.mxu0 0
        %2906 = vmatmul.mubr.bf16.gmra.mrb[0].mxu0 %v2753
        %v2907 = vpop.f32.mrb[0].mxu0
        %v2908 = vadd.f32 %v2523, %v2907
        %v2909 = vpop.f32.mrb[0].mxu0
        %v2910 = vpop.f32.mrb[0].mxu0
        %v2911 = vadd.f32 %v2524, %v2910
        %v2912 = vpop.f32.mrb[0].mxu0
        %2913 = vmatprep.mubr.bf16.mxu0 0
        %2914 = vmatmul.mubr.bf16.gmra.mrb[0].mxu0 %v2756
        %v2915 = vpop.f32.mrb[0].mxu0
        %v2916 = vadd.f32 %v2525, %v2915
        %v2917 = vpop.f32.mrb[0].mxu0
        %v2918 = vpop.f32.mrb[0].mxu0
        %v2919 = vadd.f32 %v2526, %v2918
        %v2920 = vpop.f32.mrb[0].mxu0
        %2921 = vmatprep.mubr.bf16.mxu0 0
        %2922 = vmatmul.mubr.bf16.gmra.mrb[0].mxu0 %v2759
        %v2923 = vpop.f32.mrb[0].mxu0
        %v2924 = vadd.f32 %v2527, %v2923
        %v2925 = vpop.f32.mrb[0].mxu0
        %v2926 = vpop.f32.mrb[0].mxu0
        %v2927 = vadd.f32 %v2528, %v2926
        %v2928 = vpop.f32.mrb[0].mxu0
        %2929 = vmatprep.mubr.bf16.mxu0 0
        %2930 = vmatmul.mubr.bf16.gmra.mrb[0].mxu0 %v2762
        %v2931 = vpop.f32.mrb[0].mxu0
        %v2932 = vadd.f32 %v2529, %v2931
        %v2933 = vpop.f32.mrb[0].mxu0
        %v2934 = vpop.f32.mrb[0].mxu0
        %v2935 = vadd.f32 %v2530, %v2934
        %v2936 = vpop.f32.mrb[0].mxu0
        %2937 = vmatprep.mubr.bf16.mxu0 0
        %2938 = vmatmul.mubr.bf16.gmra.mrb[0].mxu0 %v2765
        %v2939 = vpop.f32.mrb[0].mxu0
        %v2940 = vadd.f32 %v2531, %v2939
        %v2941 = vpop.f32.mrb[0].mxu0
        %v2942 = vpop.f32.mrb[0].mxu0
        %v2943 = vadd.f32 %v2532, %v2942
        %v2944 = vpop.f32.mrb[0].mxu0
        %2945 = vmatprep.mubr.bf16.mxu0 0
        %2946 = vmatmul.mubr.bf16.gmra.mrb[0].mxu0 %v2768
        %v2947 = vpop.f32.mrb[0].mxu0
        %v2948 = vadd.f32 %v2533, %v2947
        %v2949 = vpop.f32.mrb[0].mxu0
        %v2950 = vpop.f32.mrb[0].mxu0
        %v2951 = vadd.f32 %v2534, %v2950
        %v2952 = vpop.f32.mrb[0].mxu0
        %2953 = vmatprep.mubr.bf16.mxu0 0
        %2954 = vmatmul.mubr.bf16.gmra.mrb[0].mxu0 %v2771
        %v2955 = vpop.f32.mrb[0].mxu0
        %v2956 = vadd.f32 %v2535, %v2955
        %v2957 = vpop.f32.mrb[0].mxu0
        %v2958 = vpop.f32.mrb[0].mxu0
        %v2959 = vadd.f32 %v2536, %v2958
        %v2960 = vpop.f32.mrb[0].mxu0
        %2961 = vmatprep.mubr.bf16.mxu0 0
        %2962 = vmatmul.mubr.bf16.gmra.mrb[0].mxu0 %v2774
        %v2963 = vpop.f32.mrb[0].mxu0
        %v2964 = vadd.f32 %v2537, %v2963
        %v2965 = vpop.f32.mrb[0].mxu0
        %v2966 = vpop.f32.mrb[0].mxu0
        %v2967 = vadd.f32 %v2538, %v2966
        %v2968 = vpop.f32.mrb[0].mxu0
        %2969 = vmatprep.mubr.bf16.mxu0 0
        %2970 = vmatmul.mubr.bf16.gmra.mrb[0].mxu0 %v2777
        %v2971 = vpop.f32.mrb[0].mxu0
        %v2972 = vadd.f32 %v2539, %v2971
        %v2973 = vpop.f32.mrb[0].mxu0
        %v2974 = vpop.f32.mrb[0].mxu0
        %v2975 = vadd.f32 %v2540, %v2974
        %v2976 = vpop.f32.mrb[0].mxu0
        %2977 = vmatprep.mubr.bf16.mxu0 0
        %2978 = vmatmul.mubr.bf16.gmra.mrb[0].mxu0 %v2780
        %v2979 = vpop.f32.mrb[0].mxu0
        %v2980 = vadd.f32 %v2541, %v2979
        %v2981 = vpop.f32.mrb[0].mxu0
        %v2982 = vpop.f32.mrb[0].mxu0
        %v2983 = vadd.f32 %v2542, %v2982
        %v2984 = vpop.f32.mrb[0].mxu0
        %2985 = vmatprep.mubr.bf16.mxu0 0
        %2986 = vmatmul.mubr.bf16.gmra.mrb[0].mxu0 %v2783
        %v2987 = vpop.f32.mrb[0].mxu0
        %v2988 = vadd.f32 %v2543, %v2987
        %v2989 = vpop.f32.mrb[0].mxu0
        %v2990 = vpop.f32.mrb[0].mxu0
        %v2991 = vadd.f32 %v2544, %v2990
        %v2992 = vpop.f32.mrb[0].mxu0
        %2993 = vmatprep.mubr.bf16.mxu0 0
        %2994 = vmatmul.mubr.bf16.gmra.mrb[0].mxu0 %v2786
        %v2995 = vpop.f32.mrb[0].mxu0
        %v2996 = vadd.f32 %v2545, %v2995
        %v2997 = vpop.f32.mrb[0].mxu0
        %v2998 = vpop.f32.mrb[0].mxu0
        %v2999 = vadd.f32 %v2546, %v2998
        %v3000 = vpop.f32.mrb[0].mxu0
        %3001 = vmatprep.mubr.bf16.mxu0 0
        %3002 = vmatmul.mubr.bf16.gmra.mrb[0].mxu0 %v2789
        %v3003 = vpop.f32.mrb[0].mxu0
        %v3004 = vadd.f32 %v2547, %v3003
        %v3005 = vpop.f32.mrb[0].mxu0
        %v3006 = vpop.f32.mrb[0].mxu0
        %v3007 = vadd.f32 %v2548, %v3006
        %v3008 = vpop.f32.mrb[0].mxu0
        %3009 = vmatprep.mubr.bf16.mxu0 0
        %3010 = vmatmul.mubr.bf16.gmra.mrb[0].mxu0 %v2792
        %v3011 = vpop.f32.mrb[0].mxu0
        %v3012 = vadd.f32 %v2549, %v3011
        %v3013 = vpop.f32.mrb[0].mxu0
        %v3014 = vpop.f32.mrb[0].mxu0
        %v3015 = vadd.f32 %v2550, %v3014
        %v3016 = vpop.f32.mrb[0].mxu0
        %3017 = vmatprep.mubr.bf16.mxu0 0
        %3018 = vmatmul.mubr.bf16.gmra.mrb[0].mxu0 %v2795
        %v3019 = vpop.f32.mrb[0].mxu0
        %v3020 = vadd.f32 %v2551, %v3019
        %v3021 = vpop.f32.mrb[0].mxu0
        %v3022 = vpop.f32.mrb[0].mxu0
        %v3023 = vadd.f32 %v2552, %v3022
        %v3024 = vpop.f32.mrb[0].mxu0
        %3025 = vmatprep.mubr.bf16.mxu0 0
        %3026 = vmatmul.mubr.bf16.gmra.mrb[0].mxu0 %v2798
        %v3027 = vpop.f32.mrb[0].mxu0
        %v3028 = vadd.f32 %v2553, %v3027
        %v3029 = vpop.f32.mrb[0].mxu0
        %v3030 = vpop.f32.mrb[0].mxu0
        %v3031 = vadd.f32 %v2554, %v3030
        %v3032 = vpop.f32.mrb[0].mxu0
        %3033 = vmatprep.mubr.bf16.mxu0 0
        %3034 = vmatmul.mubr.bf16.gmra.mrb[0].mxu0 %v2801
        %v3035 = vpop.f32.mrb[0].mxu0
        %v3036 = vadd.f32 %v2555, %v3035
        %v3037 = vpop.f32.mrb[0].mxu0
        %v3038 = vpop.f32.mrb[0].mxu0
        %v3039 = vadd.f32 %v2556, %v3038
        %v3040 = vpop.f32.mrb[0].mxu0
        %3041 = vmatprep.mubr.bf16.mxu0 0
        %3042 = vmatmul.mubr.bf16.gmra.mrb[0].mxu0 %v2804
        %v3043 = vpop.f32.mrb[0].mxu0
        %v3044 = vadd.f32 %v2557, %v3043
        %v3045 = vpop.f32.mrb[0].mxu0
        %v3046 = vpop.f32.mrb[0].mxu0
        %v3047 = vadd.f32 %v2558, %v3046
        %v3048 = vpop.f32.mrb[0].mxu0
        %3049 = vmatprep.mubr.bf16.mxu0 0
        %3050 = vmatmul.mubr.bf16.gmra.mrb[0].mxu0 %v2807
        %v3051 = vpop.f32.mrb[0].mxu0
        %v3052 = vadd.f32 %v2559, %v3051
        %v3053 = vpop.f32.mrb[0].mxu0
        %v3054 = vpop.f32.mrb[0].mxu0
        %v3055 = vadd.f32 %v2560, %v3054
        %v3056 = vpop.f32.mrb[0].mxu0
        %3057 = vmatprep.mubr.bf16.mxu0 0
        %3058 = vmatmul.mubr.bf16.gmra.mrb[0].mxu0 %v2810
        %v3059 = vpop.f32.mrb[0].mxu0
        %v3060 = vadd.f32 %v2561, %v3059
        %v3061 = vpop.f32.mrb[0].mxu0
        %v3062 = vpop.f32.mrb[0].mxu0
        %v3063 = vadd.f32 %v2562, %v3062
        %v3064 = vpop.f32.mrb[0].mxu0
        %3065 = vmatprep.mubr.bf16.mxu0 0
        %3066 = vmatmul.mubr.bf16.gmra.mrb[0].mxu0 %v2813
        %v3067 = vpop.f32.mrb[0].mxu0
        %v3068 = vadd.f32 %v2563, %v3067
        %v3069 = vpop.f32.mrb[0].mxu0
        %v3070 = vpop.f32.mrb[0].mxu0
        %v3071 = vadd.f32 %v2564, %v3070
        %v3072 = vpop.f32.mrb[0].mxu0
        %3073 = vmatprep.mubr.bf16.mxu0 0
        %3074 = vmatmul.mubr.bf16.gmra.mrb[0].mxu0 %v2816
        %v3075 = vpop.f32.mrb[0].mxu0
        %v3076 = vadd.f32 %v2565, %v3075
        %v3077 = vpop.f32.mrb[0].mxu0
        %v3078 = vpop.f32.mrb[0].mxu0
        %v3079 = vadd.f32 %v2566, %v3078
        %v3080 = vpop.f32.mrb[0].mxu0
        %3081 = vmatprep.mubr.bf16.mxu0 0
        %3082 = vmatmul.mubr.bf16.gmra.mrb[0].mxu0 %v2819
        %v3083 = vpop.f32.mrb[0].mxu0
        %v3084 = vadd.f32 %v2567, %v3083
        %v3085 = vpop.f32.mrb[0].mxu0
        %v3086 = vpop.f32.mrb[0].mxu0
        %v3087 = vadd.f32 %v2568, %v3086
        %v3088 = vpop.f32.mrb[0].mxu0
        %3089 = vmatprep.mubr.bf16.mxu0 0
        %3090 = vmatmul.mubr.bf16.gmra.mrb[0].mxu0 %v2822
        %v3091 = vpop.f32.mrb[0].mxu0
        %v3092 = vadd.f32 %v2569, %v3091
        %v3093 = vpop.f32.mrb[0].mxu0
        %v3094 = vpop.f32.mrb[0].mxu0
        %v3095 = vadd.f32 %v2570, %v3094
        %v3096 = vpop.f32.mrb[0].mxu0
        %3097 = vmatprep.mubr.bf16.mxu0 0
        %3098 = vmatmul.mubr.bf16.gmra.mrb[0].mxu0 %v2825
        %v3099 = vpop.f32.mrb[0].mxu0
        %v3100 = vadd.f32 %v2571, %v3099
        %v3101 = vpop.f32.mrb[0].mxu0
        %v3102 = vpop.f32.mrb[0].mxu0
        %v3103 = vadd.f32 %v2572, %v3102
        %v3104 = vpop.f32.mrb[0].mxu0
        %3105 = vmatprep.mubr.bf16.mxu0 0
        %3106 = vmatmul.mubr.bf16.gmra.mrb[0].mxu0 %v2828
        %v3107 = vpop.f32.mrb[0].mxu0
        %v3108 = vadd.f32 %v2573, %v3107
        %v3109 = vpop.f32.mrb[0].mxu0
        %v3110 = vpop.f32.mrb[0].mxu0
        %v3111 = vadd.f32 %v2574, %v3110
        %v3112 = vpop.f32.mrb[0].mxu0
        %3113 = vmatprep.mubr.bf16.mxu0 0
        %3114 = vmatmul.mubr.bf16.gmra.mrb[0].mxu0 %v2831
        %v3115 = vpop.f32.mrb[0].mxu0
        %v3116 = vadd.f32 %v2575, %v3115
        %v3117 = vpop.f32.mrb[0].mxu0
        %v3118 = vpop.f32.mrb[0].mxu0
        %v3119 = vadd.f32 %v2576, %v3118
        %v3120 = vpop.f32.mrb[0].mxu0
        %3121 = vdwg.mxu0
        %v3122 = vmax.f32 %v2868, 0.0
        %v3123 = vmax.f32 %v2871, 0.0
        %v3124 = vmax.f32 %v2876, 0.0
        %v3125 = vmax.f32 %v2879, 0.0
        %v3126 = vmax.f32 %v2884, 0.0
        %v3127 = vmax.f32 %v2887, 0.0
        %v3128 = vmax.f32 %v2892, 0.0
        %v3129 = vmax.f32 %v2895, 0.0
        %v3130 = vmax.f32 %v2900, 0.0
        %v3131 = vmax.f32 %v2903, 0.0
        %v3132 = vmax.f32 %v2908, 0.0
        %v3133 = vmax.f32 %v2911, 0.0
        %v3134 = vmax.f32 %v2916, 0.0
        %v3135 = vmax.f32 %v2919, 0.0
        %v3136 = vmax.f32 %v2924, 0.0
        %v3137 = vmax.f32 %v2927, 0.0
        %v3138 = vmax.f32 %v2932, 0.0
        %v3139 = vmax.f32 %v2935, 0.0
        %v3140 = vmax.f32 %v2940, 0.0
        %v3141 = vmax.f32 %v2943, 0.0
        %v3142 = vmax.f32 %v2948, 0.0
        %v3143 = vmax.f32 %v2951, 0.0
        %v3144 = vmax.f32 %v2956, 0.0
        %v3145 = vmax.f32 %v2959, 0.0
        %v3146 = vmax.f32 %v2964, 0.0
        %v3147 = vmax.f32 %v2967, 0.0
        %v3148 = vmax.f32 %v2972, 0.0
        %v3149 = vmax.f32 %v2975, 0.0
        %v3150 = vmax.f32 %v2980, 0.0
        %v3151 = vmax.f32 %v2983, 0.0
        %v3152 = vmax.f32 %v2988, 0.0
        %v3153 = vmax.f32 %v2991, 0.0
        %v3154 = vmax.f32 %v2996, 0.0
        %v3155 = vmax.f32 %v2999, 0.0
        %v3156 = vmax.f32 %v3004, 0.0
        %v3157 = vmax.f32 %v3007, 0.0
        %v3158 = vmax.f32 %v3012, 0.0
        %v3159 = vmax.f32 %v3015, 0.0
        %v3160 = vmax.f32 %v3020, 0.0
        %v3161 = vmax.f32 %v3023, 0.0
        %v3162 = vmax.f32 %v3028, 0.0
        %v3163 = vmax.f32 %v3031, 0.0
        %v3164 = vmax.f32 %v3036, 0.0
        %v3165 = vmax.f32 %v3039, 0.0
        %v3166 = vmax.f32 %v3044, 0.0
        %v3167 = vmax.f32 %v3047, 0.0
        %v3168 = vmax.f32 %v3052, 0.0
        %v3169 = vmax.f32 %v3055, 0.0
        %v3170 = vmax.f32 %v3060, 0.0
        %v3171 = vmax.f32 %v3063, 0.0
        %v3172 = vmax.f32 %v3068, 0.0
        %v3173 = vmax.f32 %v3071, 0.0
        %v3174 = vmax.f32 %v3076, 0.0
        %v3175 = vmax.f32 %v3079, 0.0
        %v3176 = vmax.f32 %v3084, 0.0
        %v3177 = vmax.f32 %v3087, 0.0
        %v3178 = vmax.f32 %v3092, 0.0
        %v3179 = vmax.f32 %v3095, 0.0
        %v3180 = vmax.f32 %v3100, 0.0
        %v3181 = vmax.f32 %v3103, 0.0
        %v3182 = vmax.f32 %v3108, 0.0
        %v3183 = vmax.f32 %v3111, 0.0
        %v3184 = vmax.f32 %v3116, 0.0
        %v3185 = vmax.f32 %v3119, 0.0
        %v3186 = vld [vmem:[%s13] sm:$0xf]
        %v3187 = vpack.c.bf16 %v3123, %v3122
        %v3188 = vpack.c.bf16 %v3125, %v3124
        %v3189 = vpack.c.bf16 %v3127, %v3126
        %v3190 = vpack.c.bf16 %v3129, %v3128
        %v3191 = vpack.c.bf16 %v3131, %v3130
        %v3192 = vpack.c.bf16 %v3133, %v3132
        %v3193 = vpack.c.bf16 %v3135, %v3134
        %v3194 = vpack.c.bf16 %v3137, %v3136
        %v3195 = vpack.c.bf16 %v3139, %v3138
        %v3196 = vpack.c.bf16 %v3141, %v3140
        %v3197 = vpack.c.bf16 %v3143, %v3142
        %v3198 = vpack.c.bf16 %v3145, %v3144
        %v3199 = vpack.c.bf16 %v3147, %v3146
        %v3200 = vpack.c.bf16 %v3149, %v3148
        %v3201 = vpack.c.bf16 %v3151, %v3150
        %v3202 = vpack.c.bf16 %v3153, %v3152
        %v3203 = vpack.c.bf16 %v3155, %v3154
        %v3204 = vpack.c.bf16 %v3157, %v3156
        %v3205 = vpack.c.bf16 %v3159, %v3158
        %v3206 = vpack.c.bf16 %v3161, %v3160
        %v3207 = vpack.c.bf16 %v3163, %v3162
        %v3208 = vpack.c.bf16 %v3165, %v3164
        %v3209 = vpack.c.bf16 %v3167, %v3166
        %v3210 = vpack.c.bf16 %v3169, %v3168
        %v3211 = vpack.c.bf16 %v3171, %v3170
        %v3212 = vpack.c.bf16 %v3173, %v3172
        %v3213 = vpack.c.bf16 %v3175, %v3174
        %v3214 = vpack.c.bf16 %v3177, %v3176
        %v3215 = vpack.c.bf16 %v3179, %v3178
        %v3216 = vpack.c.bf16 %v3181, %v3180
        %v3217 = vpack.c.bf16 %v3183, %v3182
        %v3218 = vpack.c.bf16 %v3185, %v3184
        %v3219 = vld [vmem:[%s14] sm:$0x3]
        %v3222 = vunpack.c.l.s4 1966171168
        %v3223 = vunpack.c.0.s8 %v3222
        %v3224 = vlaneseq
        %v3225 = vshrl.u32 %v3224, 7
        %v3226 = vsub.s32 %v3223, %v3225
        %v3227 = vrot.slane %v3186, %v3226
        %v3228 = vcombine.high %v3227, %v3227
        %v3230 = vunpack.c.l.s4 1966171168
        %v3231 = vunpack.c.0.s8 %v3230
        %v3232 = vlaneseq
        %v3233 = vshrl.u32 %v3232, 7
        %v3234 = vsub.s32 %v3231, %v3233
        %v3235 = vrot.slane %v3227, %v3234
        %v3237 = vunpack.c.l.s4 1966171168
        %v3238 = vunpack.c.0.s8 %v3237
        %v3239 = vlaneseq
        %v3240 = vshrl.u32 %v3239, 7
        %v3241 = vsub.s32 %v3238, %v3240
        %v3242 = vrot.slane %v3228, %v3241
        %v3243 = vcombine.high %v3235, %v3235
        %v3244 = vcombine.high %v3242, %v3242
        %3249 = vmatprep.subr.bf16.mxu0 0
        %3250 = vmatpush1.bf16.msra.mxu0 %v3187
        %3251 = vmatprep.subr.bf16.mxu0 0
        %3252 = vmatpush1.bf16.msra.mxu0 %v3188
        %3253 = vmatprep.subr.bf16.mxu0 0
        %3254 = vmatpush1.bf16.msra.mxu0 %v3189
        %3255 = vmatprep.subr.bf16.mxu0 0
        %3256 = vmatpush1.bf16.msra.mxu0 %v3190
        %3257 = vmatprep.subr.bf16.mxu0 0
        %3258 = vmatpush1.bf16.msra.mxu0 %v3191
        %3259 = vmatprep.subr.bf16.mxu0 0
        %3260 = vmatpush1.bf16.msra.mxu0 %v3192
        %3261 = vmatprep.subr.bf16.mxu0 0
        %3262 = vmatpush1.bf16.msra.mxu0 %v3193
        %3263 = vmatprep.subr.bf16.mxu0 0
        %3264 = vmatpush1.bf16.msra.mxu0 %v3194
        %3265 = vmatprep.subr.bf16.mxu0 0
        %3266 = vmatpush1.bf16.msra.mxu0 %v3195
        %3267 = vmatprep.subr.bf16.mxu0 0
        %3268 = vmatpush1.bf16.msra.mxu0 %v3196
        %3269 = vmatprep.subr.bf16.mxu0 0
        %3270 = vmatpush1.bf16.msra.mxu0 %v3197
        %3271 = vmatprep.subr.bf16.mxu0 0
        %3272 = vmatpush1.bf16.msra.mxu0 %v3198
        %3273 = vmatprep.subr.bf16.mxu0 0
        %3274 = vmatpush1.bf16.msra.mxu0 %v3199
        %3275 = vmatprep.subr.bf16.mxu0 0
        %3276 = vmatpush1.bf16.msra.mxu0 %v3200
        %3277 = vmatprep.subr.bf16.mxu0 0
        %3278 = vmatpush1.bf16.msra.mxu0 %v3201
        %3279 = vmatprep.subr.bf16.mxu0 0
        %3280 = vmatpush1.bf16.msra.mxu0 %v3202
        %3281 = vmatprep.mubr.bf16.mxu0 %v3242
        %3282 = vmatmul.mubr.bf16.gmra.mrb[0].mxu0 %v3235
        %v3283 = vpop.f32.mrb[0].mxu0
        %v3284 = vadd.f32 %v3219, %v3283
        %v3285 = vpop.f32.mrb[0].mxu0
        %v3286 = vpop.f32.mrb[0].mxu0
        %v3287 = vpop.f32.mrb[0].mxu0
        %3288 = vdwg.mxu0
        %3289 = vmatprep.subr.bf16.mxu0 0
        %3290 = vmatpush1.bf16.msra.mxu0 %v3203
        %3291 = vmatprep.subr.bf16.mxu0 0
        %3292 = vmatpush1.bf16.msra.mxu0 %v3204
        %3293 = vmatprep.subr.bf16.mxu0 0
        %3294 = vmatpush1.bf16.msra.mxu0 %v3205
        %3295 = vmatprep.subr.bf16.mxu0 0
        %3296 = vmatpush1.bf16.msra.mxu0 %v3206
        %3297 = vmatprep.subr.bf16.mxu0 0
        %3298 = vmatpush1.bf16.msra.mxu0 %v3207
        %3299 = vmatprep.subr.bf16.mxu0 0
        %3300 = vmatpush1.bf16.msra.mxu0 %v3208
        %3301 = vmatprep.subr.bf16.mxu0 0
        %3302 = vmatpush1.bf16.msra.mxu0 %v3209
        %3303 = vmatprep.subr.bf16.mxu0 0
        %3304 = vmatpush1.bf16.msra.mxu0 %v3210
        %3305 = vmatprep.subr.bf16.mxu0 0
        %3306 = vmatpush1.bf16.msra.mxu0 %v3211
        %3307 = vmatprep.subr.bf16.mxu0 0
        %3308 = vmatpush1.bf16.msra.mxu0 %v3212
        %3309 = vmatprep.subr.bf16.mxu0 0
        %3310 = vmatpush1.bf16.msra.mxu0 %v3213
        %3311 = vmatprep.subr.bf16.mxu0 0
        %3312 = vmatpush1.bf16.msra.mxu0 %v3214
        %3313 = vmatprep.subr.bf16.mxu0 0
        %3314 = vmatpush1.bf16.msra.mxu0 %v3215
        %3315 = vmatprep.subr.bf16.mxu0 0
        %3316 = vmatpush1.bf16.msra.mxu0 %v3216
        %3317 = vmatprep.subr.bf16.mxu0 0
        %3318 = vmatpush1.bf16.msra.mxu0 %v3217
        %3319 = vmatprep.subr.bf16.mxu0 0
        %3320 = vmatpush1.bf16.msra.mxu0 %v3218
        %3321 = vmatprep.mubr.bf16.mxu0 %v3244
        %3322 = vmatmul.mubr.bf16.gmra.mrb[0].mxu0 %v3243
        %v3323 = vpop.f32.mrb[0].mxu0
        %v3324 = vadd.f32 %v3284, %v3323
        %v3325 = vpop.f32.mrb[0].mxu0
        %v3326 = vpop.f32.mrb[0].mxu0
        %v3327 = vpop.f32.mrb[0].mxu0
        %3328 = vdwg.mxu0
        %vm3329 = vcmask 1024
        %3330 = vst.msk [vmem:[%s520] sm:$0x3] %vm3329, %v3324
      $region88: #{pointnet_forward.1} parent=79 // pred_fallthru
        _
      %p3331 = scmp.lt.s32.totalorder %s30, 1
      %s3332 = scalar_select %p3331, %s30, 1
      %s3333 = smul.addr %s3332, 2
      %s3334 = scalar_lea.vmem %s15, %s3333
      // Predicated region
      $region89: #{pointnet_forward.1} parent=79 // pred_check
        %p3335 = pneg %p378
      $region90: #{pointnet_forward.1} parent=79 // pred_check_branch
        %3337 = sbr.rel (%p3335) target = $region92
      $region91: #{pointnet_forward.1} parent=79 // pred_region
        _
      $region92: #{pointnet_forward.1} parent=79 // pred_fallthru
        _
    $region80: #{pointnet_forward.1} parent=5 // pred_fallthru
      _
    %p3338 = scmp.le.s32.totalorder 2, %s21
    // Predicated region
    $region93: #{pointnet_forward.1} parent=5 // pred_check
      %p3339 = pneg %p3338
    $region94: #{pointnet_forward.1} parent=5 // pred_check_branch
      %3341 = sbr.rel (%p3339) target = $region96
    $region95: #{pointnet_forward.1} parent=5 // pred_region
      %s3342 = ssub.s32 %s21, 2
      // Predicated region
      $region97: #{pointnet_forward.1} parent=95 // pred_check
        %p3343 = pneg %p384
      $region98: #{pointnet_forward.1} parent=95 // pred_check_branch
        %3345 = sbr.rel (%p3343) target = $region100
      $region99: #{pointnet_forward.1} parent=95 // pred_region
        %p3346 = scmp.lt.s32.totalorder %s32, 1
        %s3347 = scalar_select %p3346, %s32, 1
        %s3348 = smul.addr %s3347, 2
        %s3349 = scalar_lea.vmem %s15, %s3348
      $region100: #{pointnet_forward.1} parent=95 // pred_fallthru
        _
    $region96: #{pointnet_forward.1} parent=5 // pred_fallthru
      _
  $region6: #{pointnet_forward.1} parent=0 // loop_footer
    %s25 = sadd.s32 1, %s21
  $region7: #{pointnet_forward.1} parent=0 // loop_footer_branch
    %20 = sbr.rel target = $region3
  $region8: #{pointnet_forward.1} parent=0 // loop_exit
    _

</llo_original>
